<compile_context>
chip_gen: v5e
topology: v5e:2x2
jax: 0.10.0
libtpu: 0.0.40
codegen_flags: <defaults>
</compile_context>

<pallas_src>
import functools

import jax
import jax.numpy as jnp
from jax import lax
from jax.experimental import pallas as pl
from jax.experimental.pallas import tpu as pltpu

LANE = 128


def _round_up(x, m):
    return (x + m - 1) // m * m


# ----------------------------- Pallas kernel -----------------------------

def _bottleneck_kernel(x_ref, w1_ref, w2_ref, w3_ref,
                       s1_ref, b1_ref, s2_ref, b2_ref, s3_ref, b3_ref,
                       o_ref, ypad_ref):
    """Fused Bottleneck (stride=1, downsample=None) for one NHWC image.

    x_ref   : (1, H, W, Cp)    bf16  channel-padded input (also the residual)
    w1_ref  : (Cp, Pp)         bf16  1x1 conv1
    w2_ref  : (9, Pp, Pp)      bf16  3x3 conv2, tap t = dy*3+dx -> (Pin, Pout)
    w3_ref  : (Pp, Cp)         bf16  1x1 conv3
    s*/b*   : (1, Pp|Cp)       f32   folded BatchNorm scale / bias
    o_ref   : (1, H, W, Cp)    f32
    ypad_ref: (H+2, W+2, Pp)   bf16  VMEM scratch: conv1 output with zero halo
    """
    H, W = x_ref.shape[1], x_ref.shape[2]
    Cp = x_ref.shape[3]
    Pp = w1_ref.shape[1]

    x2d = x_ref[0].reshape(H * W, Cp)                      # bf16 (H*W, Cp)

    # ---- conv1 (1x1) + bn1 + relu, stored into the zero-padded scratch ----
    y = jnp.dot(x2d, w1_ref[...], preferred_element_type=jnp.float32)
    y = jnp.maximum(y * s1_ref[...] + b1_ref[...], 0.0)
    ypad_ref[...] = jnp.zeros_like(ypad_ref)               # keep halo = 0
    ypad_ref[1:H + 1, 1:W + 1, :] = y.astype(ypad_ref.dtype).reshape(H, W, Pp)

    # ---- conv2 (3x3, pad=1) as 9 shifted-window matmuls, f32 accumulation ----
    acc = jnp.zeros((H * W, Pp), jnp.float32)
    for t in range(9):
        dy, dx = t // 3, t % 3
        win = ypad_ref[dy:dy + H, dx:dx + W, :].reshape(H * W, Pp)
        acc = acc + jnp.dot(win, w2_ref[t], preferred_element_type=jnp.float32)
    z = jnp.maximum(acc * s2_ref[...] + b2_ref[...], 0.0).astype(jnp.bfloat16)

    # ---- conv3 (1x1) + bn3 + residual add + relu ----
    acc3 = jnp.dot(z, w3_ref[...], preferred_element_type=jnp.float32)
    out = jnp.maximum(acc3 * s3_ref[...] + b3_ref[...] + x2d.astype(jnp.float32), 0.0)
    o_ref[0] = out.reshape(H, W, Cp).astype(o_ref.dtype)


# ------------------------------- wrapper -------------------------------

def fold_bn(gamma, beta, mean, var, eps=1e-5):
    scale = gamma / jnp.sqrt(var + eps)
    bias = beta - mean * scale
    return scale, bias


def _pad_to(a, shape):
    pads = [(0, t - s) for s, t in zip(a.shape, shape)]
    return jnp.pad(a, pads)


@functools.partial(jax.jit, static_argnames=("stride",))
def bottleneck_forward(x_nchw, params, stride=1):
    assert stride == 1, "stride != 1 needs a downsample branch (not implemented)"

    x = jnp.transpose(x_nchw, (0, 2, 3, 1))                # NCHW -> NHWC
    N, H, W, Cin = x.shape
    P = params["w1"].shape[1]
    Cout = params["w3"].shape[1]
    assert Cout == Cin, "residual add requires Cout == Cin when downsample is None"

    Cp = _round_up(Cin, LANE)
    Pp = _round_up(P, LANE)

    # Channel-pad to 128 lanes; bf16 matmul operands, f32 BN epilogue params.
    xb = _pad_to(x, (N, H, W, Cp)).astype(jnp.bfloat16)
    w1 = _pad_to(params["w1"], (Cp, Pp)).astype(jnp.bfloat16)
    w2 = _pad_to(params["w2"].reshape(9, P, P), (9, Pp, Pp)).astype(jnp.bfloat16)
    w3 = _pad_to(params["w3"], (Pp, Cp)).astype(jnp.bfloat16)

    s1, b1 = fold_bn(*params["bn1"])
    s2, b2 = fold_bn(*params["bn2"])
    s3, b3 = fold_bn(*params["bn3"])
    s1 = _pad_to(s1.reshape(1, P), (1, Pp)); b1 = _pad_to(b1.reshape(1, P), (1, Pp))
    s2 = _pad_to(s2.reshape(1, P), (1, Pp)); b2 = _pad_to(b2.reshape(1, P), (1, Pp))
    s3 = _pad_to(s3.reshape(1, Cout), (1, Cp)); b3 = _pad_to(b3.reshape(1, Cout), (1, Cp))

    img_spec = pl.BlockSpec((1, H, W, Cp), lambda n: (n, 0, 0, 0))

    def resident(shape):
        return pl.BlockSpec(shape, lambda n: (0,) * len(shape))

    out = pl.pallas_call(
        _bottleneck_kernel,
        out_shape=jax.ShapeDtypeStruct((N, H, W, Cp), jnp.float32),
        grid=(N,),
        in_specs=[img_spec,
                  resident((Cp, Pp)), resident((9, Pp, Pp)), resident((Pp, Cp)),
                  resident((1, Pp)), resident((1, Pp)),
                  resident((1, Pp)), resident((1, Pp)),
                  resident((1, Cp)), resident((1, Cp))],
        out_specs=img_spec,
        scratch_shapes=[pltpu.VMEM((H + 2, W + 2, Pp), jnp.bfloat16)],
        compiler_params=pltpu.CompilerParams(
            dimension_semantics=("parallel",)),
    )(xb, w1, w2, w3, s1, b1, s2, b2, s3, b3)

    out = out[:, :, :, :Cout]
    return jnp.transpose(out, (0, 3, 1, 2))                # back to NCHW


# --------------------------- pure-JAX reference ---------------------------

def bottleneck_reference(x_nchw, params, stride=1):
    """Pure-JAX reference mirroring the kernel's bf16-operand / f32-accum recipe."""
    x = jnp.transpose(x_nchw, (0, 2, 3, 1))
    s1, b1 = fold_bn(*params["bn1"])
    s2, b2 = fold_bn(*params["bn2"])
    s3, b3 = fold_bn(*params["bn3"])

    xb = x.astype(jnp.bfloat16)
    y = jnp.einsum("nhwc,cd->nhwd", xb, params["w1"].astype(jnp.bfloat16),
                   preferred_element_type=jnp.float32)
    y = jnp.maximum(y * s1 + b1, 0.0).astype(jnp.bfloat16)

    z = lax.conv_general_dilated(
        y, params["w2"].astype(jnp.bfloat16),
        window_strides=(stride, stride), padding=((1, 1), (1, 1)),
        dimension_numbers=("NHWC", "HWIO", "NHWC"),
        preferred_element_type=jnp.float32)
    z = jnp.maximum(z * s2 + b2, 0.0).astype(jnp.bfloat16)

    o = jnp.einsum("nhwc,cd->nhwd", z, params["w3"].astype(jnp.bfloat16),
                   preferred_element_type=jnp.float32)
    o = jnp.maximum(o * s3 + b3 + xb.astype(jnp.float32), 0.0)
    return jnp.transpose(o, (0, 3, 1, 2))


# ----------------------------------- main -----------------------------------

def make_params(key, inplanes, planes):
    ks = jax.random.split(key, 8)
    expansion = 4
    cout = planes * expansion

    def bn(k, c):
        kg, kb, km, kv = jax.random.split(k, 4)
        gamma = 1.0 + 0.1 * jax.random.normal(kg, (c,), jnp.float32)
        beta = 0.1 * jax.random.normal(kb, (c,), jnp.float32)
        mean = 0.1 * jax.random.normal(km, (c,), jnp.float32)
        var = jax.random.uniform(kv, (c,), jnp.float32, 0.5, 1.5)
        return (gamma, beta, mean, var)

    return {
        "w1": 0.2 * jax.random.normal(ks[0], (inplanes, planes), jnp.float32),
        "w2": 0.2 * jax.random.normal(ks[1], (3, 3, planes, planes), jnp.float32),
        "w3": 0.2 * jax.random.normal(ks[2], (planes, cout), jnp.float32),
        "bn1": bn(ks[3], planes),
        "bn2": bn(ks[4], planes),
        "bn3": bn(ks[5], cout),
    }


if __name__ == "__main__":
    key = jax.random.PRNGKey(0)
    kx, kp = jax.random.split(key)

    planes = 4
    inplanes = planes * 4   # 16, so the residual add needs no downsample
    N, H, W = 2, 16, 16

    x = jax.random.normal(kx, (N, inplanes, H, W), jnp.float32)   # PyTorch NCHW input
    params = make_params(kp, inplanes, planes)

    out = jax.block_until_ready(bottleneck_forward(x, params, stride=1))
    ref = jax.block_until_ready(bottleneck_reference(x, params, stride=1))

    assert out.shape == (N, inplanes, H, W), out.shape
    max_err = float(jnp.max(jnp.abs(out - ref)))
    assert jnp.allclose(out, ref, atol=1e-2, rtol=1e-2), max_err
    print("KERNEL_OK")
</pallas_src>

<mosaic_0001>
module attributes {stable_mosaic.version = 11 : i64} {
  func.func @_bottleneck_kernel(%arg0: i32, %arg1: memref<1x16x16x128xbf16, #tpu.memory_space<vmem>>, %arg2: memref<128x128xbf16, #tpu.memory_space<vmem>>, %arg3: memref<9x128x128xbf16, #tpu.memory_space<vmem>>, %arg4: memref<128x128xbf16, #tpu.memory_space<vmem>>, %arg5: memref<1x128xf32, #tpu.memory_space<vmem>>, %arg6: memref<1x128xf32, #tpu.memory_space<vmem>>, %arg7: memref<1x128xf32, #tpu.memory_space<vmem>>, %arg8: memref<1x128xf32, #tpu.memory_space<vmem>>, %arg9: memref<1x128xf32, #tpu.memory_space<vmem>>, %arg10: memref<1x128xf32, #tpu.memory_space<vmem>>, %arg11: memref<1x16x16x128xf32, #tpu.memory_space<vmem>>, %arg12: memref<18x18x128xbf16, #tpu.memory_space<vmem>>) attributes {dimension_semantics = [#tpu.dimension_semantics<parallel>], iteration_bounds = array<i64: 2>, scalar_prefetch = 0 : i64, scratch_operands = 1 : i64, tpu.core_type = #tpu.core_type<tc>, window_params = [{transform_indices = @transform_0, window_bounds = array<i64: 1, 16, 16, 128>}, {pipeline_mode = #tpu.pipeline_mode<synchronous>, transform_indices = @transform_1, window_bounds = array<i64: 128, 128>}, {pipeline_mode = #tpu.pipeline_mode<synchronous>, transform_indices = @transform_2, window_bounds = array<i64: 9, 128, 128>}, {pipeline_mode = #tpu.pipeline_mode<synchronous>, transform_indices = @transform_3, window_bounds = array<i64: 128, 128>}, {pipeline_mode = #tpu.pipeline_mode<synchronous>, transform_indices = @transform_4, window_bounds = array<i64: 1, 128>}, {pipeline_mode = #tpu.pipeline_mode<synchronous>, transform_indices = @transform_5, window_bounds = array<i64: 1, 128>}, {pipeline_mode = #tpu.pipeline_mode<synchronous>, transform_indices = @transform_6, window_bounds = array<i64: 1, 128>}, {pipeline_mode = #tpu.pipeline_mode<synchronous>, transform_indices = @transform_7, window_bounds = array<i64: 1, 128>}, {pipeline_mode = #tpu.pipeline_mode<synchronous>, transform_indices = @transform_8, window_bounds = array<i64: 1, 128>}, {pipeline_mode = #tpu.pipeline_mode<synchronous>, transform_indices = @transform_9, window_bounds = array<i64: 1, 128>}, {transform_indices = @transform_10, window_bounds = array<i64: 1, 16, 16, 128>}]} {
    %c0 = arith.constant 0 : index
    %c0_0 = arith.constant 0 : index
    %c0_1 = arith.constant 0 : index
    %c0_2 = arith.constant 0 : index
    %0 = vector.load %arg1[%c0, %c0_0, %c0_1, %c0_2] : memref<1x16x16x128xbf16, #tpu.memory_space<vmem>>, vector<1x16x16x128xbf16>
    %1 = vector.shape_cast %0 : vector<1x16x16x128xbf16> to vector<16x16x128xbf16>
    %2 = vector.shape_cast %1 : vector<16x16x128xbf16> to vector<256x128xbf16>
    %c0_3 = arith.constant 0 : index
    %c0_4 = arith.constant 0 : index
    %3 = vector.load %arg2[%c0_3, %c0_4] : memref<128x128xbf16, #tpu.memory_space<vmem>>, vector<128x128xbf16>
    %cst = arith.constant dense<0.000000e+00> : vector<256x128xf32>
    %4 = tpu.matmul %2, %3, %cst {dimension_numbers = #tpu.dot_dimension_numbers<[1], [0], [0], [1], [0, 0, 1, 1], [], []>} : vector<256x128xbf16>, vector<128x128xbf16>, vector<256x128xf32> -> vector<256x128xf32>
    %c0_5 = arith.constant 0 : index
    %c0_6 = arith.constant 0 : index
    %5 = vector.load %arg5[%c0_5, %c0_6] : memref<1x128xf32, #tpu.memory_space<vmem>>, vector<1x128xf32>
    %6 = vector.broadcast %5 : vector<1x128xf32> to vector<256x128xf32>
    %7 = arith.mulf %4, %6 : vector<256x128xf32>
    %c0_7 = arith.constant 0 : index
    %c0_8 = arith.constant 0 : index
    %8 = vector.load %arg6[%c0_7, %c0_8] : memref<1x128xf32, #tpu.memory_space<vmem>>, vector<1x128xf32>
    %9 = vector.broadcast %8 : vector<1x128xf32> to vector<256x128xf32>
    %10 = arith.addf %7, %9 : vector<256x128xf32>
    %cst_9 = arith.constant 0.000000e+00 : f32
    %11 = vector.broadcast %cst_9 : f32 to vector<256x128xf32>
    %12 = arith.maximumf %10, %11 : vector<256x128xf32>
    %cst_10 = arith.constant 0.000000e+00 : bf16
    %13 = vector.broadcast %cst_10 : bf16 to vector<18x18x128xbf16>
    %c0_11 = arith.constant 0 : index
    %c0_12 = arith.constant 0 : index
    %c0_13 = arith.constant 0 : index
    %14 = vector.load %arg12[%c0_11, %c0_12, %c0_13] : memref<18x18x128xbf16, #tpu.memory_space<vmem>>, vector<18x18x128xbf16>
    tpu.vector_store %arg12[%c0_11, %c0_12, %c0_13], %13 {strides = array<i32>} : memref<18x18x128xbf16, #tpu.memory_space<vmem>>, vector<18x18x128xbf16>,
    %15 = arith.truncf %12 : vector<256x128xf32> to vector<256x128xbf16>
    %16 = vector.shape_cast %15 : vector<256x128xbf16> to vector<16x16x128xbf16>
    %c1 = arith.constant 1 : index
    %c1_14 = arith.constant 1 : index
    %c0_15 = arith.constant 0 : index
    %17 = vector.load %arg12[%c1, %c1_14, %c0_15] : memref<18x18x128xbf16, #tpu.memory_space<vmem>>, vector<16x16x128xbf16>
    tpu.vector_store %arg12[%c1, %c1_14, %c0_15], %16 {strides = array<i32>} : memref<18x18x128xbf16, #tpu.memory_space<vmem>>, vector<16x16x128xbf16>,
    %cst_16 = arith.constant 0.000000e+00 : f32
    %18 = vector.broadcast %cst_16 : f32 to vector<256x128xf32>
    %c0_17 = arith.constant 0 : index
    %c0_18 = arith.constant 0 : index
    %c0_19 = arith.constant 0 : index
    %19 = vector.load %arg12[%c0_17, %c0_18, %c0_19] : memref<18x18x128xbf16, #tpu.memory_space<vmem>>, vector<16x16x128xbf16>
    %20 = vector.shape_cast %19 : vector<16x16x128xbf16> to vector<256x128xbf16>
    %c0_20 = arith.constant 0 : index
    %c0_21 = arith.constant 0 : index
    %c0_22 = arith.constant 0 : index
    %21 = vector.load %arg3[%c0_20, %c0_21, %c0_22] : memref<9x128x128xbf16, #tpu.memory_space<vmem>>, vector<1x128x128xbf16>
    %22 = vector.shape_cast %21 : vector<1x128x128xbf16> to vector<128x128xbf16>
    %cst_23 = arith.constant dense<0.000000e+00> : vector<256x128xf32>
    %23 = tpu.matmul %20, %22, %cst_23 {dimension_numbers = #tpu.dot_dimension_numbers<[1], [0], [0], [1], [0, 0, 1, 1], [], []>} : vector<256x128xbf16>, vector<128x128xbf16>, vector<256x128xf32> -> vector<256x128xf32>
    %24 = arith.addf %18, %23 : vector<256x128xf32>
    %c0_24 = arith.constant 0 : index
    %c1_25 = arith.constant 1 : index
    %c0_26 = arith.constant 0 : index
    %25 = vector.load %arg12[%c0_24, %c1_25, %c0_26] : memref<18x18x128xbf16, #tpu.memory_space<vmem>>, vector<16x16x128xbf16>
    %26 = vector.shape_cast %25 : vector<16x16x128xbf16> to vector<256x128xbf16>
    %c1_27 = arith.constant 1 : index
    %c0_28 = arith.constant 0 : index
    %c0_29 = arith.constant 0 : index
    %27 = vector.load %arg3[%c1_27, %c0_28, %c0_29] : memref<9x128x128xbf16, #tpu.memory_space<vmem>>, vector<1x128x128xbf16>
    %28 = vector.shape_cast %27 : vector<1x128x128xbf16> to vector<128x128xbf16>
    %cst_30 = arith.constant dense<0.000000e+00> : vector<256x128xf32>
    %29 = tpu.matmul %26, %28, %cst_30 {dimension_numbers = #tpu.dot_dimension_numbers<[1], [0], [0], [1], [0, 0, 1, 1], [], []>} : vector<256x128xbf16>, vector<128x128xbf16>, vector<256x128xf32> -> vector<256x128xf32>
    %30 = arith.addf %24, %29 : vector<256x128xf32>
    %c0_31 = arith.constant 0 : index
    %c2 = arith.constant 2 : index
    %c0_32 = arith.constant 0 : index
    %31 = vector.load %arg12[%c0_31, %c2, %c0_32] : memref<18x18x128xbf16, #tpu.memory_space<vmem>>, vector<16x16x128xbf16>
    %32 = vector.shape_cast %31 : vector<16x16x128xbf16> to vector<256x128xbf16>
    %c2_33 = arith.constant 2 : index
    %c0_34 = arith.constant 0 : index
    %c0_35 = arith.constant 0 : index
    %33 = vector.load %arg3[%c2_33, %c0_34, %c0_35] : memref<9x128x128xbf16, #tpu.memory_space<vmem>>, vector<1x128x128xbf16>
    %34 = vector.shape_cast %33 : vector<1x128x128xbf16> to vector<128x128xbf16>
    %cst_36 = arith.constant dense<0.000000e+00> : vector<256x128xf32>
    %35 = tpu.matmul %32, %34, %cst_36 {dimension_numbers = #tpu.dot_dimension_numbers<[1], [0], [0], [1], [0, 0, 1, 1], [], []>} : vector<256x128xbf16>, vector<128x128xbf16>, vector<256x128xf32> -> vector<256x128xf32>
    %36 = arith.addf %30, %35 : vector<256x128xf32>
    %c1_37 = arith.constant 1 : index
    %c0_38 = arith.constant 0 : index
    %c0_39 = arith.constant 0 : index
    %37 = vector.load %arg12[%c1_37, %c0_38, %c0_39] : memref<18x18x128xbf16, #tpu.memory_space<vmem>>, vector<16x16x128xbf16>
    %38 = vector.shape_cast %37 : vector<16x16x128xbf16> to vector<256x128xbf16>
    %c3 = arith.constant 3 : index
    %c0_40 = arith.constant 0 : index
    %c0_41 = arith.constant 0 : index
    %39 = vector.load %arg3[%c3, %c0_40, %c0_41] : memref<9x128x128xbf16, #tpu.memory_space<vmem>>, vector<1x128x128xbf16>
    %40 = vector.shape_cast %39 : vector<1x128x128xbf16> to vector<128x128xbf16>
    %cst_42 = arith.constant dense<0.000000e+00> : vector<256x128xf32>
    %41 = tpu.matmul %38, %40, %cst_42 {dimension_numbers = #tpu.dot_dimension_numbers<[1], [0], [0], [1], [0, 0, 1, 1], [], []>} : vector<256x128xbf16>, vector<128x128xbf16>, vector<256x128xf32> -> vector<256x128xf32>
    %42 = arith.addf %36, %41 : vector<256x128xf32>
    %c1_43 = arith.constant 1 : index
    %c1_44 = arith.constant 1 : index
    %c0_45 = arith.constant 0 : index
    %43 = vector.load %arg12[%c1_43, %c1_44, %c0_45] : memref<18x18x128xbf16, #tpu.memory_space<vmem>>, vector<16x16x128xbf16>
    %44 = vector.shape_cast %43 : vector<16x16x128xbf16> to vector<256x128xbf16>
    %c4 = arith.constant 4 : index
    %c0_46 = arith.constant 0 : index
    %c0_47 = arith.constant 0 : index
    %45 = vector.load %arg3[%c4, %c0_46, %c0_47] : memref<9x128x128xbf16, #tpu.memory_space<vmem>>, vector<1x128x128xbf16>
    %46 = vector.shape_cast %45 : vector<1x128x128xbf16> to vector<128x128xbf16>
    %cst_48 = arith.constant dense<0.000000e+00> : vector<256x128xf32>
    %47 = tpu.matmul %44, %46, %cst_48 {dimension_numbers = #tpu.dot_dimension_numbers<[1], [0], [0], [1], [0, 0, 1, 1], [], []>} : vector<256x128xbf16>, vector<128x128xbf16>, vector<256x128xf32> -> vector<256x128xf32>
    %48 = arith.addf %42, %47 : vector<256x128xf32>
    %c1_49 = arith.constant 1 : index
    %c2_50 = arith.constant 2 : index
    %c0_51 = arith.constant 0 : index
    %49 = vector.load %arg12[%c1_49, %c2_50, %c0_51] : memref<18x18x128xbf16, #tpu.memory_space<vmem>>, vector<16x16x128xbf16>
    %50 = vector.shape_cast %49 : vector<16x16x128xbf16> to vector<256x128xbf16>
    %c5 = arith.constant 5 : index
    %c0_52 = arith.constant 0 : index
    %c0_53 = arith.constant 0 : index
    %51 = vector.load %arg3[%c5, %c0_52, %c0_53] : memref<9x128x128xbf16, #tpu.memory_space<vmem>>, vector<1x128x128xbf16>
    %52 = vector.shape_cast %51 : vector<1x128x128xbf16> to vector<128x128xbf16>
    %cst_54 = arith.constant dense<0.000000e+00> : vector<256x128xf32>
    %53 = tpu.matmul %50, %52, %cst_54 {dimension_numbers = #tpu.dot_dimension_numbers<[1], [0], [0], [1], [0, 0, 1, 1], [], []>} : vector<256x128xbf16>, vector<128x128xbf16>, vector<256x128xf32> -> vector<256x128xf32>
    %54 = arith.addf %48, %53 : vector<256x128xf32>
    %c2_55 = arith.constant 2 : index
    %c0_56 = arith.constant 0 : index
    %c0_57 = arith.constant 0 : index
    %55 = vector.load %arg12[%c2_55, %c0_56, %c0_57] : memref<18x18x128xbf16, #tpu.memory_space<vmem>>, vector<16x16x128xbf16>
    %56 = vector.shape_cast %55 : vector<16x16x128xbf16> to vector<256x128xbf16>
    %c6 = arith.constant 6 : index
    %c0_58 = arith.constant 0 : index
    %c0_59 = arith.constant 0 : index
    %57 = vector.load %arg3[%c6, %c0_58, %c0_59] : memref<9x128x128xbf16, #tpu.memory_space<vmem>>, vector<1x128x128xbf16>
    %58 = vector.shape_cast %57 : vector<1x128x128xbf16> to vector<128x128xbf16>
    %cst_60 = arith.constant dense<0.000000e+00> : vector<256x128xf32>
    %59 = tpu.matmul %56, %58, %cst_60 {dimension_numbers = #tpu.dot_dimension_numbers<[1], [0], [0], [1], [0, 0, 1, 1], [], []>} : vector<256x128xbf16>, vector<128x128xbf16>, vector<256x128xf32> -> vector<256x128xf32>
    %60 = arith.addf %54, %59 : vector<256x128xf32>
    %c2_61 = arith.constant 2 : index
    %c1_62 = arith.constant 1 : index
    %c0_63 = arith.constant 0 : index
    %61 = vector.load %arg12[%c2_61, %c1_62, %c0_63] : memref<18x18x128xbf16, #tpu.memory_space<vmem>>, vector<16x16x128xbf16>
    %62 = vector.shape_cast %61 : vector<16x16x128xbf16> to vector<256x128xbf16>
    %c7 = arith.constant 7 : index
    %c0_64 = arith.constant 0 : index
    %c0_65 = arith.constant 0 : index
    %63 = vector.load %arg3[%c7, %c0_64, %c0_65] : memref<9x128x128xbf16, #tpu.memory_space<vmem>>, vector<1x128x128xbf16>
    %64 = vector.shape_cast %63 : vector<1x128x128xbf16> to vector<128x128xbf16>
    %cst_66 = arith.constant dense<0.000000e+00> : vector<256x128xf32>
    %65 = tpu.matmul %62, %64, %cst_66 {dimension_numbers = #tpu.dot_dimension_numbers<[1], [0], [0], [1], [0, 0, 1, 1], [], []>} : vector<256x128xbf16>, vector<128x128xbf16>, vector<256x128xf32> -> vector<256x128xf32>
    %66 = arith.addf %60, %65 : vector<256x128xf32>
    %c2_67 = arith.constant 2 : index
    %c2_68 = arith.constant 2 : index
    %c0_69 = arith.constant 0 : index
    %67 = vector.load %arg12[%c2_67, %c2_68, %c0_69] : memref<18x18x128xbf16, #tpu.memory_space<vmem>>, vector<16x16x128xbf16>
    %68 = vector.shape_cast %67 : vector<16x16x128xbf16> to vector<256x128xbf16>
    %c8 = arith.constant 8 : index
    %c0_70 = arith.constant 0 : index
    %c0_71 = arith.constant 0 : index
    %69 = vector.load %arg3[%c8, %c0_70, %c0_71] : memref<9x128x128xbf16, #tpu.memory_space<vmem>>, vector<1x128x128xbf16>
    %70 = vector.shape_cast %69 : vector<1x128x128xbf16> to vector<128x128xbf16>
    %cst_72 = arith.constant dense<0.000000e+00> : vector<256x128xf32>
    %71 = tpu.matmul %68, %70, %cst_72 {dimension_numbers = #tpu.dot_dimension_numbers<[1], [0], [0], [1], [0, 0, 1, 1], [], []>} : vector<256x128xbf16>, vector<128x128xbf16>, vector<256x128xf32> -> vector<256x128xf32>
    %72 = arith.addf %66, %71 : vector<256x128xf32>
    %c0_73 = arith.constant 0 : index
    %c0_74 = arith.constant 0 : index
    %73 = vector.load %arg7[%c0_73, %c0_74] : memref<1x128xf32, #tpu.memory_space<vmem>>, vector<1x128xf32>
    %74 = vector.broadcast %73 : vector<1x128xf32> to vector<256x128xf32>
    %75 = arith.mulf %72, %74 : vector<256x128xf32>
    %c0_75 = arith.constant 0 : index
    %c0_76 = arith.constant 0 : index
    %76 = vector.load %arg8[%c0_75, %c0_76] : memref<1x128xf32, #tpu.memory_space<vmem>>, vector<1x128xf32>
    %77 = vector.broadcast %76 : vector<1x128xf32> to vector<256x128xf32>
    %78 = arith.addf %75, %77 : vector<256x128xf32>
    %cst_77 = arith.constant 0.000000e+00 : f32
    %79 = vector.broadcast %cst_77 : f32 to vector<256x128xf32>
    %80 = arith.maximumf %78, %79 : vector<256x128xf32>
    %81 = arith.truncf %80 : vector<256x128xf32> to vector<256x128xbf16>
    %c0_78 = arith.constant 0 : index
    %c0_79 = arith.constant 0 : index
    %82 = vector.load %arg4[%c0_78, %c0_79] : memref<128x128xbf16, #tpu.memory_space<vmem>>, vector<128x128xbf16>
    %cst_80 = arith.constant dense<0.000000e+00> : vector<256x128xf32>
    %83 = tpu.matmul %81, %82, %cst_80 {dimension_numbers = #tpu.dot_dimension_numbers<[1], [0], [0], [1], [0, 0, 1, 1], [], []>} : vector<256x128xbf16>, vector<128x128xbf16>, vector<256x128xf32> -> vector<256x128xf32>
    %c0_81 = arith.constant 0 : index
    %c0_82 = arith.constant 0 : index
    %84 = vector.load %arg9[%c0_81, %c0_82] : memref<1x128xf32, #tpu.memory_space<vmem>>, vector<1x128xf32>
    %85 = vector.broadcast %84 : vector<1x128xf32> to vector<256x128xf32>
    %86 = arith.mulf %83, %85 : vector<256x128xf32>
    %c0_83 = arith.constant 0 : index
    %c0_84 = arith.constant 0 : index
    %87 = vector.load %arg10[%c0_83, %c0_84] : memref<1x128xf32, #tpu.memory_space<vmem>>, vector<1x128xf32>
    %88 = vector.broadcast %87 : vector<1x128xf32> to vector<256x128xf32>
    %89 = arith.addf %86, %88 : vector<256x128xf32>
    %90 = arith.extf %2 : vector<256x128xbf16> to vector<256x128xf32>
    %91 = arith.addf %89, %90 : vector<256x128xf32>
    %cst_85 = arith.constant 0.000000e+00 : f32
    %92 = vector.broadcast %cst_85 : f32 to vector<256x128xf32>
    %93 = arith.maximumf %91, %92 : vector<256x128xf32>
    %94 = vector.shape_cast %93 : vector<256x128xf32> to vector<16x16x128xf32>
    %c0_86 = arith.constant 0 : index
    %c0_87 = arith.constant 0 : index
    %c0_88 = arith.constant 0 : index
    %c0_89 = arith.constant 0 : index
    %95 = vector.load %arg11[%c0_86, %c0_87, %c0_88, %c0_89] : memref<1x16x16x128xf32, #tpu.memory_space<vmem>>, vector<1x16x16x128xf32>
    %96 = vector.shape_cast %95 : vector<1x16x16x128xf32> to vector<16x16x128xf32>
    %97 = vector.shape_cast %94 : vector<16x16x128xf32> to vector<1x16x16x128xf32>
    tpu.vector_store %arg11[%c0_86, %c0_87, %c0_88, %c0_89], %97 {strides = array<i32>} : memref<1x16x16x128xf32, #tpu.memory_space<vmem>>, vector<1x16x16x128xf32>,
    return
  }
  func.func @transform_0(%arg0: i32) -> (i32, i32, i32, i32) {
    %c0_i32 = arith.constant 0 : i32
    %c0_i32_0 = arith.constant 0 : i32
    %c0_i32_1 = arith.constant 0 : i32
    %c0_i32_2 = arith.constant 0 : i32
    return %arg0, %c0_i32, %c0_i32_0, %c0_i32_1 : i32, i32, i32, i32
  }
  func.func @transform_1(%arg0: i32) -> (i32, i32) {
    %c0_i32 = arith.constant 0 : i32
    %c0_i32_0 = arith.constant 0 : i32
    %c0_i32_1 = arith.constant 0 : i32
    return %c0_i32, %c0_i32_0 : i32, i32
  }
  func.func @transform_2(%arg0: i32) -> (i32, i32, i32) {
    %c0_i32 = arith.constant 0 : i32
    %c0_i32_0 = arith.constant 0 : i32
    %c0_i32_1 = arith.constant 0 : i32
    %c0_i32_2 = arith.constant 0 : i32
    return %c0_i32, %c0_i32_0, %c0_i32_1 : i32, i32, i32
  }
  func.func @transform_3(%arg0: i32) -> (i32, i32) {
    %c0_i32 = arith.constant 0 : i32
    %c0_i32_0 = arith.constant 0 : i32
    %c0_i32_1 = arith.constant 0 : i32
    return %c0_i32, %c0_i32_0 : i32, i32
  }
  func.func @transform_4(%arg0: i32) -> (i32, i32) {
    %c0_i32 = arith.constant 0 : i32
    %c0_i32_0 = arith.constant 0 : i32
    %c0_i32_1 = arith.constant 0 : i32
    return %c0_i32, %c0_i32_0 : i32, i32
  }
  func.func @transform_5(%arg0: i32) -> (i32, i32) {
    %c0_i32 = arith.constant 0 : i32
    %c0_i32_0 = arith.constant 0 : i32
    %c0_i32_1 = arith.constant 0 : i32
    return %c0_i32, %c0_i32_0 : i32, i32
  }
  func.func @transform_6(%arg0: i32) -> (i32, i32) {
    %c0_i32 = arith.constant 0 : i32
    %c0_i32_0 = arith.constant 0 : i32
    %c0_i32_1 = arith.constant 0 : i32
    return %c0_i32, %c0_i32_0 : i32, i32
  }
  func.func @transform_7(%arg0: i32) -> (i32, i32) {
    %c0_i32 = arith.constant 0 : i32
    %c0_i32_0 = arith.constant 0 : i32
    %c0_i32_1 = arith.constant 0 : i32
    return %c0_i32, %c0_i32_0 : i32, i32
  }
  func.func @transform_8(%arg0: i32) -> (i32, i32) {
    %c0_i32 = arith.constant 0 : i32
    %c0_i32_0 = arith.constant 0 : i32
    %c0_i32_1 = arith.constant 0 : i32
    return %c0_i32, %c0_i32_0 : i32, i32
  }
  func.func @transform_9(%arg0: i32) -> (i32, i32) {
    %c0_i32 = arith.constant 0 : i32
    %c0_i32_0 = arith.constant 0 : i32
    %c0_i32_1 = arith.constant 0 : i32
    return %c0_i32, %c0_i32_0 : i32, i32
  }
  func.func @transform_10(%arg0: i32) -> (i32, i32, i32, i32) {
    %c0_i32 = arith.constant 0 : i32
    %c0_i32_0 = arith.constant 0 : i32
    %c0_i32_1 = arith.constant 0 : i32
    %c0_i32_2 = arith.constant 0 : i32
    return %arg0, %c0_i32, %c0_i32_0, %c0_i32_1 : i32, i32, i32, i32
  }
}

</mosaic_0001>

<llo_original>
// kernel: bottleneck_forward.1
$region0: #{bottleneck_forward.1}
  #allocation0 [shape = 'u32[]', space=smem, size = 0x4, offset = 0x4, fixed_abs, tag = 'smem constant byte address 0x4 - core index']
  #allocation1 [shape = 'u32[72,128]{1,0:T(1,128)}', space=vmem, size = 0x9000, scoped, tag = 'internal scratch']
  #allocation2 [shape = 'bf16[18,18,128]{2,1,0:T(8,128)(2,1)}', space=vmem, size = 0x1b000, scoped, tag = 'scratch operand']
  %s0 = inlined_call_operand.vmem [shape: bf16[2,16,16,128], index: 0, kind: input, shape index: {}]
  %s1 = inlined_call_operand.vmem [shape: bf16[128,128], index: 1, kind: input, shape index: {}]
  %s2 = inlined_call_operand.vmem [shape: bf16[9,128,128], index: 2, kind: input, shape index: {}]
  %s3 = inlined_call_operand.vmem [shape: bf16[128,128], index: 3, kind: input, shape index: {}]
  %s4 = inlined_call_operand.vmem [shape: f32[1,128], index: 4, kind: input, shape index: {}]
  %s5 = inlined_call_operand.vmem [shape: f32[1,128], index: 5, kind: input, shape index: {}]
  %s6 = inlined_call_operand.vmem [shape: f32[1,128], index: 6, kind: input, shape index: {}]
  %s7 = inlined_call_operand.vmem [shape: f32[1,128], index: 7, kind: input, shape index: {}]
  %s8 = inlined_call_operand.vmem [shape: f32[1,128], index: 8, kind: input, shape index: {}]
  %s9 = inlined_call_operand.vmem [shape: f32[1,128], index: 9, kind: input, shape index: {}]
  %s10 = inlined_call_operand.vmem [shape: f32[2,16,16,128], index: 10, kind: output, shape index: {}]
  %s11 = sld [smem:[#allocation0]]
  $region73: #{bottleneck_forward.1} parent=0
    _
  %s13 = ssub.s32 1, %s11
  %s14 = scalar_select 0, %s13, %s11
  loop: start=0, step=1, limit=4
  $region2: #{bottleneck_forward.1} parent=0 // loop_pre_header
    _
  $region3: #{bottleneck_forward.1} parent=0 // loop_header
    %s16 = sphi 0, %s20
    %p17 = scmp.ge.s32.totalorder %s16, 4
    %s26 = sphi 0, %s28
    %s29 = sphi 0, %s26
    %s30 = sphi 0, %s29
    %s46 = sphi 0, %s30
    %s50 = sphi 0, %s50
    %s52 = sphi 0, %s50
    %s53 = sphi 0, %s52
    %s67 = sphi 0, %s53
    %s71 = sphi 0, %s71
    %s73 = sphi 0, %s71
    %s74 = sphi 0, %s73
    %s88 = sphi 0, %s74
    %s92 = sphi 0, %s92
    %s94 = sphi 0, %s92
    %s95 = sphi 0, %s94
    %s109 = sphi 0, %s95
    %s113 = sphi 0, %s113
    %s115 = sphi 0, %s113
    %s116 = sphi 0, %s115
    %s130 = sphi 0, %s116
    %s134 = sphi 0, %s134
    %s136 = sphi 0, %s134
    %s137 = sphi 0, %s136
    %s151 = sphi 0, %s137
    %s155 = sphi 0, %s155
    %s157 = sphi 0, %s155
    %s158 = sphi 0, %s157
    %s172 = sphi 0, %s158
    %s176 = sphi 0, %s176
    %s178 = sphi 0, %s176
    %s179 = sphi 0, %s178
    %s193 = sphi 0, %s179
    %s197 = sphi 0, %s197
    %s199 = sphi 0, %s197
    %s200 = sphi 0, %s199
    %s214 = sphi 0, %s200
    %s218 = sphi 0, %s218
    %s220 = sphi 0, %s218
    %s221 = sphi 0, %s220
    %s235 = sphi 0, %s221
    %s241 = sphi 0, %s243
    %s244 = sphi 0, %s241
    %s245 = sphi 0, %s244
    %s261 = sphi 0, %s245
  $region4: #{bottleneck_forward.1} parent=0 // loop_header_branch
    %19 = sbr.rel (%p17) target = $region8
  $region5: #{bottleneck_forward.1} parent=0 // loop_body
    %s21 = ssub.s32 %s16, 1
    %s22 = ssub.s32 %s16, 2
    %s23 = sadd.s32 %s16, 1
    %s24 = ssub.s32 %s16, %s23
    %p25 = scmp.eq.s32.totalorder %s24, 0
    %s27 = sadd.s32 %s26, 1
    %s28 = scalar_select %p25, %s26, %s27
    %p31 = pneg %p25
    %p32 = scmp.eq.s32.totalorder %s16, 1
    %p33 = por %p31, %p32
    %p34 = scmp.ne.s32.totalorder %s26, %s29
    %p35 = scmp.eq.s32.totalorder %s16, 0
    %p36 = por %p34, %p35
    %p37 = scmp.ne.s32.totalorder %s26, %s29
    %p38 = scmp.eq.s32.totalorder %s21, 1
    %p39 = por %p37, %p38
    %p40 = scmp.ne.s32.totalorder %s29, %s30
    %p41 = scmp.eq.s32.totalorder %s21, 0
    %p42 = por %p40, %p41
    %p43 = scmp.ne.s32.totalorder %s29, %s30
    %p44 = scmp.eq.s32.totalorder %s22, 1
    %p45 = por %p43, %p44
    %p47 = scmp.ne.s32.totalorder %s30, %s46
    %p48 = scmp.eq.s32.totalorder %s22, 0
    %p49 = por %p47, %p48
    %s51 = sadd.s32 %s50, 1
    %p54 = scmp.eq.s32.totalorder %s16, 1
    %p55 = scmp.ne.s32.totalorder %s50, %s52
    %p56 = scmp.eq.s32.totalorder %s16, 0
    %p57 = por %p55, %p56
    %p58 = scmp.ne.s32.totalorder %s50, %s52
    %p59 = scmp.eq.s32.totalorder %s21, 1
    %p60 = por %p58, %p59
    %p61 = scmp.ne.s32.totalorder %s52, %s53
    %p62 = scmp.eq.s32.totalorder %s21, 0
    %p63 = por %p61, %p62
    %p64 = scmp.ne.s32.totalorder %s52, %s53
    %p65 = scmp.eq.s32.totalorder %s22, 1
    %p66 = por %p64, %p65
    %p68 = scmp.ne.s32.totalorder %s53, %s67
    %p69 = scmp.eq.s32.totalorder %s22, 0
    %p70 = por %p68, %p69
    %s72 = sadd.s32 %s71, 1
    %p75 = scmp.eq.s32.totalorder %s16, 1
    %p76 = scmp.ne.s32.totalorder %s71, %s73
    %p77 = scmp.eq.s32.totalorder %s16, 0
    %p78 = por %p76, %p77
    %p79 = scmp.ne.s32.totalorder %s71, %s73
    %p80 = scmp.eq.s32.totalorder %s21, 1
    %p81 = por %p79, %p80
    %p82 = scmp.ne.s32.totalorder %s73, %s74
    %p83 = scmp.eq.s32.totalorder %s21, 0
    %p84 = por %p82, %p83
    %p85 = scmp.ne.s32.totalorder %s73, %s74
    %p86 = scmp.eq.s32.totalorder %s22, 1
    %p87 = por %p85, %p86
    %p89 = scmp.ne.s32.totalorder %s74, %s88
    %p90 = scmp.eq.s32.totalorder %s22, 0
    %p91 = por %p89, %p90
    %s93 = sadd.s32 %s92, 1
    %p96 = scmp.eq.s32.totalorder %s16, 1
    %p97 = scmp.ne.s32.totalorder %s92, %s94
    %p98 = scmp.eq.s32.totalorder %s16, 0
    %p99 = por %p97, %p98
    %p100 = scmp.ne.s32.totalorder %s92, %s94
    %p101 = scmp.eq.s32.totalorder %s21, 1
    %p102 = por %p100, %p101
    %p103 = scmp.ne.s32.totalorder %s94, %s95
    %p104 = scmp.eq.s32.totalorder %s21, 0
    %p105 = por %p103, %p104
    %p106 = scmp.ne.s32.totalorder %s94, %s95
    %p107 = scmp.eq.s32.totalorder %s22, 1
    %p108 = por %p106, %p107
    %p110 = scmp.ne.s32.totalorder %s95, %s109
    %p111 = scmp.eq.s32.totalorder %s22, 0
    %p112 = por %p110, %p111
    %s114 = sadd.s32 %s113, 1
    %p117 = scmp.eq.s32.totalorder %s16, 1
    %p118 = scmp.ne.s32.totalorder %s113, %s115
    %p119 = scmp.eq.s32.totalorder %s16, 0
    %p120 = por %p118, %p119
    %p121 = scmp.ne.s32.totalorder %s113, %s115
    %p122 = scmp.eq.s32.totalorder %s21, 1
    %p123 = por %p121, %p122
    %p124 = scmp.ne.s32.totalorder %s115, %s116
    %p125 = scmp.eq.s32.totalorder %s21, 0
    %p126 = por %p124, %p125
    %p127 = scmp.ne.s32.totalorder %s115, %s116
    %p128 = scmp.eq.s32.totalorder %s22, 1
    %p129 = por %p127, %p128
    %p131 = scmp.ne.s32.totalorder %s116, %s130
    %p132 = scmp.eq.s32.totalorder %s22, 0
    %p133 = por %p131, %p132
    %s135 = sadd.s32 %s134, 1
    %p138 = scmp.eq.s32.totalorder %s16, 1
    %p139 = scmp.ne.s32.totalorder %s134, %s136
    %p140 = scmp.eq.s32.totalorder %s16, 0
    %p141 = por %p139, %p140
    %p142 = scmp.ne.s32.totalorder %s134, %s136
    %p143 = scmp.eq.s32.totalorder %s21, 1
    %p144 = por %p142, %p143
    %p145 = scmp.ne.s32.totalorder %s136, %s137
    %p146 = scmp.eq.s32.totalorder %s21, 0
    %p147 = por %p145, %p146
    %p148 = scmp.ne.s32.totalorder %s136, %s137
    %p149 = scmp.eq.s32.totalorder %s22, 1
    %p150 = por %p148, %p149
    %p152 = scmp.ne.s32.totalorder %s137, %s151
    %p153 = scmp.eq.s32.totalorder %s22, 0
    %p154 = por %p152, %p153
    %s156 = sadd.s32 %s155, 1
    %p159 = scmp.eq.s32.totalorder %s16, 1
    %p160 = scmp.ne.s32.totalorder %s155, %s157
    %p161 = scmp.eq.s32.totalorder %s16, 0
    %p162 = por %p160, %p161
    %p163 = scmp.ne.s32.totalorder %s155, %s157
    %p164 = scmp.eq.s32.totalorder %s21, 1
    %p165 = por %p163, %p164
    %p166 = scmp.ne.s32.totalorder %s157, %s158
    %p167 = scmp.eq.s32.totalorder %s21, 0
    %p168 = por %p166, %p167
    %p169 = scmp.ne.s32.totalorder %s157, %s158
    %p170 = scmp.eq.s32.totalorder %s22, 1
    %p171 = por %p169, %p170
    %p173 = scmp.ne.s32.totalorder %s158, %s172
    %p174 = scmp.eq.s32.totalorder %s22, 0
    %p175 = por %p173, %p174
    %s177 = sadd.s32 %s176, 1
    %p180 = scmp.eq.s32.totalorder %s16, 1
    %p181 = scmp.ne.s32.totalorder %s176, %s178
    %p182 = scmp.eq.s32.totalorder %s16, 0
    %p183 = por %p181, %p182
    %p184 = scmp.ne.s32.totalorder %s176, %s178
    %p185 = scmp.eq.s32.totalorder %s21, 1
    %p186 = por %p184, %p185
    %p187 = scmp.ne.s32.totalorder %s178, %s179
    %p188 = scmp.eq.s32.totalorder %s21, 0
    %p189 = por %p187, %p188
    %p190 = scmp.ne.s32.totalorder %s178, %s179
    %p191 = scmp.eq.s32.totalorder %s22, 1
    %p192 = por %p190, %p191
    %p194 = scmp.ne.s32.totalorder %s179, %s193
    %p195 = scmp.eq.s32.totalorder %s22, 0
    %p196 = por %p194, %p195
    %s198 = sadd.s32 %s197, 1
    %p201 = scmp.eq.s32.totalorder %s16, 1
    %p202 = scmp.ne.s32.totalorder %s197, %s199
    %p203 = scmp.eq.s32.totalorder %s16, 0
    %p204 = por %p202, %p203
    %p205 = scmp.ne.s32.totalorder %s197, %s199
    %p206 = scmp.eq.s32.totalorder %s21, 1
    %p207 = por %p205, %p206
    %p208 = scmp.ne.s32.totalorder %s199, %s200
    %p209 = scmp.eq.s32.totalorder %s21, 0
    %p210 = por %p208, %p209
    %p211 = scmp.ne.s32.totalorder %s199, %s200
    %p212 = scmp.eq.s32.totalorder %s22, 1
    %p213 = por %p211, %p212
    %p215 = scmp.ne.s32.totalorder %s200, %s214
    %p216 = scmp.eq.s32.totalorder %s22, 0
    %p217 = por %p215, %p216
    %s219 = sadd.s32 %s218, 1
    %p222 = scmp.eq.s32.totalorder %s16, 1
    %p223 = scmp.ne.s32.totalorder %s218, %s220
    %p224 = scmp.eq.s32.totalorder %s16, 0
    %p225 = por %p223, %p224
    %p226 = scmp.ne.s32.totalorder %s218, %s220
    %p227 = scmp.eq.s32.totalorder %s21, 1
    %p228 = por %p226, %p227
    %p229 = scmp.ne.s32.totalorder %s220, %s221
    %p230 = scmp.eq.s32.totalorder %s21, 0
    %p231 = por %p229, %p230
    %p232 = scmp.ne.s32.totalorder %s220, %s221
    %p233 = scmp.eq.s32.totalorder %s22, 1
    %p234 = por %p232, %p233
    %p236 = scmp.ne.s32.totalorder %s221, %s235
    %p237 = scmp.eq.s32.totalorder %s22, 0
    %p238 = por %p236, %p237
    %s239 = ssub.s32 %s16, %s23
    %p240 = scmp.eq.s32.totalorder %s239, 0
    %s242 = sadd.s32 %s241, 1
    %s243 = scalar_select %p240, %s241, %s242
    %p246 = pneg %p240
    %p247 = scmp.eq.s32.totalorder %s16, 1
    %p248 = por %p246, %p247
    %p249 = scmp.ne.s32.totalorder %s241, %s244
    %p250 = scmp.eq.s32.totalorder %s16, 0
    %p251 = por %p249, %p250
    %p252 = scmp.ne.s32.totalorder %s241, %s244
    %p253 = scmp.eq.s32.totalorder %s21, 1
    %p254 = por %p252, %p253
    %p255 = scmp.ne.s32.totalorder %s244, %s245
    %p256 = scmp.eq.s32.totalorder %s21, 0
    %p257 = por %p255, %p256
    %p258 = scmp.ne.s32.totalorder %s244, %s245
    %p259 = scmp.eq.s32.totalorder %s22, 1
    %p260 = por %p258, %p259
    %p262 = scmp.ne.s32.totalorder %s245, %s261
    %p263 = scmp.eq.s32.totalorder %s22, 0
    %p264 = por %p262, %p263
    %p265 = scmp.le.s32.totalorder 1, %s16
    %p266 = scmp.lt.s32.totalorder %s16, 3
    %p267 = pnand %p265, %p266
    %p268 = pneg %p267
    // Predicated region
    $region9: #{bottleneck_forward.1} parent=5 // pred_check
      _
    $region10: #{bottleneck_forward.1} parent=5 // pred_check_branch
      %270 = sbr.rel (%p267) target = $region12
    $region11: #{bottleneck_forward.1} parent=5 // pred_region
      %s271 = ssub.s32 %s16, 1
      // Predicated region
      $region13: #{bottleneck_forward.1} parent=11 // pred_check
        %p272 = pneg %p63
      $region14: #{bottleneck_forward.1} parent=11 // pred_check_branch
        %274 = sbr.rel (%p272) target = $region16
      $region15: #{bottleneck_forward.1} parent=11 // pred_region
        _
      $region16: #{bottleneck_forward.1} parent=11 // pred_fallthru
        _
      // Predicated region
      $region17: #{bottleneck_forward.1} parent=11 // pred_check
        %p275 = pneg %p84
      $region18: #{bottleneck_forward.1} parent=11 // pred_check_branch
        %277 = sbr.rel (%p275) target = $region20
      $region19: #{bottleneck_forward.1} parent=11 // pred_region
        _
      $region20: #{bottleneck_forward.1} parent=11 // pred_fallthru
        _
      // Predicated region
      $region21: #{bottleneck_forward.1} parent=11 // pred_check
        %p278 = pneg %p105
      $region22: #{bottleneck_forward.1} parent=11 // pred_check_branch
        %280 = sbr.rel (%p278) target = $region24
      $region23: #{bottleneck_forward.1} parent=11 // pred_region
        _
      $region24: #{bottleneck_forward.1} parent=11 // pred_fallthru
        _
      // Predicated region
      $region25: #{bottleneck_forward.1} parent=11 // pred_check
        %p281 = pneg %p126
      $region26: #{bottleneck_forward.1} parent=11 // pred_check_branch
        %283 = sbr.rel (%p281) target = $region28
      $region27: #{bottleneck_forward.1} parent=11 // pred_region
        _
      $region28: #{bottleneck_forward.1} parent=11 // pred_fallthru
        _
      // Predicated region
      $region29: #{bottleneck_forward.1} parent=11 // pred_check
        %p284 = pneg %p147
      $region30: #{bottleneck_forward.1} parent=11 // pred_check_branch
        %286 = sbr.rel (%p284) target = $region32
      $region31: #{bottleneck_forward.1} parent=11 // pred_region
        _
      $region32: #{bottleneck_forward.1} parent=11 // pred_fallthru
        _
      // Predicated region
      $region33: #{bottleneck_forward.1} parent=11 // pred_check
        %p287 = pneg %p168
      $region34: #{bottleneck_forward.1} parent=11 // pred_check_branch
        %289 = sbr.rel (%p287) target = $region36
      $region35: #{bottleneck_forward.1} parent=11 // pred_region
        _
      $region36: #{bottleneck_forward.1} parent=11 // pred_fallthru
        _
      // Predicated region
      $region37: #{bottleneck_forward.1} parent=11 // pred_check
        %p290 = pneg %p189
      $region38: #{bottleneck_forward.1} parent=11 // pred_check_branch
        %292 = sbr.rel (%p290) target = $region40
      $region39: #{bottleneck_forward.1} parent=11 // pred_region
        _
      $region40: #{bottleneck_forward.1} parent=11 // pred_fallthru
        _
      // Predicated region
      $region41: #{bottleneck_forward.1} parent=11 // pred_check
        %p293 = pneg %p210
      $region42: #{bottleneck_forward.1} parent=11 // pred_check_branch
        %295 = sbr.rel (%p293) target = $region44
      $region43: #{bottleneck_forward.1} parent=11 // pred_region
        _
      $region44: #{bottleneck_forward.1} parent=11 // pred_fallthru
        _
      // Predicated region
      $region45: #{bottleneck_forward.1} parent=11 // pred_check
        %p296 = pneg %p231
      $region46: #{bottleneck_forward.1} parent=11 // pred_check_branch
        %298 = sbr.rel (%p296) target = $region48
      $region47: #{bottleneck_forward.1} parent=11 // pred_region
        _
      $region48: #{bottleneck_forward.1} parent=11 // pred_fallthru
        _
    $region12: #{bottleneck_forward.1} parent=5 // pred_fallthru
      _
    %p299 = scmp.lt.s32.totalorder %s16, 2
    // Predicated region
    $region49: #{bottleneck_forward.1} parent=5 // pred_check
      %p300 = pneg %p299
    $region50: #{bottleneck_forward.1} parent=5 // pred_check_branch
      %302 = sbr.rel (%p300) target = $region52
    $region51: #{bottleneck_forward.1} parent=5 // pred_region
      // Predicated region
      $region53: #{bottleneck_forward.1} parent=51 // pred_check
        %p303 = pneg %p36
      $region54: #{bottleneck_forward.1} parent=51 // pred_check_branch
        %305 = sbr.rel (%p303) target = $region56
      $region55: #{bottleneck_forward.1} parent=51 // pred_region
        %p306 = scmp.lt.s32.totalorder %s16, 1
        %s307 = scalar_select %p306, %s16, 1
        %s308 = smul.addr %s307, 32
        %s309 = smul.addr %s308, 4
        %s310 = scalar_lea.vmem %s0, %s309
      $region56: #{bottleneck_forward.1} parent=51 // pred_fallthru
        _
    $region52: #{bottleneck_forward.1} parent=5 // pred_fallthru
      _
    %p311 = scmp.le.s32.totalorder 1, %s16
    %p312 = scmp.lt.s32.totalorder %s16, 3
    %p313 = pnand %p311, %p312
    %p314 = pneg %p313
    // Predicated region
    $region57: #{bottleneck_forward.1} parent=5 // pred_check
      _
    $region58: #{bottleneck_forward.1} parent=5 // pred_check_branch
      %316 = sbr.rel (%p313) target = $region60
    $region59: #{bottleneck_forward.1} parent=5 // pred_region
      %s317 = ssub.s32 %s16, 1
      %p318 = scmp.lt.s32.totalorder %s21, 1
      %s319 = scalar_select %p318, %s21, 1
      %s320 = smul.addr %s319, 32
      %s321 = smul.addr %s320, 4
      %s322 = scalar_lea.vmem %s0, %s321
      %p323 = pneg %p42
      %p324 = pneg %p39
      %p325 = pneg %p63
      %p326 = pneg %p60
      %p327 = pneg %p84
      %p328 = pneg %p81
      %p329 = pneg %p105
      %p330 = pneg %p102
      %p331 = pneg %p126
      %p332 = pneg %p123
      %p333 = pneg %p147
      %p334 = pneg %p144
      %p335 = pneg %p168
      %p336 = pneg %p165
      %p337 = pneg %p189
      %p338 = pneg %p186
      %p339 = pneg %p210
      %p340 = pneg %p207
      %p341 = pneg %p231
      %p342 = pneg %p228
      %p343 = pneg %p257
      %p344 = pneg %p254
      %p345 = scmp.lt.s32.totalorder %s21, 1
      %s346 = scalar_select %p345, %s21, 1
      %s347 = smul.addr %s346, 32
      %s348 = smul.addr %s347, 8
      %s349 = scalar_lea.vmem %s10, %s348
      %p350 = scmp.lt.s32.totalorder %s21, 1
      %s351 = scalar_select %p350, %s21, 1
      %s352 = smul.addr %s351, 32
      %s353 = smul.addr %s352, 4
      %s354 = scalar_lea.vmem %s0, %s353
      %p355 = scmp.lt.s32.totalorder %s21, 1
      %s356 = scalar_select %p355, %s21, 1
      %s357 = smul.addr %s356, 32
      %s358 = smul.addr %s357, 8
      %s359 = scalar_lea.vmem %s10, %s358
      %v361 = vld [vmem:[%s354] sm:$0xf]
      %v362 = vld [vmem:[%s354 + $0x4] sm:$0xf]
      %v363 = vld [vmem:[%s354 + $0x8] sm:$0xf]
      %v364 = vld [vmem:[%s354 + $0xc] sm:$0xf]
      %v365 = vld [vmem:[%s354 + $0x10] sm:$0xf]
      %v366 = vld [vmem:[%s354 + $0x14] sm:$0xf]
      %v367 = vld [vmem:[%s354 + $0x18] sm:$0xf]
      %v368 = vld [vmem:[%s354 + $0x1c] sm:$0xf]
      %v369 = vld [vmem:[%s354 + $0x20] sm:$0xf]
      %v370 = vld [vmem:[%s354 + $0x24] sm:$0xf]
      %v371 = vld [vmem:[%s354 + $0x28] sm:$0xf]
      %v372 = vld [vmem:[%s354 + $0x2c] sm:$0xf]
      %v373 = vld [vmem:[%s354 + $0x30] sm:$0xf]
      %v374 = vld [vmem:[%s354 + $0x34] sm:$0xf]
      %v375 = vld [vmem:[%s354 + $0x38] sm:$0xf]
      %v376 = vld [vmem:[%s354 + $0x3c] sm:$0xf]
      %v377 = vld [vmem:[%s354 + $0x40] sm:$0xf]
      %v378 = vld [vmem:[%s354 + $0x44] sm:$0xf]
      %v379 = vld [vmem:[%s354 + $0x48] sm:$0xf]
      %v380 = vld [vmem:[%s354 + $0x4c] sm:$0xf]
      %v381 = vld [vmem:[%s354 + $0x50] sm:$0xf]
      %v382 = vld [vmem:[%s354 + $0x54] sm:$0xf]
      %v383 = vld [vmem:[%s354 + $0x58] sm:$0xf]
      %v384 = vld [vmem:[%s354 + $0x5c] sm:$0xf]
      %v385 = vld [vmem:[%s354 + $0x60] sm:$0xf]
      %v386 = vld [vmem:[%s354 + $0x64] sm:$0xf]
      %v387 = vld [vmem:[%s354 + $0x68] sm:$0xf]
      %v388 = vld [vmem:[%s354 + $0x6c] sm:$0xf]
      %v389 = vld [vmem:[%s354 + $0x70] sm:$0xf]
      %v390 = vld [vmem:[%s354 + $0x74] sm:$0xf]
      %v391 = vld [vmem:[%s354 + $0x78] sm:$0xf]
      %v392 = vld [vmem:[%s354 + $0x7c] sm:$0xf]
      %v393 = vld [vmem:[%s1] sm:$0xf]
      %v394 = vld [vmem:[%s1 + $0x4] sm:$0xf]
      %v395 = vld [vmem:[%s1 + $0x8] sm:$0xf]
      %v396 = vld [vmem:[%s1 + $0xc] sm:$0xf]
      %v397 = vld [vmem:[%s1 + $0x10] sm:$0xf]
      %v398 = vld [vmem:[%s1 + $0x14] sm:$0xf]
      %v399 = vld [vmem:[%s1 + $0x18] sm:$0xf]
      %v400 = vld [vmem:[%s1 + $0x1c] sm:$0xf]
      %v401 = vld [vmem:[%s1 + $0x20] sm:$0xf]
      %v402 = vld [vmem:[%s1 + $0x24] sm:$0xf]
      %v403 = vld [vmem:[%s1 + $0x28] sm:$0xf]
      %v404 = vld [vmem:[%s1 + $0x2c] sm:$0xf]
      %v405 = vld [vmem:[%s1 + $0x30] sm:$0xf]
      %v406 = vld [vmem:[%s1 + $0x34] sm:$0xf]
      %v407 = vld [vmem:[%s1 + $0x38] sm:$0xf]
      %v408 = vld [vmem:[%s1 + $0x3c] sm:$0xf]
      %v441 = vunpack.c.l.b16 %v361
      %v442 = vunpack.c.l.b16 %v362
      %v443 = vunpack.c.l.b16 %v363
      %v444 = vunpack.c.l.b16 %v364
      %v445 = vunpack.c.l.b16 %v365
      %v446 = vunpack.c.l.b16 %v366
      %v447 = vunpack.c.l.b16 %v367
      %v448 = vunpack.c.l.b16 %v368
      %v449 = vunpack.c.l.b16 %v369
      %v450 = vunpack.c.l.b16 %v370
      %v451 = vunpack.c.l.b16 %v371
      %v452 = vunpack.c.l.b16 %v372
      %v453 = vunpack.c.l.b16 %v373
      %v454 = vunpack.c.l.b16 %v374
      %v455 = vunpack.c.l.b16 %v375
      %v456 = vunpack.c.l.b16 %v376
      %v457 = vunpack.c.l.b16 %v377
      %v458 = vunpack.c.l.b16 %v378
      %v459 = vunpack.c.l.b16 %v379
      %v460 = vunpack.c.l.b16 %v380
      %v461 = vunpack.c.l.b16 %v381
      %v462 = vunpack.c.l.b16 %v382
      %v463 = vunpack.c.l.b16 %v383
      %v464 = vunpack.c.l.b16 %v384
      %v465 = vunpack.c.l.b16 %v385
      %v466 = vunpack.c.l.b16 %v386
      %v467 = vunpack.c.l.b16 %v387
      %v468 = vunpack.c.l.b16 %v388
      %v469 = vunpack.c.l.b16 %v389
      %v470 = vunpack.c.l.b16 %v390
      %v471 = vunpack.c.l.b16 %v391
      %v472 = vunpack.c.l.b16 %v392
      %v473 = vpack.c.b16 %v442, %v441
      %v474 = vpack.c.b16 %v444, %v443
      %v475 = vpack.c.b16 %v446, %v445
      %v476 = vpack.c.b16 %v448, %v447
      %v477 = vpack.c.b16 %v450, %v449
      %v478 = vpack.c.b16 %v452, %v451
      %v479 = vpack.c.b16 %v454, %v453
      %v480 = vpack.c.b16 %v456, %v455
      %v481 = vpack.c.b16 %v458, %v457
      %v482 = vpack.c.b16 %v460, %v459
      %v483 = vpack.c.b16 %v462, %v461
      %v484 = vpack.c.b16 %v464, %v463
      %v485 = vpack.c.b16 %v466, %v465
      %v486 = vpack.c.b16 %v468, %v467
      %v487 = vpack.c.b16 %v470, %v469
      %v488 = vpack.c.b16 %v472, %v471
      %v521 = vunpack.c.l.b16 %v393
      %v522 = vunpack.c.l.b16 %v394
      %v523 = vunpack.c.l.b16 %v395
      %v524 = vunpack.c.l.b16 %v396
      %v525 = vunpack.c.l.b16 %v397
      %v526 = vunpack.c.l.b16 %v398
      %v527 = vunpack.c.l.b16 %v399
      %v528 = vunpack.c.l.b16 %v400
      %v529 = vunpack.c.l.b16 %v401
      %v530 = vunpack.c.l.b16 %v402
      %v531 = vunpack.c.l.b16 %v403
      %v532 = vunpack.c.l.b16 %v404
      %v533 = vunpack.c.l.b16 %v405
      %v534 = vunpack.c.l.b16 %v406
      %v535 = vunpack.c.l.b16 %v407
      %v536 = vunpack.c.l.b16 %v408
      %v537 = vpack.c.b16 %v522, %v521
      %v538 = vpack.c.b16 %v524, %v523
      %v539 = vpack.c.b16 %v526, %v525
      %v540 = vpack.c.b16 %v528, %v527
      %v541 = vpack.c.b16 %v530, %v529
      %v542 = vpack.c.b16 %v532, %v531
      %v543 = vpack.c.b16 %v534, %v533
      %v544 = vpack.c.b16 %v536, %v535
      %553 = vmatpush.bf16.msra.mxu0 %v544
      %554 = vmatpush.bf16.msra.mxu0 %v543
      %555 = vmatpush.bf16.msra.mxu0 %v542
      %556 = vmatpush.bf16.msra.mxu0 %v541
      %557 = vmatpush.bf16.msra.mxu0 %v540
      %558 = vmatpush.bf16.msra.mxu0 %v539
      %559 = vmatpush.bf16.msra.mxu0 %v538
      %560 = vmatpush.bf16.msra.mxu0 %v537
      %561 = vmatmul.bf16.gmra.mxu0 %v473
      %v562 = vpop.f32.mrf.mxu0
      %v563 = vadd.f32 0.0, %v562
      %v564 = vpop.f32.mrf.mxu0
      %v565 = vadd.f32 0.0, %v564
      %566 = vmatmul.bf16.gmra.mxu0 %v474
      %v567 = vpop.f32.mrf.mxu0
      %v568 = vadd.f32 0.0, %v567
      %v569 = vpop.f32.mrf.mxu0
      %v570 = vadd.f32 0.0, %v569
      %571 = vmatmul.bf16.gmra.mxu0 %v475
      %v572 = vpop.f32.mrf.mxu0
      %v573 = vadd.f32 0.0, %v572
      %v574 = vpop.f32.mrf.mxu0
      %v575 = vadd.f32 0.0, %v574
      %576 = vmatmul.bf16.gmra.mxu0 %v476
      %v577 = vpop.f32.mrf.mxu0
      %v578 = vadd.f32 0.0, %v577
      %v579 = vpop.f32.mrf.mxu0
      %v580 = vadd.f32 0.0, %v579
      %581 = vmatmul.bf16.gmra.mxu0 %v477
      %v582 = vpop.f32.mrf.mxu0
      %v583 = vadd.f32 0.0, %v582
      %v584 = vpop.f32.mrf.mxu0
      %v585 = vadd.f32 0.0, %v584
      %586 = vmatmul.bf16.gmra.mxu0 %v478
      %v587 = vpop.f32.mrf.mxu0
      %v588 = vadd.f32 0.0, %v587
      %v589 = vpop.f32.mrf.mxu0
      %v590 = vadd.f32 0.0, %v589
      %591 = vmatmul.bf16.gmra.mxu0 %v479
      %v592 = vpop.f32.mrf.mxu0
      %v593 = vadd.f32 0.0, %v592
      %v594 = vpop.f32.mrf.mxu0
      %v595 = vadd.f32 0.0, %v594
      %596 = vmatmul.bf16.gmra.mxu0 %v480
      %v597 = vpop.f32.mrf.mxu0
      %v598 = vadd.f32 0.0, %v597
      %v599 = vpop.f32.mrf.mxu0
      %v600 = vadd.f32 0.0, %v599
      %601 = vmatmul.bf16.gmra.mxu0 %v481
      %v602 = vpop.f32.mrf.mxu0
      %v603 = vadd.f32 0.0, %v602
      %v604 = vpop.f32.mrf.mxu0
      %v605 = vadd.f32 0.0, %v604
      %606 = vmatmul.bf16.gmra.mxu0 %v482
      %v607 = vpop.f32.mrf.mxu0
      %v608 = vadd.f32 0.0, %v607
      %v609 = vpop.f32.mrf.mxu0
      %v610 = vadd.f32 0.0, %v609
      %611 = vmatmul.bf16.gmra.mxu0 %v483
      %v612 = vpop.f32.mrf.mxu0
      %v613 = vadd.f32 0.0, %v612
      %v614 = vpop.f32.mrf.mxu0
      %v615 = vadd.f32 0.0, %v614
      %616 = vmatmul.bf16.gmra.mxu0 %v484
      %v617 = vpop.f32.mrf.mxu0
      %v618 = vadd.f32 0.0, %v617
      %v619 = vpop.f32.mrf.mxu0
      %v620 = vadd.f32 0.0, %v619
      %621 = vmatmul.bf16.gmra.mxu0 %v485
      %v622 = vpop.f32.mrf.mxu0
      %v623 = vadd.f32 0.0, %v622
      %v624 = vpop.f32.mrf.mxu0
      %v625 = vadd.f32 0.0, %v624
      %626 = vmatmul.bf16.gmra.mxu0 %v486
      %v627 = vpop.f32.mrf.mxu0
      %v628 = vadd.f32 0.0, %v627
      %v629 = vpop.f32.mrf.mxu0
      %v630 = vadd.f32 0.0, %v629
      %631 = vmatmul.bf16.gmra.mxu0 %v487
      %v632 = vpop.f32.mrf.mxu0
      %v633 = vadd.f32 0.0, %v632
      %v634 = vpop.f32.mrf.mxu0
      %v635 = vadd.f32 0.0, %v634
      %636 = vmatmul.bf16.gmra.mxu0 %v488
      %v637 = vpop.f32.mrf.mxu0
      %v638 = vadd.f32 0.0, %v637
      %v639 = vpop.f32.mrf.mxu0
      %v640 = vadd.f32 0.0, %v639
      %641 = vdwg.mxu0
      %v642 = vld [vmem:[%s4] sm:$0x1]
      %v644 = vperm.slane %v642, 0
      %v646 = vmul.f32 %v563, %v644
      %v647 = vmul.f32 %v565, %v644
      %v648 = vmul.f32 %v568, %v644
      %v649 = vmul.f32 %v570, %v644
      %v650 = vmul.f32 %v573, %v644
      %v651 = vmul.f32 %v575, %v644
      %v652 = vmul.f32 %v578, %v644
      %v653 = vmul.f32 %v580, %v644
      %v654 = vmul.f32 %v583, %v644
      %v655 = vmul.f32 %v585, %v644
      %v656 = vmul.f32 %v588, %v644
      %v657 = vmul.f32 %v590, %v644
      %v658 = vmul.f32 %v593, %v644
      %v659 = vmul.f32 %v595, %v644
      %v660 = vmul.f32 %v598, %v644
      %v661 = vmul.f32 %v600, %v644
      %v662 = vmul.f32 %v603, %v644
      %v663 = vmul.f32 %v605, %v644
      %v664 = vmul.f32 %v608, %v644
      %v665 = vmul.f32 %v610, %v644
      %v666 = vmul.f32 %v613, %v644
      %v667 = vmul.f32 %v615, %v644
      %v668 = vmul.f32 %v618, %v644
      %v669 = vmul.f32 %v620, %v644
      %v670 = vmul.f32 %v623, %v644
      %v671 = vmul.f32 %v625, %v644
      %v672 = vmul.f32 %v628, %v644
      %v673 = vmul.f32 %v630, %v644
      %v674 = vmul.f32 %v633, %v644
      %v675 = vmul.f32 %v635, %v644
      %v676 = vmul.f32 %v638, %v644
      %v677 = vmul.f32 %v640, %v644
      %v678 = vld [vmem:[%s5] sm:$0x1]
      %v680 = vperm.slane %v678, 0
      %v682 = vadd.f32 %v646, %v680
      %v683 = vadd.f32 %v647, %v680
      %v684 = vadd.f32 %v648, %v680
      %v685 = vadd.f32 %v649, %v680
      %v686 = vadd.f32 %v650, %v680
      %v687 = vadd.f32 %v651, %v680
      %v688 = vadd.f32 %v652, %v680
      %v689 = vadd.f32 %v653, %v680
      %v690 = vadd.f32 %v654, %v680
      %v691 = vadd.f32 %v655, %v680
      %v692 = vadd.f32 %v656, %v680
      %v693 = vadd.f32 %v657, %v680
      %v694 = vadd.f32 %v658, %v680
      %v695 = vadd.f32 %v659, %v680
      %v696 = vadd.f32 %v660, %v680
      %v697 = vadd.f32 %v661, %v680
      %v698 = vadd.f32 %v662, %v680
      %v699 = vadd.f32 %v663, %v680
      %v700 = vadd.f32 %v664, %v680
      %v701 = vadd.f32 %v665, %v680
      %v702 = vadd.f32 %v666, %v680
      %v703 = vadd.f32 %v667, %v680
      %v704 = vadd.f32 %v668, %v680
      %v705 = vadd.f32 %v669, %v680
      %v706 = vadd.f32 %v670, %v680
      %v707 = vadd.f32 %v671, %v680
      %v708 = vadd.f32 %v672, %v680
      %v709 = vadd.f32 %v673, %v680
      %v710 = vadd.f32 %v674, %v680
      %v711 = vadd.f32 %v675, %v680
      %v712 = vadd.f32 %v676, %v680
      %v713 = vadd.f32 %v677, %v680
      %v714 = vmax.f32 %v682, 0.0
      %v715 = vmax.f32 %v683, 0.0
      %v716 = vmax.f32 %v684, 0.0
      %v717 = vmax.f32 %v685, 0.0
      %v718 = vmax.f32 %v686, 0.0
      %v719 = vmax.f32 %v687, 0.0
      %v720 = vmax.f32 %v688, 0.0
      %v721 = vmax.f32 %v689, 0.0
      %v722 = vmax.f32 %v690, 0.0
      %v723 = vmax.f32 %v691, 0.0
      %v724 = vmax.f32 %v692, 0.0
      %v725 = vmax.f32 %v693, 0.0
      %v726 = vmax.f32 %v694, 0.0
      %v727 = vmax.f32 %v695, 0.0
      %v728 = vmax.f32 %v696, 0.0
      %v729 = vmax.f32 %v697, 0.0
      %v730 = vmax.f32 %v698, 0.0
      %v731 = vmax.f32 %v699, 0.0
      %v732 = vmax.f32 %v700, 0.0
      %v733 = vmax.f32 %v701, 0.0
      %v734 = vmax.f32 %v702, 0.0
      %v735 = vmax.f32 %v703, 0.0
      %v736 = vmax.f32 %v704, 0.0
      %v737 = vmax.f32 %v705, 0.0
      %v738 = vmax.f32 %v706, 0.0
      %v739 = vmax.f32 %v707, 0.0
      %v740 = vmax.f32 %v708, 0.0
      %v741 = vmax.f32 %v709, 0.0
      %v742 = vmax.f32 %v710, 0.0
      %v743 = vmax.f32 %v711, 0.0
      %v744 = vmax.f32 %v712, 0.0
      %v745 = vmax.f32 %v713, 0.0
      %746 = vst [vmem:[#allocation2] sm:$0xf] 0
      %747 = vst [vmem:[#allocation2 + $0x4] sm:$0xf] 0
      %748 = vst [vmem:[#allocation2 + $0x8] sm:$0x1] 0
      %749 = vst [vmem:[#allocation2 + $0xc] sm:$0xf] 0
      %750 = vst [vmem:[#allocation2 + $0x10] sm:$0xf] 0
      %751 = vst [vmem:[#allocation2 + $0x14] sm:$0x1] 0
      %752 = vst [vmem:[#allocation2 + $0x18] sm:$0xf] 0
      %753 = vst [vmem:[#allocation2 + $0x1c] sm:$0xf] 0
      %754 = vst [vmem:[#allocation2 + $0x20] sm:$0x1] 0
      %755 = vst [vmem:[#allocation2 + $0x24] sm:$0xf] 0
      %756 = vst [vmem:[#allocation2 + $0x28] sm:$0xf] 0
      %757 = vst [vmem:[#allocation2 + $0x2c] sm:$0x1] 0
      %758 = vst [vmem:[#allocation2 + $0x30] sm:$0xf] 0
      %759 = vst [vmem:[#allocation2 + $0x34] sm:$0xf] 0
      %760 = vst [vmem:[#allocation2 + $0x38] sm:$0x1] 0
      %761 = vst [vmem:[#allocation2 + $0x3c] sm:$0xf] 0
      %762 = vst [vmem:[#allocation2 + $0x40] sm:$0xf] 0
      %763 = vst [vmem:[#allocation2 + $0x44] sm:$0x1] 0
      %764 = vst [vmem:[#allocation2 + $0x48] sm:$0xf] 0
      %765 = vst [vmem:[#allocation2 + $0x4c] sm:$0xf] 0
      %766 = vst [vmem:[#allocation2 + $0x50] sm:$0x1] 0
      %767 = vst [vmem:[#allocation2 + $0x54] sm:$0xf] 0
      %768 = vst [vmem:[#allocation2 + $0x58] sm:$0xf] 0
      %769 = vst [vmem:[#allocation2 + $0x5c] sm:$0x1] 0
      %770 = vst [vmem:[#allocation2 + $0x60] sm:$0xf] 0
      %771 = vst [vmem:[#allocation2 + $0x64] sm:$0xf] 0
      %772 = vst [vmem:[#allocation2 + $0x68] sm:$0x1] 0
      %773 = vst [vmem:[#allocation2 + $0x6c] sm:$0xf] 0
      %774 = vst [vmem:[#allocation2 + $0x70] sm:$0xf] 0
      %775 = vst [vmem:[#allocation2 + $0x74] sm:$0x1] 0
      %776 = vst [vmem:[#allocation2 + $0x78] sm:$0xf] 0
      %777 = vst [vmem:[#allocation2 + $0x7c] sm:$0xf] 0
      %778 = vst [vmem:[#allocation2 + $0x80] sm:$0x1] 0
      %779 = vst [vmem:[#allocation2 + $0x84] sm:$0xf] 0
      %780 = vst [vmem:[#allocation2 + $0x88] sm:$0xf] 0
      %781 = vst [vmem:[#allocation2 + $0x8c] sm:$0x1] 0
      %782 = vst [vmem:[#allocation2 + $0x90] sm:$0xf] 0
      %783 = vst [vmem:[#allocation2 + $0x94] sm:$0xf] 0
      %784 = vst [vmem:[#allocation2 + $0x98] sm:$0x1] 0
      %785 = vst [vmem:[#allocation2 + $0x9c] sm:$0xf] 0
      %786 = vst [vmem:[#allocation2 + $0xa0] sm:$0xf] 0
      %787 = vst [vmem:[#allocation2 + $0xa4] sm:$0x1] 0
      %788 = vst [vmem:[#allocation2 + $0xa8] sm:$0xf] 0
      %789 = vst [vmem:[#allocation2 + $0xac] sm:$0xf] 0
      %790 = vst [vmem:[#allocation2 + $0xb0] sm:$0x1] 0
      %791 = vst [vmem:[#allocation2 + $0xb4] sm:$0xf] 0
      %792 = vst [vmem:[#allocation2 + $0xb8] sm:$0xf] 0
      %793 = vst [vmem:[#allocation2 + $0xbc] sm:$0x1] 0
      %794 = vst [vmem:[#allocation2 + $0xc0] sm:$0xf] 0
      %795 = vst [vmem:[#allocation2 + $0xc4] sm:$0xf] 0
      %796 = vst [vmem:[#allocation2 + $0xc8] sm:$0x1] 0
      %797 = vst [vmem:[#allocation2 + $0xcc] sm:$0xf] 0
      %798 = vst [vmem:[#allocation2 + $0xd0] sm:$0xf] 0
      %799 = vst [vmem:[#allocation2 + $0xd4] sm:$0x1] 0
      %v800 = vpack.c.bf16 %v714, %v714
      %v801 = vpack.c.bf16 %v715, %v715
      %v802 = vpack.c.bf16 %v716, %v716
      %v803 = vpack.c.bf16 %v717, %v717
      %v804 = vpack.c.bf16 %v718, %v718
      %v805 = vpack.c.bf16 %v719, %v719
      %v806 = vpack.c.bf16 %v720, %v720
      %v807 = vpack.c.bf16 %v721, %v721
      %v808 = vpack.c.bf16 %v722, %v722
      %v809 = vpack.c.bf16 %v723, %v723
      %v810 = vpack.c.bf16 %v724, %v724
      %v811 = vpack.c.bf16 %v725, %v725
      %v812 = vpack.c.bf16 %v726, %v726
      %v813 = vpack.c.bf16 %v727, %v727
      %v814 = vpack.c.bf16 %v728, %v728
      %v815 = vpack.c.bf16 %v729, %v729
      %v816 = vpack.c.bf16 %v730, %v730
      %v817 = vpack.c.bf16 %v731, %v731
      %v818 = vpack.c.bf16 %v732, %v732
      %v819 = vpack.c.bf16 %v733, %v733
      %v820 = vpack.c.bf16 %v734, %v734
      %v821 = vpack.c.bf16 %v735, %v735
      %v822 = vpack.c.bf16 %v736, %v736
      %v823 = vpack.c.bf16 %v737, %v737
      %v824 = vpack.c.bf16 %v738, %v738
      %v825 = vpack.c.bf16 %v739, %v739
      %v826 = vpack.c.bf16 %v740, %v740
      %v827 = vpack.c.bf16 %v741, %v741
      %v828 = vpack.c.bf16 %v742, %v742
      %v829 = vpack.c.bf16 %v743, %v743
      %v830 = vpack.c.bf16 %v744, %v744
      %v831 = vpack.c.bf16 %v745, %v745
      %vm832 = vsmask.f32 256
      %vm833 = vsmask.f32 4368
      %vm834 = vmor %vm832, %vm833
      %v836 = vshrl.u32 %v800, 16
      %v838 = vrot.slane %v836, 7
      %v839 = vshll.u32 %v800, 16
      %v841 = vor.u32 %v838, %v839
      %v842 = vrot.slane %v838, 4
      %v844 = vshrl.u32 %v801, 16
      %v846 = vrot.slane %v844, 7
      %v847 = vshll.u32 %v801, 16
      %v849 = vor.u32 %v846, %v847
      %v850 = vsel %vm834, %v842, %v849
      %v851 = vrot.slane %v846, 4
      %v853 = vshrl.u32 %v802, 16
      %v855 = vrot.slane %v853, 7
      %v856 = vshll.u32 %v802, 16
      %v858 = vor.u32 %v855, %v856
      %v859 = vrot.slane %v855, 4
      %v861 = vshrl.u32 %v803, 16
      %v863 = vrot.slane %v861, 7
      %v864 = vshll.u32 %v803, 16
      %v866 = vor.u32 %v863, %v864
      %v867 = vsel %vm834, %v859, %v866
      %v868 = vrot.slane %v863, 4
      %v870 = vshrl.u32 %v804, 16
      %v872 = vrot.slane %v870, 7
      %v873 = vshll.u32 %v804, 16
      %v875 = vor.u32 %v872, %v873
      %v876 = vrot.slane %v872, 4
      %v878 = vshrl.u32 %v805, 16
      %v880 = vrot.slane %v878, 7
      %v881 = vshll.u32 %v805, 16
      %v883 = vor.u32 %v880, %v881
      %v884 = vsel %vm834, %v876, %v883
      %v885 = vrot.slane %v880, 4
      %v887 = vshrl.u32 %v806, 16
      %v889 = vrot.slane %v887, 7
      %v890 = vshll.u32 %v806, 16
      %v892 = vor.u32 %v889, %v890
      %v893 = vrot.slane %v889, 4
      %v895 = vshrl.u32 %v807, 16
      %v897 = vrot.slane %v895, 7
      %v898 = vshll.u32 %v807, 16
      %v900 = vor.u32 %v897, %v898
      %v901 = vsel %vm834, %v893, %v900
      %v902 = vrot.slane %v897, 4
      %v904 = vshrl.u32 %v808, 16
      %v906 = vrot.slane %v904, 7
      %v907 = vshll.u32 %v808, 16
      %v909 = vor.u32 %v906, %v907
      %v910 = vrot.slane %v906, 4
      %v912 = vshrl.u32 %v809, 16
      %v914 = vrot.slane %v912, 7
      %v915 = vshll.u32 %v809, 16
      %v917 = vor.u32 %v914, %v915
      %v918 = vsel %vm834, %v910, %v917
      %v919 = vrot.slane %v914, 4
      %v921 = vshrl.u32 %v810, 16
      %v923 = vrot.slane %v921, 7
      %v924 = vshll.u32 %v810, 16
      %v926 = vor.u32 %v923, %v924
      %v927 = vrot.slane %v923, 4
      %v929 = vshrl.u32 %v811, 16
      %v931 = vrot.slane %v929, 7
      %v932 = vshll.u32 %v811, 16
      %v934 = vor.u32 %v931, %v932
      %v935 = vsel %vm834, %v927, %v934
      %v936 = vrot.slane %v931, 4
      %v938 = vshrl.u32 %v812, 16
      %v940 = vrot.slane %v938, 7
      %v941 = vshll.u32 %v812, 16
      %v943 = vor.u32 %v940, %v941
      %v944 = vrot.slane %v940, 4
      %v946 = vshrl.u32 %v813, 16
      %v948 = vrot.slane %v946, 7
      %v949 = vshll.u32 %v813, 16
      %v951 = vor.u32 %v948, %v949
      %v952 = vsel %vm834, %v944, %v951
      %v953 = vrot.slane %v948, 4
      %v955 = vshrl.u32 %v814, 16
      %v957 = vrot.slane %v955, 7
      %v958 = vshll.u32 %v814, 16
      %v960 = vor.u32 %v957, %v958
      %v961 = vrot.slane %v957, 4
      %v963 = vshrl.u32 %v815, 16
      %v965 = vrot.slane %v963, 7
      %v966 = vshll.u32 %v815, 16
      %v968 = vor.u32 %v965, %v966
      %v969 = vsel %vm834, %v961, %v968
      %v970 = vrot.slane %v965, 4
      %v972 = vshrl.u32 %v816, 16
      %v974 = vrot.slane %v972, 7
      %v975 = vshll.u32 %v816, 16
      %v977 = vor.u32 %v974, %v975
      %v978 = vrot.slane %v974, 4
      %v980 = vshrl.u32 %v817, 16
      %v982 = vrot.slane %v980, 7
      %v983 = vshll.u32 %v817, 16
      %v985 = vor.u32 %v982, %v983
      %v986 = vsel %vm834, %v978, %v985
      %v987 = vrot.slane %v982, 4
      %v989 = vshrl.u32 %v818, 16
      %v991 = vrot.slane %v989, 7
      %v992 = vshll.u32 %v818, 16
      %v994 = vor.u32 %v991, %v992
      %v995 = vrot.slane %v991, 4
      %v997 = vshrl.u32 %v819, 16
      %v999 = vrot.slane %v997, 7
      %v1000 = vshll.u32 %v819, 16
      %v1002 = vor.u32 %v999, %v1000
      %v1003 = vsel %vm834, %v995, %v1002
      %v1004 = vrot.slane %v999, 4
      %v1006 = vshrl.u32 %v820, 16
      %v1008 = vrot.slane %v1006, 7
      %v1009 = vshll.u32 %v820, 16
      %v1011 = vor.u32 %v1008, %v1009
      %v1012 = vrot.slane %v1008, 4
      %v1014 = vshrl.u32 %v821, 16
      %v1016 = vrot.slane %v1014, 7
      %v1017 = vshll.u32 %v821, 16
      %v1019 = vor.u32 %v1016, %v1017
      %v1020 = vsel %vm834, %v1012, %v1019
      %v1021 = vrot.slane %v1016, 4
      %v1023 = vshrl.u32 %v822, 16
      %v1025 = vrot.slane %v1023, 7
      %v1026 = vshll.u32 %v822, 16
      %v1028 = vor.u32 %v1025, %v1026
      %v1029 = vrot.slane %v1025, 4
      %v1031 = vshrl.u32 %v823, 16
      %v1033 = vrot.slane %v1031, 7
      %v1034 = vshll.u32 %v823, 16
      %v1036 = vor.u32 %v1033, %v1034
      %v1037 = vsel %vm834, %v1029, %v1036
      %v1038 = vrot.slane %v1033, 4
      %v1040 = vshrl.u32 %v824, 16
      %v1042 = vrot.slane %v1040, 7
      %v1043 = vshll.u32 %v824, 16
      %v1045 = vor.u32 %v1042, %v1043
      %v1046 = vrot.slane %v1042, 4
      %v1048 = vshrl.u32 %v825, 16
      %v1050 = vrot.slane %v1048, 7
      %v1051 = vshll.u32 %v825, 16
      %v1053 = vor.u32 %v1050, %v1051
      %v1054 = vsel %vm834, %v1046, %v1053
      %v1055 = vrot.slane %v1050, 4
      %v1057 = vshrl.u32 %v826, 16
      %v1059 = vrot.slane %v1057, 7
      %v1060 = vshll.u32 %v826, 16
      %v1062 = vor.u32 %v1059, %v1060
      %v1063 = vrot.slane %v1059, 4
      %v1065 = vshrl.u32 %v827, 16
      %v1067 = vrot.slane %v1065, 7
      %v1068 = vshll.u32 %v827, 16
      %v1070 = vor.u32 %v1067, %v1068
      %v1071 = vsel %vm834, %v1063, %v1070
      %v1072 = vrot.slane %v1067, 4
      %v1074 = vshrl.u32 %v828, 16
      %v1076 = vrot.slane %v1074, 7
      %v1077 = vshll.u32 %v828, 16
      %v1079 = vor.u32 %v1076, %v1077
      %v1080 = vrot.slane %v1076, 4
      %v1082 = vshrl.u32 %v829, 16
      %v1084 = vrot.slane %v1082, 7
      %v1085 = vshll.u32 %v829, 16
      %v1087 = vor.u32 %v1084, %v1085
      %v1088 = vsel %vm834, %v1080, %v1087
      %v1089 = vrot.slane %v1084, 4
      %v1091 = vshrl.u32 %v830, 16
      %v1093 = vrot.slane %v1091, 7
      %v1094 = vshll.u32 %v830, 16
      %v1096 = vor.u32 %v1093, %v1094
      %v1097 = vrot.slane %v1093, 4
      %v1099 = vshrl.u32 %v831, 16
      %v1101 = vrot.slane %v1099, 7
      %v1102 = vshll.u32 %v831, 16
      %v1104 = vor.u32 %v1101, %v1102
      %v1105 = vsel %vm834, %v1097, %v1104
      %v1106 = vrot.slane %v1101, 4
      %s1155 = scalar_lea.vmem [#allocation2], 12
      %vm1156 = vcmask 1043456
      %vm1157 = vsmask.f32 7938
      %vm1158 = vmand %vm1156, %vm1157
      %v1159 = vld [vmem:[%s1155] sm:$0xf]
      %v1160 = vsel %vm1158, %v841, %v1159
      %1161 = vst [vmem:[%s1155] sm:$0xf] %v1160
      %1162 = vst [vmem:[%s1155 + $0x4] sm:$0xf] %v850
      %vm1163 = vcmask 1040384
      %vm1164 = vmand %vm1163, %vm832
      %v1165 = vld [vmem:[%s1155 + $0x8] sm:$0x1]
      %v1166 = vsel %vm1164, %v851, %v1165
      %1167 = vst [vmem:[%s1155 + $0x8] sm:$0x1] %v1166
      %v1168 = vld [vmem:[%s1155 + $0xc] sm:$0xf]
      %v1169 = vsel %vm1158, %v858, %v1168
      %1170 = vst [vmem:[%s1155 + $0xc] sm:$0xf] %v1169
      %1171 = vst [vmem:[%s1155 + $0x10] sm:$0xf] %v867
      %v1172 = vld [vmem:[%s1155 + $0x14] sm:$0x1]
      %v1173 = vsel %vm1164, %v868, %v1172
      %1174 = vst [vmem:[%s1155 + $0x14] sm:$0x1] %v1173
      %v1175 = vld [vmem:[%s1155 + $0x18] sm:$0xf]
      %v1176 = vsel %vm1158, %v875, %v1175
      %1177 = vst [vmem:[%s1155 + $0x18] sm:$0xf] %v1176
      %1178 = vst [vmem:[%s1155 + $0x1c] sm:$0xf] %v884
      %v1179 = vld [vmem:[%s1155 + $0x20] sm:$0x1]
      %v1180 = vsel %vm1164, %v885, %v1179
      %1181 = vst [vmem:[%s1155 + $0x20] sm:$0x1] %v1180
      %v1182 = vld [vmem:[%s1155 + $0x24] sm:$0xf]
      %v1183 = vsel %vm1158, %v892, %v1182
      %1184 = vst [vmem:[%s1155 + $0x24] sm:$0xf] %v1183
      %1185 = vst [vmem:[%s1155 + $0x28] sm:$0xf] %v901
      %v1186 = vld [vmem:[%s1155 + $0x2c] sm:$0x1]
      %v1187 = vsel %vm1164, %v902, %v1186
      %1188 = vst [vmem:[%s1155 + $0x2c] sm:$0x1] %v1187
      %v1189 = vld [vmem:[%s1155 + $0x30] sm:$0xf]
      %v1190 = vsel %vm1158, %v909, %v1189
      %1191 = vst [vmem:[%s1155 + $0x30] sm:$0xf] %v1190
      %1192 = vst [vmem:[%s1155 + $0x34] sm:$0xf] %v918
      %v1193 = vld [vmem:[%s1155 + $0x38] sm:$0x1]
      %v1194 = vsel %vm1164, %v919, %v1193
      %1195 = vst [vmem:[%s1155 + $0x38] sm:$0x1] %v1194
      %v1196 = vld [vmem:[%s1155 + $0x3c] sm:$0xf]
      %v1197 = vsel %vm1158, %v926, %v1196
      %1198 = vst [vmem:[%s1155 + $0x3c] sm:$0xf] %v1197
      %1199 = vst [vmem:[%s1155 + $0x40] sm:$0xf] %v935
      %v1200 = vld [vmem:[%s1155 + $0x44] sm:$0x1]
      %v1201 = vsel %vm1164, %v936, %v1200
      %1202 = vst [vmem:[%s1155 + $0x44] sm:$0x1] %v1201
      %v1203 = vld [vmem:[%s1155 + $0x48] sm:$0xf]
      %v1204 = vsel %vm1158, %v943, %v1203
      %1205 = vst [vmem:[%s1155 + $0x48] sm:$0xf] %v1204
      %1206 = vst [vmem:[%s1155 + $0x4c] sm:$0xf] %v952
      %v1207 = vld [vmem:[%s1155 + $0x50] sm:$0x1]
      %v1208 = vsel %vm1164, %v953, %v1207
      %1209 = vst [vmem:[%s1155 + $0x50] sm:$0x1] %v1208
      %v1210 = vld [vmem:[%s1155 + $0x54] sm:$0xf]
      %v1211 = vsel %vm1158, %v960, %v1210
      %1212 = vst [vmem:[%s1155 + $0x54] sm:$0xf] %v1211
      %1213 = vst [vmem:[%s1155 + $0x58] sm:$0xf] %v969
      %v1214 = vld [vmem:[%s1155 + $0x5c] sm:$0x1]
      %v1215 = vsel %vm1164, %v970, %v1214
      %1216 = vst [vmem:[%s1155 + $0x5c] sm:$0x1] %v1215
      %v1217 = vld [vmem:[%s1155 + $0x60] sm:$0xf]
      %v1218 = vsel %vm1158, %v977, %v1217
      %1219 = vst [vmem:[%s1155 + $0x60] sm:$0xf] %v1218
      %1220 = vst [vmem:[%s1155 + $0x64] sm:$0xf] %v986
      %v1221 = vld [vmem:[%s1155 + $0x68] sm:$0x1]
      %v1222 = vsel %vm1164, %v987, %v1221
      %1223 = vst [vmem:[%s1155 + $0x68] sm:$0x1] %v1222
      %v1224 = vld [vmem:[%s1155 + $0x6c] sm:$0xf]
      %v1225 = vsel %vm1158, %v994, %v1224
      %1226 = vst [vmem:[%s1155 + $0x6c] sm:$0xf] %v1225
      %1227 = vst [vmem:[%s1155 + $0x70] sm:$0xf] %v1003
      %v1228 = vld [vmem:[%s1155 + $0x74] sm:$0x1]
      %v1229 = vsel %vm1164, %v1004, %v1228
      %1230 = vst [vmem:[%s1155 + $0x74] sm:$0x1] %v1229
      %v1231 = vld [vmem:[%s1155 + $0x78] sm:$0xf]
      %v1232 = vsel %vm1158, %v1011, %v1231
      %1233 = vst [vmem:[%s1155 + $0x78] sm:$0xf] %v1232
      %1234 = vst [vmem:[%s1155 + $0x7c] sm:$0xf] %v1020
      %v1235 = vld [vmem:[%s1155 + $0x80] sm:$0x1]
      %v1236 = vsel %vm1164, %v1021, %v1235
      %1237 = vst [vmem:[%s1155 + $0x80] sm:$0x1] %v1236
      %v1238 = vld [vmem:[%s1155 + $0x84] sm:$0xf]
      %v1239 = vsel %vm1158, %v1028, %v1238
      %1240 = vst [vmem:[%s1155 + $0x84] sm:$0xf] %v1239
      %1241 = vst [vmem:[%s1155 + $0x88] sm:$0xf] %v1037
      %v1242 = vld [vmem:[%s1155 + $0x8c] sm:$0x1]
      %v1243 = vsel %vm1164, %v1038, %v1242
      %1244 = vst [vmem:[%s1155 + $0x8c] sm:$0x1] %v1243
      %v1245 = vld [vmem:[%s1155 + $0x90] sm:$0xf]
      %v1246 = vsel %vm1158, %v1045, %v1245
      %1247 = vst [vmem:[%s1155 + $0x90] sm:$0xf] %v1246
      %1248 = vst [vmem:[%s1155 + $0x94] sm:$0xf] %v1054
      %v1249 = vld [vmem:[%s1155 + $0x98] sm:$0x1]
      %v1250 = vsel %vm1164, %v1055, %v1249
      %1251 = vst [vmem:[%s1155 + $0x98] sm:$0x1] %v1250
      %v1252 = vld [vmem:[%s1155 + $0x9c] sm:$0xf]
      %v1253 = vsel %vm1158, %v1062, %v1252
      %1254 = vst [vmem:[%s1155 + $0x9c] sm:$0xf] %v1253
      %1255 = vst [vmem:[%s1155 + $0xa0] sm:$0xf] %v1071
      %v1256 = vld [vmem:[%s1155 + $0xa4] sm:$0x1]
      %v1257 = vsel %vm1164, %v1072, %v1256
      %1258 = vst [vmem:[%s1155 + $0xa4] sm:$0x1] %v1257
      %v1259 = vld [vmem:[%s1155 + $0xa8] sm:$0xf]
      %v1260 = vsel %vm1158, %v1079, %v1259
      %1261 = vst [vmem:[%s1155 + $0xa8] sm:$0xf] %v1260
      %1262 = vst [vmem:[%s1155 + $0xac] sm:$0xf] %v1088
      %v1263 = vld [vmem:[%s1155 + $0xb0] sm:$0x1]
      %v1264 = vsel %vm1164, %v1089, %v1263
      %1265 = vst [vmem:[%s1155 + $0xb0] sm:$0x1] %v1264
      %v1266 = vld [vmem:[%s1155 + $0xb4] sm:$0xf]
      %v1267 = vsel %vm1158, %v1096, %v1266
      %1268 = vst [vmem:[%s1155 + $0xb4] sm:$0xf] %v1267
      %1269 = vst [vmem:[%s1155 + $0xb8] sm:$0xf] %v1105
      %v1270 = vld [vmem:[%s1155 + $0xbc] sm:$0x1]
      %v1271 = vsel %vm1164, %v1106, %v1270
      %1272 = vst [vmem:[%s1155 + $0xbc] sm:$0x1] %v1271
      %v1273 = vld [vmem:[#allocation2] sm:$0xf]
      %v1274 = vld [vmem:[#allocation2 + $0x4] sm:$0xf]
      %v1275 = vld [vmem:[#allocation2 + $0xc] sm:$0xf]
      %v1276 = vld [vmem:[#allocation2 + $0x10] sm:$0xf]
      %v1277 = vld [vmem:[#allocation2 + $0x18] sm:$0xf]
      %v1278 = vld [vmem:[#allocation2 + $0x1c] sm:$0xf]
      %v1279 = vld [vmem:[#allocation2 + $0x24] sm:$0xf]
      %v1280 = vld [vmem:[#allocation2 + $0x28] sm:$0xf]
      %v1281 = vld [vmem:[#allocation2 + $0x30] sm:$0xf]
      %v1282 = vld [vmem:[#allocation2 + $0x34] sm:$0xf]
      %v1283 = vld [vmem:[#allocation2 + $0x3c] sm:$0xf]
      %v1284 = vld [vmem:[#allocation2 + $0x40] sm:$0xf]
      %v1285 = vld [vmem:[#allocation2 + $0x48] sm:$0xf]
      %v1286 = vld [vmem:[#allocation2 + $0x4c] sm:$0xf]
      %v1287 = vld [vmem:[#allocation2 + $0x54] sm:$0xf]
      %v1288 = vld [vmem:[#allocation2 + $0x58] sm:$0xf]
      %v1289 = vld [vmem:[#allocation2 + $0x60] sm:$0xf]
      %v1290 = vld [vmem:[#allocation2 + $0x64] sm:$0xf]
      %v1291 = vld [vmem:[#allocation2 + $0x6c] sm:$0xf]
      %v1292 = vld [vmem:[#allocation2 + $0x70] sm:$0xf]
      %v1293 = vld [vmem:[#allocation2 + $0x78] sm:$0xf]
      %v1294 = vld [vmem:[#allocation2 + $0x7c] sm:$0xf]
      %v1295 = vld [vmem:[#allocation2 + $0x84] sm:$0xf]
      %v1296 = vld [vmem:[#allocation2 + $0x88] sm:$0xf]
      %v1297 = vld [vmem:[#allocation2 + $0x90] sm:$0xf]
      %v1298 = vld [vmem:[#allocation2 + $0x94] sm:$0xf]
      %v1299 = vld [vmem:[#allocation2 + $0x9c] sm:$0xf]
      %v1300 = vld [vmem:[#allocation2 + $0xa0] sm:$0xf]
      %v1301 = vld [vmem:[#allocation2 + $0xa8] sm:$0xf]
      %v1302 = vld [vmem:[#allocation2 + $0xac] sm:$0xf]
      %v1303 = vld [vmem:[#allocation2 + $0xb4] sm:$0xf]
      %v1304 = vld [vmem:[#allocation2 + $0xb8] sm:$0xf]
      %v1305 = vld [vmem:[%s2] sm:$0xf]
      %v1306 = vld [vmem:[%s2 + $0x4] sm:$0xf]
      %v1307 = vld [vmem:[%s2 + $0x8] sm:$0xf]
      %v1308 = vld [vmem:[%s2 + $0xc] sm:$0xf]
      %v1309 = vld [vmem:[%s2 + $0x10] sm:$0xf]
      %v1310 = vld [vmem:[%s2 + $0x14] sm:$0xf]
      %v1311 = vld [vmem:[%s2 + $0x18] sm:$0xf]
      %v1312 = vld [vmem:[%s2 + $0x1c] sm:$0xf]
      %v1313 = vld [vmem:[%s2 + $0x20] sm:$0xf]
      %v1314 = vld [vmem:[%s2 + $0x24] sm:$0xf]
      %v1315 = vld [vmem:[%s2 + $0x28] sm:$0xf]
      %v1316 = vld [vmem:[%s2 + $0x2c] sm:$0xf]
      %v1317 = vld [vmem:[%s2 + $0x30] sm:$0xf]
      %v1318 = vld [vmem:[%s2 + $0x34] sm:$0xf]
      %v1319 = vld [vmem:[%s2 + $0x38] sm:$0xf]
      %v1320 = vld [vmem:[%s2 + $0x3c] sm:$0xf]
      %v1321 = vld [vmem:[#allocation2 + $0x8] sm:$0x1]
      %v1322 = vld [vmem:[#allocation2 + $0x14] sm:$0x1]
      %v1323 = vld [vmem:[#allocation2 + $0x20] sm:$0x1]
      %v1324 = vld [vmem:[#allocation2 + $0x2c] sm:$0x1]
      %v1325 = vld [vmem:[#allocation2 + $0x38] sm:$0x1]
      %v1326 = vld [vmem:[#allocation2 + $0x44] sm:$0x1]
      %v1327 = vld [vmem:[#allocation2 + $0x50] sm:$0x1]
      %v1328 = vld [vmem:[#allocation2 + $0x5c] sm:$0x1]
      %v1329 = vld [vmem:[#allocation2 + $0x68] sm:$0x1]
      %v1330 = vld [vmem:[#allocation2 + $0x74] sm:$0x1]
      %v1331 = vld [vmem:[#allocation2 + $0x80] sm:$0x1]
      %v1332 = vld [vmem:[#allocation2 + $0x8c] sm:$0x1]
      %v1333 = vld [vmem:[#allocation2 + $0x98] sm:$0x1]
      %v1334 = vld [vmem:[#allocation2 + $0xa4] sm:$0x1]
      %v1335 = vld [vmem:[#allocation2 + $0xb0] sm:$0x1]
      %v1336 = vld [vmem:[#allocation2 + $0xbc] sm:$0x1]
      %vm1337 = vsmask.f32 3328
      %vm1338 = vsmask.f32 7440
      %vm1339 = vmor %vm1337, %vm1338
      %v1341 = vshrl.u32 %v1273, 16
      %v1343 = vrot.slane %v1341, 4
      %v1344 = vshll.u32 %v1273, 16
      %v1346 = vrot.slane %v1344, 5
      %v1347 = vor.u32 %v1343, %v1346
      %v1348 = vrot.slane %v1347, 4
      %v1350 = vshll.u32 %v1274, 16
      %v1352 = vrot.slane %v1350, 5
      %v1353 = vsel %vm1339, %v1348, %v1352
      %v1354 = vshrl.u32 %v1274, 16
      %v1356 = vrot.slane %v1354, 4
      %v1357 = vor.u32 %v1356, %v1352
      %v1358 = vrot.slane %v1357, 4
      %v1360 = vshll.u32 %v1321, 16
      %v1362 = vrot.slane %v1360, 5
      %v1363 = vsel %vm1339, %v1358, %v1362
      %v1365 = vshrl.u32 %v1275, 16
      %v1367 = vrot.slane %v1365, 4
      %v1368 = vshll.u32 %v1275, 16
      %v1370 = vrot.slane %v1368, 5
      %v1371 = vor.u32 %v1367, %v1370
      %v1372 = vrot.slane %v1371, 4
      %v1374 = vshll.u32 %v1276, 16
      %v1376 = vrot.slane %v1374, 5
      %v1377 = vsel %vm1339, %v1372, %v1376
      %v1378 = vshrl.u32 %v1276, 16
      %v1380 = vrot.slane %v1378, 4
      %v1381 = vor.u32 %v1380, %v1376
      %v1382 = vrot.slane %v1381, 4
      %v1384 = vshll.u32 %v1322, 16
      %v1386 = vrot.slane %v1384, 5
      %v1387 = vsel %vm1339, %v1382, %v1386
      %v1389 = vshrl.u32 %v1277, 16
      %v1391 = vrot.slane %v1389, 4
      %v1392 = vshll.u32 %v1277, 16
      %v1394 = vrot.slane %v1392, 5
      %v1395 = vor.u32 %v1391, %v1394
      %v1396 = vrot.slane %v1395, 4
      %v1398 = vshll.u32 %v1278, 16
      %v1400 = vrot.slane %v1398, 5
      %v1401 = vsel %vm1339, %v1396, %v1400
      %v1402 = vshrl.u32 %v1278, 16
      %v1404 = vrot.slane %v1402, 4
      %v1405 = vor.u32 %v1404, %v1400
      %v1406 = vrot.slane %v1405, 4
      %v1408 = vshll.u32 %v1323, 16
      %v1410 = vrot.slane %v1408, 5
      %v1411 = vsel %vm1339, %v1406, %v1410
      %v1413 = vshrl.u32 %v1279, 16
      %v1415 = vrot.slane %v1413, 4
      %v1416 = vshll.u32 %v1279, 16
      %v1418 = vrot.slane %v1416, 5
      %v1419 = vor.u32 %v1415, %v1418
      %v1420 = vrot.slane %v1419, 4
      %v1422 = vshll.u32 %v1280, 16
      %v1424 = vrot.slane %v1422, 5
      %v1425 = vsel %vm1339, %v1420, %v1424
      %v1426 = vshrl.u32 %v1280, 16
      %v1428 = vrot.slane %v1426, 4
      %v1429 = vor.u32 %v1428, %v1424
      %v1430 = vrot.slane %v1429, 4
      %v1432 = vshll.u32 %v1324, 16
      %v1434 = vrot.slane %v1432, 5
      %v1435 = vsel %vm1339, %v1430, %v1434
      %v1437 = vshrl.u32 %v1281, 16
      %v1439 = vrot.slane %v1437, 4
      %v1440 = vshll.u32 %v1281, 16
      %v1442 = vrot.slane %v1440, 5
      %v1443 = vor.u32 %v1439, %v1442
      %v1444 = vrot.slane %v1443, 4
      %v1446 = vshll.u32 %v1282, 16
      %v1448 = vrot.slane %v1446, 5
      %v1449 = vsel %vm1339, %v1444, %v1448
      %v1450 = vshrl.u32 %v1282, 16
      %v1452 = vrot.slane %v1450, 4
      %v1453 = vor.u32 %v1452, %v1448
      %v1454 = vrot.slane %v1453, 4
      %v1456 = vshll.u32 %v1325, 16
      %v1458 = vrot.slane %v1456, 5
      %v1459 = vsel %vm1339, %v1454, %v1458
      %v1461 = vshrl.u32 %v1283, 16
      %v1463 = vrot.slane %v1461, 4
      %v1464 = vshll.u32 %v1283, 16
      %v1466 = vrot.slane %v1464, 5
      %v1467 = vor.u32 %v1463, %v1466
      %v1468 = vrot.slane %v1467, 4
      %v1470 = vshll.u32 %v1284, 16
      %v1472 = vrot.slane %v1470, 5
      %v1473 = vsel %vm1339, %v1468, %v1472
      %v1474 = vshrl.u32 %v1284, 16
      %v1476 = vrot.slane %v1474, 4
      %v1477 = vor.u32 %v1476, %v1472
      %v1478 = vrot.slane %v1477, 4
      %v1480 = vshll.u32 %v1326, 16
      %v1482 = vrot.slane %v1480, 5
      %v1483 = vsel %vm1339, %v1478, %v1482
      %v1485 = vshrl.u32 %v1285, 16
      %v1487 = vrot.slane %v1485, 4
      %v1488 = vshll.u32 %v1285, 16
      %v1490 = vrot.slane %v1488, 5
      %v1491 = vor.u32 %v1487, %v1490
      %v1492 = vrot.slane %v1491, 4
      %v1494 = vshll.u32 %v1286, 16
      %v1496 = vrot.slane %v1494, 5
      %v1497 = vsel %vm1339, %v1492, %v1496
      %v1498 = vshrl.u32 %v1286, 16
      %v1500 = vrot.slane %v1498, 4
      %v1501 = vor.u32 %v1500, %v1496
      %v1502 = vrot.slane %v1501, 4
      %v1504 = vshll.u32 %v1327, 16
      %v1506 = vrot.slane %v1504, 5
      %v1507 = vsel %vm1339, %v1502, %v1506
      %v1509 = vshrl.u32 %v1287, 16
      %v1511 = vrot.slane %v1509, 4
      %v1512 = vshll.u32 %v1287, 16
      %v1514 = vrot.slane %v1512, 5
      %v1515 = vor.u32 %v1511, %v1514
      %v1516 = vrot.slane %v1515, 4
      %v1518 = vshll.u32 %v1288, 16
      %v1520 = vrot.slane %v1518, 5
      %v1521 = vsel %vm1339, %v1516, %v1520
      %v1522 = vshrl.u32 %v1288, 16
      %v1524 = vrot.slane %v1522, 4
      %v1525 = vor.u32 %v1524, %v1520
      %v1526 = vrot.slane %v1525, 4
      %v1528 = vshll.u32 %v1328, 16
      %v1530 = vrot.slane %v1528, 5
      %v1531 = vsel %vm1339, %v1526, %v1530
      %v1533 = vshrl.u32 %v1289, 16
      %v1535 = vrot.slane %v1533, 4
      %v1536 = vshll.u32 %v1289, 16
      %v1538 = vrot.slane %v1536, 5
      %v1539 = vor.u32 %v1535, %v1538
      %v1540 = vrot.slane %v1539, 4
      %v1542 = vshll.u32 %v1290, 16
      %v1544 = vrot.slane %v1542, 5
      %v1545 = vsel %vm1339, %v1540, %v1544
      %v1546 = vshrl.u32 %v1290, 16
      %v1548 = vrot.slane %v1546, 4
      %v1549 = vor.u32 %v1548, %v1544
      %v1550 = vrot.slane %v1549, 4
      %v1552 = vshll.u32 %v1329, 16
      %v1554 = vrot.slane %v1552, 5
      %v1555 = vsel %vm1339, %v1550, %v1554
      %v1557 = vshrl.u32 %v1291, 16
      %v1559 = vrot.slane %v1557, 4
      %v1560 = vshll.u32 %v1291, 16
      %v1562 = vrot.slane %v1560, 5
      %v1563 = vor.u32 %v1559, %v1562
      %v1564 = vrot.slane %v1563, 4
      %v1566 = vshll.u32 %v1292, 16
      %v1568 = vrot.slane %v1566, 5
      %v1569 = vsel %vm1339, %v1564, %v1568
      %v1570 = vshrl.u32 %v1292, 16
      %v1572 = vrot.slane %v1570, 4
      %v1573 = vor.u32 %v1572, %v1568
      %v1574 = vrot.slane %v1573, 4
      %v1576 = vshll.u32 %v1330, 16
      %v1578 = vrot.slane %v1576, 5
      %v1579 = vsel %vm1339, %v1574, %v1578
      %v1581 = vshrl.u32 %v1293, 16
      %v1583 = vrot.slane %v1581, 4
      %v1584 = vshll.u32 %v1293, 16
      %v1586 = vrot.slane %v1584, 5
      %v1587 = vor.u32 %v1583, %v1586
      %v1588 = vrot.slane %v1587, 4
      %v1590 = vshll.u32 %v1294, 16
      %v1592 = vrot.slane %v1590, 5
      %v1593 = vsel %vm1339, %v1588, %v1592
      %v1594 = vshrl.u32 %v1294, 16
      %v1596 = vrot.slane %v1594, 4
      %v1597 = vor.u32 %v1596, %v1592
      %v1598 = vrot.slane %v1597, 4
      %v1600 = vshll.u32 %v1331, 16
      %v1602 = vrot.slane %v1600, 5
      %v1603 = vsel %vm1339, %v1598, %v1602
      %v1605 = vshrl.u32 %v1295, 16
      %v1607 = vrot.slane %v1605, 4
      %v1608 = vshll.u32 %v1295, 16
      %v1610 = vrot.slane %v1608, 5
      %v1611 = vor.u32 %v1607, %v1610
      %v1612 = vrot.slane %v1611, 4
      %v1614 = vshll.u32 %v1296, 16
      %v1616 = vrot.slane %v1614, 5
      %v1617 = vsel %vm1339, %v1612, %v1616
      %v1618 = vshrl.u32 %v1296, 16
      %v1620 = vrot.slane %v1618, 4
      %v1621 = vor.u32 %v1620, %v1616
      %v1622 = vrot.slane %v1621, 4
      %v1624 = vshll.u32 %v1332, 16
      %v1626 = vrot.slane %v1624, 5
      %v1627 = vsel %vm1339, %v1622, %v1626
      %v1629 = vshrl.u32 %v1297, 16
      %v1631 = vrot.slane %v1629, 4
      %v1632 = vshll.u32 %v1297, 16
      %v1634 = vrot.slane %v1632, 5
      %v1635 = vor.u32 %v1631, %v1634
      %v1636 = vrot.slane %v1635, 4
      %v1638 = vshll.u32 %v1298, 16
      %v1640 = vrot.slane %v1638, 5
      %v1641 = vsel %vm1339, %v1636, %v1640
      %v1642 = vshrl.u32 %v1298, 16
      %v1644 = vrot.slane %v1642, 4
      %v1645 = vor.u32 %v1644, %v1640
      %v1646 = vrot.slane %v1645, 4
      %v1648 = vshll.u32 %v1333, 16
      %v1650 = vrot.slane %v1648, 5
      %v1651 = vsel %vm1339, %v1646, %v1650
      %v1653 = vshrl.u32 %v1299, 16
      %v1655 = vrot.slane %v1653, 4
      %v1656 = vshll.u32 %v1299, 16
      %v1658 = vrot.slane %v1656, 5
      %v1659 = vor.u32 %v1655, %v1658
      %v1660 = vrot.slane %v1659, 4
      %v1662 = vshll.u32 %v1300, 16
      %v1664 = vrot.slane %v1662, 5
      %v1665 = vsel %vm1339, %v1660, %v1664
      %v1666 = vshrl.u32 %v1300, 16
      %v1668 = vrot.slane %v1666, 4
      %v1669 = vor.u32 %v1668, %v1664
      %v1670 = vrot.slane %v1669, 4
      %v1672 = vshll.u32 %v1334, 16
      %v1674 = vrot.slane %v1672, 5
      %v1675 = vsel %vm1339, %v1670, %v1674
      %v1677 = vshrl.u32 %v1301, 16
      %v1679 = vrot.slane %v1677, 4
      %v1680 = vshll.u32 %v1301, 16
      %v1682 = vrot.slane %v1680, 5
      %v1683 = vor.u32 %v1679, %v1682
      %v1684 = vrot.slane %v1683, 4
      %v1686 = vshll.u32 %v1302, 16
      %v1688 = vrot.slane %v1686, 5
      %v1689 = vsel %vm1339, %v1684, %v1688
      %v1690 = vshrl.u32 %v1302, 16
      %v1692 = vrot.slane %v1690, 4
      %v1693 = vor.u32 %v1692, %v1688
      %v1694 = vrot.slane %v1693, 4
      %v1696 = vshll.u32 %v1335, 16
      %v1698 = vrot.slane %v1696, 5
      %v1699 = vsel %vm1339, %v1694, %v1698
      %v1701 = vshrl.u32 %v1303, 16
      %v1703 = vrot.slane %v1701, 4
      %v1704 = vshll.u32 %v1303, 16
      %v1706 = vrot.slane %v1704, 5
      %v1707 = vor.u32 %v1703, %v1706
      %v1708 = vrot.slane %v1707, 4
      %v1710 = vshll.u32 %v1304, 16
      %v1712 = vrot.slane %v1710, 5
      %v1713 = vsel %vm1339, %v1708, %v1712
      %v1714 = vshrl.u32 %v1304, 16
      %v1716 = vrot.slane %v1714, 4
      %v1717 = vor.u32 %v1716, %v1712
      %v1718 = vrot.slane %v1717, 4
      %v1720 = vshll.u32 %v1336, 16
      %v1722 = vrot.slane %v1720, 5
      %v1723 = vsel %vm1339, %v1718, %v1722
      %s1724 = scalar_lea.vmem %s2, 64
      %v1725 = vld [vmem:[%s1724] sm:$0xf]
      %v1726 = vld [vmem:[%s1724 + $0x4] sm:$0xf]
      %v1727 = vld [vmem:[%s1724 + $0x8] sm:$0xf]
      %v1728 = vld [vmem:[%s1724 + $0xc] sm:$0xf]
      %v1729 = vld [vmem:[%s1724 + $0x10] sm:$0xf]
      %v1730 = vld [vmem:[%s1724 + $0x14] sm:$0xf]
      %v1731 = vld [vmem:[%s1724 + $0x18] sm:$0xf]
      %v1732 = vld [vmem:[%s1724 + $0x1c] sm:$0xf]
      %v1733 = vld [vmem:[%s1724 + $0x20] sm:$0xf]
      %v1734 = vld [vmem:[%s1724 + $0x24] sm:$0xf]
      %v1735 = vld [vmem:[%s1724 + $0x28] sm:$0xf]
      %v1736 = vld [vmem:[%s1724 + $0x2c] sm:$0xf]
      %v1737 = vld [vmem:[%s1724 + $0x30] sm:$0xf]
      %v1738 = vld [vmem:[%s1724 + $0x34] sm:$0xf]
      %v1739 = vld [vmem:[%s1724 + $0x38] sm:$0xf]
      %v1740 = vld [vmem:[%s1724 + $0x3c] sm:$0xf]
      %v1741 = vunpack.c.l.b16 %v1353
      %v1742 = vunpack.c.l.b16 %v1363
      %v1743 = vunpack.c.l.b16 %v1377
      %v1744 = vunpack.c.l.b16 %v1387
      %v1745 = vunpack.c.l.b16 %v1401
      %v1746 = vunpack.c.l.b16 %v1411
      %v1747 = vunpack.c.l.b16 %v1425
      %v1748 = vunpack.c.l.b16 %v1435
      %v1749 = vunpack.c.l.b16 %v1449
      %v1750 = vunpack.c.l.b16 %v1459
      %v1751 = vunpack.c.l.b16 %v1473
      %v1752 = vunpack.c.l.b16 %v1483
      %v1753 = vunpack.c.l.b16 %v1497
      %v1754 = vunpack.c.l.b16 %v1507
      %v1755 = vunpack.c.l.b16 %v1521
      %v1756 = vunpack.c.l.b16 %v1531
      %v1757 = vunpack.c.l.b16 %v1545
      %v1758 = vunpack.c.l.b16 %v1555
      %v1759 = vunpack.c.l.b16 %v1569
      %v1760 = vunpack.c.l.b16 %v1579
      %v1761 = vunpack.c.l.b16 %v1593
      %v1762 = vunpack.c.l.b16 %v1603
      %v1763 = vunpack.c.l.b16 %v1617
      %v1764 = vunpack.c.l.b16 %v1627
      %v1765 = vunpack.c.l.b16 %v1641
      %v1766 = vunpack.c.l.b16 %v1651
      %v1767 = vunpack.c.l.b16 %v1665
      %v1768 = vunpack.c.l.b16 %v1675
      %v1769 = vunpack.c.l.b16 %v1689
      %v1770 = vunpack.c.l.b16 %v1699
      %v1771 = vunpack.c.l.b16 %v1713
      %v1772 = vunpack.c.l.b16 %v1723
      %v1773 = vpack.c.b16 %v1742, %v1741
      %v1774 = vpack.c.b16 %v1744, %v1743
      %v1775 = vpack.c.b16 %v1746, %v1745
      %v1776 = vpack.c.b16 %v1748, %v1747
      %v1777 = vpack.c.b16 %v1750, %v1749
      %v1778 = vpack.c.b16 %v1752, %v1751
      %v1779 = vpack.c.b16 %v1754, %v1753
      %v1780 = vpack.c.b16 %v1756, %v1755
      %v1781 = vpack.c.b16 %v1758, %v1757
      %v1782 = vpack.c.b16 %v1760, %v1759
      %v1783 = vpack.c.b16 %v1762, %v1761
      %v1784 = vpack.c.b16 %v1764, %v1763
      %v1785 = vpack.c.b16 %v1766, %v1765
      %v1786 = vpack.c.b16 %v1768, %v1767
      %v1787 = vpack.c.b16 %v1770, %v1769
      %v1788 = vpack.c.b16 %v1772, %v1771
      %v1821 = vunpack.c.l.b16 %v1725
      %v1822 = vunpack.c.l.b16 %v1726
      %v1823 = vunpack.c.l.b16 %v1727
      %v1824 = vunpack.c.l.b16 %v1728
      %v1825 = vunpack.c.l.b16 %v1729
      %v1826 = vunpack.c.l.b16 %v1730
      %v1827 = vunpack.c.l.b16 %v1731
      %v1828 = vunpack.c.l.b16 %v1732
      %v1829 = vunpack.c.l.b16 %v1733
      %v1830 = vunpack.c.l.b16 %v1734
      %v1831 = vunpack.c.l.b16 %v1735
      %v1832 = vunpack.c.l.b16 %v1736
      %v1833 = vunpack.c.l.b16 %v1737
      %v1834 = vunpack.c.l.b16 %v1738
      %v1835 = vunpack.c.l.b16 %v1739
      %v1836 = vunpack.c.l.b16 %v1740
      %v1837 = vpack.c.b16 %v1822, %v1821
      %v1838 = vpack.c.b16 %v1824, %v1823
      %v1839 = vpack.c.b16 %v1826, %v1825
      %v1840 = vpack.c.b16 %v1828, %v1827
      %v1841 = vpack.c.b16 %v1830, %v1829
      %v1842 = vpack.c.b16 %v1832, %v1831
      %v1843 = vpack.c.b16 %v1834, %v1833
      %v1844 = vpack.c.b16 %v1836, %v1835
      %1853 = vmatpush.bf16.msra.mxu0 %v1844
      %1854 = vmatpush.bf16.msra.mxu0 %v1843
      %1855 = vmatpush.bf16.msra.mxu0 %v1842
      %1856 = vmatpush.bf16.msra.mxu0 %v1841
      %1857 = vmatpush.bf16.msra.mxu0 %v1840
      %1858 = vmatpush.bf16.msra.mxu0 %v1839
      %1859 = vmatpush.bf16.msra.mxu0 %v1838
      %1860 = vmatpush.bf16.msra.mxu0 %v1837
      %1861 = vmatmul.bf16.gmra.mxu0 %v1773
      %v1862 = vpop.f32.mrf.mxu0
      %v1863 = vadd.f32 0.0, %v1862
      %v1864 = vpop.f32.mrf.mxu0
      %v1865 = vadd.f32 0.0, %v1864
      %1866 = vmatmul.bf16.gmra.mxu0 %v1774
      %v1867 = vpop.f32.mrf.mxu0
      %v1868 = vadd.f32 0.0, %v1867
      %v1869 = vpop.f32.mrf.mxu0
      %v1870 = vadd.f32 0.0, %v1869
      %1871 = vmatmul.bf16.gmra.mxu0 %v1775
      %v1872 = vpop.f32.mrf.mxu0
      %v1873 = vadd.f32 0.0, %v1872
      %v1874 = vpop.f32.mrf.mxu0
      %v1875 = vadd.f32 0.0, %v1874
      %1876 = vmatmul.bf16.gmra.mxu0 %v1776
      %v1877 = vpop.f32.mrf.mxu0
      %v1878 = vadd.f32 0.0, %v1877
      %v1879 = vpop.f32.mrf.mxu0
      %v1880 = vadd.f32 0.0, %v1879
      %1881 = vmatmul.bf16.gmra.mxu0 %v1777
      %v1882 = vpop.f32.mrf.mxu0
      %v1883 = vadd.f32 0.0, %v1882
      %v1884 = vpop.f32.mrf.mxu0
      %v1885 = vadd.f32 0.0, %v1884
      %1886 = vmatmul.bf16.gmra.mxu0 %v1778
      %v1887 = vpop.f32.mrf.mxu0
      %v1888 = vadd.f32 0.0, %v1887
      %v1889 = vpop.f32.mrf.mxu0
      %v1890 = vadd.f32 0.0, %v1889
      %1891 = vmatmul.bf16.gmra.mxu0 %v1779
      %v1892 = vpop.f32.mrf.mxu0
      %v1893 = vadd.f32 0.0, %v1892
      %v1894 = vpop.f32.mrf.mxu0
      %v1895 = vadd.f32 0.0, %v1894
      %1896 = vmatmul.bf16.gmra.mxu0 %v1780
      %v1897 = vpop.f32.mrf.mxu0
      %v1898 = vadd.f32 0.0, %v1897
      %v1899 = vpop.f32.mrf.mxu0
      %v1900 = vadd.f32 0.0, %v1899
      %1901 = vmatmul.bf16.gmra.mxu0 %v1781
      %v1902 = vpop.f32.mrf.mxu0
      %v1903 = vadd.f32 0.0, %v1902
      %v1904 = vpop.f32.mrf.mxu0
      %v1905 = vadd.f32 0.0, %v1904
      %1906 = vmatmul.bf16.gmra.mxu0 %v1782
      %v1907 = vpop.f32.mrf.mxu0
      %v1908 = vadd.f32 0.0, %v1907
      %v1909 = vpop.f32.mrf.mxu0
      %v1910 = vadd.f32 0.0, %v1909
      %1911 = vmatmul.bf16.gmra.mxu0 %v1783
      %v1912 = vpop.f32.mrf.mxu0
      %v1913 = vadd.f32 0.0, %v1912
      %v1914 = vpop.f32.mrf.mxu0
      %v1915 = vadd.f32 0.0, %v1914
      %1916 = vmatmul.bf16.gmra.mxu0 %v1784
      %v1917 = vpop.f32.mrf.mxu0
      %v1918 = vadd.f32 0.0, %v1917
      %v1919 = vpop.f32.mrf.mxu0
      %v1920 = vadd.f32 0.0, %v1919
      %1921 = vmatmul.bf16.gmra.mxu0 %v1785
      %v1922 = vpop.f32.mrf.mxu0
      %v1923 = vadd.f32 0.0, %v1922
      %v1924 = vpop.f32.mrf.mxu0
      %v1925 = vadd.f32 0.0, %v1924
      %1926 = vmatmul.bf16.gmra.mxu0 %v1786
      %v1927 = vpop.f32.mrf.mxu0
      %v1928 = vadd.f32 0.0, %v1927
      %v1929 = vpop.f32.mrf.mxu0
      %v1930 = vadd.f32 0.0, %v1929
      %1931 = vmatmul.bf16.gmra.mxu0 %v1787
      %v1932 = vpop.f32.mrf.mxu0
      %v1933 = vadd.f32 0.0, %v1932
      %v1934 = vpop.f32.mrf.mxu0
      %v1935 = vadd.f32 0.0, %v1934
      %1936 = vmatmul.bf16.gmra.mxu0 %v1788
      %v1937 = vpop.f32.mrf.mxu0
      %v1938 = vadd.f32 0.0, %v1937
      %v1939 = vpop.f32.mrf.mxu0
      %v1940 = vadd.f32 0.0, %v1939
      %1941 = vdwg.mxu0
      %v1974 = vunpack.c.l.b16 %v1273
      %v1975 = vunpack.c.l.b16 %v1274
      %v1976 = vunpack.c.l.b16 %v1275
      %v1977 = vunpack.c.l.b16 %v1276
      %v1978 = vunpack.c.l.b16 %v1277
      %v1979 = vunpack.c.l.b16 %v1278
      %v1980 = vunpack.c.l.b16 %v1279
      %v1981 = vunpack.c.l.b16 %v1280
      %v1982 = vunpack.c.l.b16 %v1281
      %v1983 = vunpack.c.l.b16 %v1282
      %v1984 = vunpack.c.l.b16 %v1283
      %v1985 = vunpack.c.l.b16 %v1284
      %v1986 = vunpack.c.l.b16 %v1285
      %v1987 = vunpack.c.l.b16 %v1286
      %v1988 = vunpack.c.l.b16 %v1287
      %v1989 = vunpack.c.l.b16 %v1288
      %v1990 = vunpack.c.l.b16 %v1289
      %v1991 = vunpack.c.l.b16 %v1290
      %v1992 = vunpack.c.l.b16 %v1291
      %v1993 = vunpack.c.l.b16 %v1292
      %v1994 = vunpack.c.l.b16 %v1293
      %v1995 = vunpack.c.l.b16 %v1294
      %v1996 = vunpack.c.l.b16 %v1295
      %v1997 = vunpack.c.l.b16 %v1296
      %v1998 = vunpack.c.l.b16 %v1297
      %v1999 = vunpack.c.l.b16 %v1298
      %v2000 = vunpack.c.l.b16 %v1299
      %v2001 = vunpack.c.l.b16 %v1300
      %v2002 = vunpack.c.l.b16 %v1301
      %v2003 = vunpack.c.l.b16 %v1302
      %v2004 = vunpack.c.l.b16 %v1303
      %v2005 = vunpack.c.l.b16 %v1304
      %v2006 = vpack.c.b16 %v1975, %v1974
      %v2007 = vpack.c.b16 %v1977, %v1976
      %v2008 = vpack.c.b16 %v1979, %v1978
      %v2009 = vpack.c.b16 %v1981, %v1980
      %v2010 = vpack.c.b16 %v1983, %v1982
      %v2011 = vpack.c.b16 %v1985, %v1984
      %v2012 = vpack.c.b16 %v1987, %v1986
      %v2013 = vpack.c.b16 %v1989, %v1988
      %v2014 = vpack.c.b16 %v1991, %v1990
      %v2015 = vpack.c.b16 %v1993, %v1992
      %v2016 = vpack.c.b16 %v1995, %v1994
      %v2017 = vpack.c.b16 %v1997, %v1996
      %v2018 = vpack.c.b16 %v1999, %v1998
      %v2019 = vpack.c.b16 %v2001, %v2000
      %v2020 = vpack.c.b16 %v2003, %v2002
      %v2021 = vpack.c.b16 %v2005, %v2004
      %v2054 = vunpack.c.l.b16 %v1305
      %v2055 = vunpack.c.l.b16 %v1306
      %v2056 = vunpack.c.l.b16 %v1307
      %v2057 = vunpack.c.l.b16 %v1308
      %v2058 = vunpack.c.l.b16 %v1309
      %v2059 = vunpack.c.l.b16 %v1310
      %v2060 = vunpack.c.l.b16 %v1311
      %v2061 = vunpack.c.l.b16 %v1312
      %v2062 = vunpack.c.l.b16 %v1313
      %v2063 = vunpack.c.l.b16 %v1314
      %v2064 = vunpack.c.l.b16 %v1315
      %v2065 = vunpack.c.l.b16 %v1316
      %v2066 = vunpack.c.l.b16 %v1317
      %v2067 = vunpack.c.l.b16 %v1318
      %v2068 = vunpack.c.l.b16 %v1319
      %v2069 = vunpack.c.l.b16 %v1320
      %v2070 = vpack.c.b16 %v2055, %v2054
      %v2071 = vpack.c.b16 %v2057, %v2056
      %v2072 = vpack.c.b16 %v2059, %v2058
      %v2073 = vpack.c.b16 %v2061, %v2060
      %v2074 = vpack.c.b16 %v2063, %v2062
      %v2075 = vpack.c.b16 %v2065, %v2064
      %v2076 = vpack.c.b16 %v2067, %v2066
      %v2077 = vpack.c.b16 %v2069, %v2068
      %2086 = vmatpush.bf16.msra.mxu0 %v2077
      %2087 = vmatpush.bf16.msra.mxu0 %v2076
      %2088 = vmatpush.bf16.msra.mxu0 %v2075
      %2089 = vmatpush.bf16.msra.mxu0 %v2074
      %2090 = vmatpush.bf16.msra.mxu0 %v2073
      %2091 = vmatpush.bf16.msra.mxu0 %v2072
      %2092 = vmatpush.bf16.msra.mxu0 %v2071
      %2093 = vmatpush.bf16.msra.mxu0 %v2070
      %2094 = vmatmul.bf16.gmra.mxu0 %v2006
      %v2095 = vpop.f32.mrf.mxu0
      %v2096 = vadd.f32 %v1863, %v2095
      %v2097 = vpop.f32.mrf.mxu0
      %v2098 = vadd.f32 %v1865, %v2097
      %2099 = vmatmul.bf16.gmra.mxu0 %v2007
      %v2100 = vpop.f32.mrf.mxu0
      %v2101 = vadd.f32 %v1868, %v2100
      %v2102 = vpop.f32.mrf.mxu0
      %v2103 = vadd.f32 %v1870, %v2102
      %2104 = vmatmul.bf16.gmra.mxu0 %v2008
      %v2105 = vpop.f32.mrf.mxu0
      %v2106 = vadd.f32 %v1873, %v2105
      %v2107 = vpop.f32.mrf.mxu0
      %v2108 = vadd.f32 %v1875, %v2107
      %2109 = vmatmul.bf16.gmra.mxu0 %v2009
      %v2110 = vpop.f32.mrf.mxu0
      %v2111 = vadd.f32 %v1878, %v2110
      %v2112 = vpop.f32.mrf.mxu0
      %v2113 = vadd.f32 %v1880, %v2112
      %2114 = vmatmul.bf16.gmra.mxu0 %v2010
      %v2115 = vpop.f32.mrf.mxu0
      %v2116 = vadd.f32 %v1883, %v2115
      %v2117 = vpop.f32.mrf.mxu0
      %v2118 = vadd.f32 %v1885, %v2117
      %2119 = vmatmul.bf16.gmra.mxu0 %v2011
      %v2120 = vpop.f32.mrf.mxu0
      %v2121 = vadd.f32 %v1888, %v2120
      %v2122 = vpop.f32.mrf.mxu0
      %v2123 = vadd.f32 %v1890, %v2122
      %2124 = vmatmul.bf16.gmra.mxu0 %v2012
      %v2125 = vpop.f32.mrf.mxu0
      %v2126 = vadd.f32 %v1893, %v2125
      %v2127 = vpop.f32.mrf.mxu0
      %v2128 = vadd.f32 %v1895, %v2127
      %2129 = vmatmul.bf16.gmra.mxu0 %v2013
      %v2130 = vpop.f32.mrf.mxu0
      %v2131 = vadd.f32 %v1898, %v2130
      %v2132 = vpop.f32.mrf.mxu0
      %v2133 = vadd.f32 %v1900, %v2132
      %2134 = vmatmul.bf16.gmra.mxu0 %v2014
      %v2135 = vpop.f32.mrf.mxu0
      %v2136 = vadd.f32 %v1903, %v2135
      %v2137 = vpop.f32.mrf.mxu0
      %v2138 = vadd.f32 %v1905, %v2137
      %2139 = vmatmul.bf16.gmra.mxu0 %v2015
      %v2140 = vpop.f32.mrf.mxu0
      %v2141 = vadd.f32 %v1908, %v2140
      %v2142 = vpop.f32.mrf.mxu0
      %v2143 = vadd.f32 %v1910, %v2142
      %2144 = vmatmul.bf16.gmra.mxu0 %v2016
      %v2145 = vpop.f32.mrf.mxu0
      %v2146 = vadd.f32 %v1913, %v2145
      %v2147 = vpop.f32.mrf.mxu0
      %v2148 = vadd.f32 %v1915, %v2147
      %2149 = vmatmul.bf16.gmra.mxu0 %v2017
      %v2150 = vpop.f32.mrf.mxu0
      %v2151 = vadd.f32 %v1918, %v2150
      %v2152 = vpop.f32.mrf.mxu0
      %v2153 = vadd.f32 %v1920, %v2152
      %2154 = vmatmul.bf16.gmra.mxu0 %v2018
      %v2155 = vpop.f32.mrf.mxu0
      %v2156 = vadd.f32 %v1923, %v2155
      %v2157 = vpop.f32.mrf.mxu0
      %v2158 = vadd.f32 %v1925, %v2157
      %2159 = vmatmul.bf16.gmra.mxu0 %v2019
      %v2160 = vpop.f32.mrf.mxu0
      %v2161 = vadd.f32 %v1928, %v2160
      %v2162 = vpop.f32.mrf.mxu0
      %v2163 = vadd.f32 %v1930, %v2162
      %2164 = vmatmul.bf16.gmra.mxu0 %v2020
      %v2165 = vpop.f32.mrf.mxu0
      %v2166 = vadd.f32 %v1933, %v2165
      %v2167 = vpop.f32.mrf.mxu0
      %v2168 = vadd.f32 %v1935, %v2167
      %2169 = vmatmul.bf16.gmra.mxu0 %v2021
      %v2170 = vpop.f32.mrf.mxu0
      %v2171 = vadd.f32 %v1938, %v2170
      %v2172 = vpop.f32.mrf.mxu0
      %v2173 = vadd.f32 %v1940, %v2172
      %2174 = vdwg.mxu0
      %v2175 = vld [vmem:[#allocation2] sm:$0xe]
      %v2176 = vld [vmem:[#allocation2 + $0xc] sm:$0xe]
      %v2177 = vld [vmem:[#allocation2 + $0x18] sm:$0xe]
      %v2178 = vld [vmem:[#allocation2 + $0x24] sm:$0xe]
      %v2179 = vld [vmem:[#allocation2 + $0x30] sm:$0xe]
      %v2180 = vld [vmem:[#allocation2 + $0x3c] sm:$0xe]
      %v2181 = vld [vmem:[#allocation2 + $0x48] sm:$0xe]
      %v2182 = vld [vmem:[#allocation2 + $0x54] sm:$0xe]
      %v2183 = vld [vmem:[#allocation2 + $0x60] sm:$0xe]
      %v2184 = vld [vmem:[#allocation2 + $0x6c] sm:$0xe]
      %v2185 = vld [vmem:[#allocation2 + $0x78] sm:$0xe]
      %v2186 = vld [vmem:[#allocation2 + $0x84] sm:$0xe]
      %v2187 = vld [vmem:[#allocation2 + $0x90] sm:$0xe]
      %v2188 = vld [vmem:[#allocation2 + $0x9c] sm:$0xe]
      %v2189 = vld [vmem:[#allocation2 + $0xa8] sm:$0xe]
      %v2190 = vld [vmem:[#allocation2 + $0xb4] sm:$0xe]
      %vm2223 = vcmask 1042432
      %vm2224 = vcmask 1046532
      %vm2225 = vmor %vm2223, %vm2224
      %v2226 = vrot.slane %v2175, 5
      %v2227 = vrot.slane %v2226, 4
      %v2228 = vrot.slane %v1274, 5
      %v2229 = vsel %vm2225, %v2227, %v2228
      %v2230 = vrot.slane %v2228, 4
      %v2231 = vrot.slane %v1321, 5
      %v2232 = vsel %vm2225, %v2230, %v2231
      %v2233 = vrot.slane %v2176, 5
      %v2234 = vrot.slane %v2233, 4
      %v2235 = vrot.slane %v1276, 5
      %v2236 = vsel %vm2225, %v2234, %v2235
      %v2237 = vrot.slane %v2235, 4
      %v2238 = vrot.slane %v1322, 5
      %v2239 = vsel %vm2225, %v2237, %v2238
      %v2240 = vrot.slane %v2177, 5
      %v2241 = vrot.slane %v2240, 4
      %v2242 = vrot.slane %v1278, 5
      %v2243 = vsel %vm2225, %v2241, %v2242
      %v2244 = vrot.slane %v2242, 4
      %v2245 = vrot.slane %v1323, 5
      %v2246 = vsel %vm2225, %v2244, %v2245
      %v2247 = vrot.slane %v2178, 5
      %v2248 = vrot.slane %v2247, 4
      %v2249 = vrot.slane %v1280, 5
      %v2250 = vsel %vm2225, %v2248, %v2249
      %v2251 = vrot.slane %v2249, 4
      %v2252 = vrot.slane %v1324, 5
      %v2253 = vsel %vm2225, %v2251, %v2252
      %v2254 = vrot.slane %v2179, 5
      %v2255 = vrot.slane %v2254, 4
      %v2256 = vrot.slane %v1282, 5
      %v2257 = vsel %vm2225, %v2255, %v2256
      %v2258 = vrot.slane %v2256, 4
      %v2259 = vrot.slane %v1325, 5
      %v2260 = vsel %vm2225, %v2258, %v2259
      %v2261 = vrot.slane %v2180, 5
      %v2262 = vrot.slane %v2261, 4
      %v2263 = vrot.slane %v1284, 5
      %v2264 = vsel %vm2225, %v2262, %v2263
      %v2265 = vrot.slane %v2263, 4
      %v2266 = vrot.slane %v1326, 5
      %v2267 = vsel %vm2225, %v2265, %v2266
      %v2268 = vrot.slane %v2181, 5
      %v2269 = vrot.slane %v2268, 4
      %v2270 = vrot.slane %v1286, 5
      %v2271 = vsel %vm2225, %v2269, %v2270
      %v2272 = vrot.slane %v2270, 4
      %v2273 = vrot.slane %v1327, 5
      %v2274 = vsel %vm2225, %v2272, %v2273
      %v2275 = vrot.slane %v2182, 5
      %v2276 = vrot.slane %v2275, 4
      %v2277 = vrot.slane %v1288, 5
      %v2278 = vsel %vm2225, %v2276, %v2277
      %v2279 = vrot.slane %v2277, 4
      %v2280 = vrot.slane %v1328, 5
      %v2281 = vsel %vm2225, %v2279, %v2280
      %v2282 = vrot.slane %v2183, 5
      %v2283 = vrot.slane %v2282, 4
      %v2284 = vrot.slane %v1290, 5
      %v2285 = vsel %vm2225, %v2283, %v2284
      %v2286 = vrot.slane %v2284, 4
      %v2287 = vrot.slane %v1329, 5
      %v2288 = vsel %vm2225, %v2286, %v2287
      %v2289 = vrot.slane %v2184, 5
      %v2290 = vrot.slane %v2289, 4
      %v2291 = vrot.slane %v1292, 5
      %v2292 = vsel %vm2225, %v2290, %v2291
      %v2293 = vrot.slane %v2291, 4
      %v2294 = vrot.slane %v1330, 5
      %v2295 = vsel %vm2225, %v2293, %v2294
      %v2296 = vrot.slane %v2185, 5
      %v2297 = vrot.slane %v2296, 4
      %v2298 = vrot.slane %v1294, 5
      %v2299 = vsel %vm2225, %v2297, %v2298
      %v2300 = vrot.slane %v2298, 4
      %v2301 = vrot.slane %v1331, 5
      %v2302 = vsel %vm2225, %v2300, %v2301
      %v2303 = vrot.slane %v2186, 5
      %v2304 = vrot.slane %v2303, 4
      %v2305 = vrot.slane %v1296, 5
      %v2306 = vsel %vm2225, %v2304, %v2305
      %v2307 = vrot.slane %v2305, 4
      %v2308 = vrot.slane %v1332, 5
      %v2309 = vsel %vm2225, %v2307, %v2308
      %v2310 = vrot.slane %v2187, 5
      %v2311 = vrot.slane %v2310, 4
      %v2312 = vrot.slane %v1298, 5
      %v2313 = vsel %vm2225, %v2311, %v2312
      %v2314 = vrot.slane %v2312, 4
      %v2315 = vrot.slane %v1333, 5
      %v2316 = vsel %vm2225, %v2314, %v2315
      %v2317 = vrot.slane %v2188, 5
      %v2318 = vrot.slane %v2317, 4
      %v2319 = vrot.slane %v1300, 5
      %v2320 = vsel %vm2225, %v2318, %v2319
      %v2321 = vrot.slane %v2319, 4
      %v2322 = vrot.slane %v1334, 5
      %v2323 = vsel %vm2225, %v2321, %v2322
      %v2324 = vrot.slane %v2189, 5
      %v2325 = vrot.slane %v2324, 4
      %v2326 = vrot.slane %v1302, 5
      %v2327 = vsel %vm2225, %v2325, %v2326
      %v2328 = vrot.slane %v2326, 4
      %v2329 = vrot.slane %v1335, 5
      %v2330 = vsel %vm2225, %v2328, %v2329
      %v2331 = vrot.slane %v2190, 5
      %v2332 = vrot.slane %v2331, 4
      %v2333 = vrot.slane %v1304, 5
      %v2334 = vsel %vm2225, %v2332, %v2333
      %v2335 = vrot.slane %v2333, 4
      %v2336 = vrot.slane %v1336, 5
      %v2337 = vsel %vm2225, %v2335, %v2336
      %s2338 = scalar_lea.vmem %s2, 128
      %v2339 = vld [vmem:[%s2338] sm:$0xf]
      %v2340 = vld [vmem:[%s2338 + $0x4] sm:$0xf]
      %v2341 = vld [vmem:[%s2338 + $0x8] sm:$0xf]
      %v2342 = vld [vmem:[%s2338 + $0xc] sm:$0xf]
      %v2343 = vld [vmem:[%s2338 + $0x10] sm:$0xf]
      %v2344 = vld [vmem:[%s2338 + $0x14] sm:$0xf]
      %v2345 = vld [vmem:[%s2338 + $0x18] sm:$0xf]
      %v2346 = vld [vmem:[%s2338 + $0x1c] sm:$0xf]
      %v2347 = vld [vmem:[%s2338 + $0x20] sm:$0xf]
      %v2348 = vld [vmem:[%s2338 + $0x24] sm:$0xf]
      %v2349 = vld [vmem:[%s2338 + $0x28] sm:$0xf]
      %v2350 = vld [vmem:[%s2338 + $0x2c] sm:$0xf]
      %v2351 = vld [vmem:[%s2338 + $0x30] sm:$0xf]
      %v2352 = vld [vmem:[%s2338 + $0x34] sm:$0xf]
      %v2353 = vld [vmem:[%s2338 + $0x38] sm:$0xf]
      %v2354 = vld [vmem:[%s2338 + $0x3c] sm:$0xf]
      %v2355 = vunpack.c.l.b16 %v2229
      %v2356 = vunpack.c.l.b16 %v2232
      %v2357 = vunpack.c.l.b16 %v2236
      %v2358 = vunpack.c.l.b16 %v2239
      %v2359 = vunpack.c.l.b16 %v2243
      %v2360 = vunpack.c.l.b16 %v2246
      %v2361 = vunpack.c.l.b16 %v2250
      %v2362 = vunpack.c.l.b16 %v2253
      %v2363 = vunpack.c.l.b16 %v2257
      %v2364 = vunpack.c.l.b16 %v2260
      %v2365 = vunpack.c.l.b16 %v2264
      %v2366 = vunpack.c.l.b16 %v2267
      %v2367 = vunpack.c.l.b16 %v2271
      %v2368 = vunpack.c.l.b16 %v2274
      %v2369 = vunpack.c.l.b16 %v2278
      %v2370 = vunpack.c.l.b16 %v2281
      %v2371 = vunpack.c.l.b16 %v2285
      %v2372 = vunpack.c.l.b16 %v2288
      %v2373 = vunpack.c.l.b16 %v2292
      %v2374 = vunpack.c.l.b16 %v2295
      %v2375 = vunpack.c.l.b16 %v2299
      %v2376 = vunpack.c.l.b16 %v2302
      %v2377 = vunpack.c.l.b16 %v2306
      %v2378 = vunpack.c.l.b16 %v2309
      %v2379 = vunpack.c.l.b16 %v2313
      %v2380 = vunpack.c.l.b16 %v2316
      %v2381 = vunpack.c.l.b16 %v2320
      %v2382 = vunpack.c.l.b16 %v2323
      %v2383 = vunpack.c.l.b16 %v2327
      %v2384 = vunpack.c.l.b16 %v2330
      %v2385 = vunpack.c.l.b16 %v2334
      %v2386 = vunpack.c.l.b16 %v2337
      %v2387 = vpack.c.b16 %v2356, %v2355
      %v2388 = vpack.c.b16 %v2358, %v2357
      %v2389 = vpack.c.b16 %v2360, %v2359
      %v2390 = vpack.c.b16 %v2362, %v2361
      %v2391 = vpack.c.b16 %v2364, %v2363
      %v2392 = vpack.c.b16 %v2366, %v2365
      %v2393 = vpack.c.b16 %v2368, %v2367
      %v2394 = vpack.c.b16 %v2370, %v2369
      %v2395 = vpack.c.b16 %v2372, %v2371
      %v2396 = vpack.c.b16 %v2374, %v2373
      %v2397 = vpack.c.b16 %v2376, %v2375
      %v2398 = vpack.c.b16 %v2378, %v2377
      %v2399 = vpack.c.b16 %v2380, %v2379
      %v2400 = vpack.c.b16 %v2382, %v2381
      %v2401 = vpack.c.b16 %v2384, %v2383
      %v2402 = vpack.c.b16 %v2386, %v2385
      %v2435 = vunpack.c.l.b16 %v2339
      %v2436 = vunpack.c.l.b16 %v2340
      %v2437 = vunpack.c.l.b16 %v2341
      %v2438 = vunpack.c.l.b16 %v2342
      %v2439 = vunpack.c.l.b16 %v2343
      %v2440 = vunpack.c.l.b16 %v2344
      %v2441 = vunpack.c.l.b16 %v2345
      %v2442 = vunpack.c.l.b16 %v2346
      %v2443 = vunpack.c.l.b16 %v2347
      %v2444 = vunpack.c.l.b16 %v2348
      %v2445 = vunpack.c.l.b16 %v2349
      %v2446 = vunpack.c.l.b16 %v2350
      %v2447 = vunpack.c.l.b16 %v2351
      %v2448 = vunpack.c.l.b16 %v2352
      %v2449 = vunpack.c.l.b16 %v2353
      %v2450 = vunpack.c.l.b16 %v2354
      %v2451 = vpack.c.b16 %v2436, %v2435
      %v2452 = vpack.c.b16 %v2438, %v2437
      %v2453 = vpack.c.b16 %v2440, %v2439
      %v2454 = vpack.c.b16 %v2442, %v2441
      %v2455 = vpack.c.b16 %v2444, %v2443
      %v2456 = vpack.c.b16 %v2446, %v2445
      %v2457 = vpack.c.b16 %v2448, %v2447
      %v2458 = vpack.c.b16 %v2450, %v2449
      %2467 = vmatpush.bf16.msra.mxu0 %v2458
      %2468 = vmatpush.bf16.msra.mxu0 %v2457
      %2469 = vmatpush.bf16.msra.mxu0 %v2456
      %2470 = vmatpush.bf16.msra.mxu0 %v2455
      %2471 = vmatpush.bf16.msra.mxu0 %v2454
      %2472 = vmatpush.bf16.msra.mxu0 %v2453
      %2473 = vmatpush.bf16.msra.mxu0 %v2452
      %2474 = vmatpush.bf16.msra.mxu0 %v2451
      %2475 = vmatmul.bf16.gmra.mxu0 %v2387
      %v2476 = vpop.f32.mrf.mxu0
      %v2477 = vadd.f32 0.0, %v2476
      %v2478 = vpop.f32.mrf.mxu0
      %v2479 = vadd.f32 0.0, %v2478
      %2480 = vmatmul.bf16.gmra.mxu0 %v2388
      %v2481 = vpop.f32.mrf.mxu0
      %v2482 = vadd.f32 0.0, %v2481
      %v2483 = vpop.f32.mrf.mxu0
      %v2484 = vadd.f32 0.0, %v2483
      %2485 = vmatmul.bf16.gmra.mxu0 %v2389
      %v2486 = vpop.f32.mrf.mxu0
      %v2487 = vadd.f32 0.0, %v2486
      %v2488 = vpop.f32.mrf.mxu0
      %v2489 = vadd.f32 0.0, %v2488
      %2490 = vmatmul.bf16.gmra.mxu0 %v2390
      %v2491 = vpop.f32.mrf.mxu0
      %v2492 = vadd.f32 0.0, %v2491
      %v2493 = vpop.f32.mrf.mxu0
      %v2494 = vadd.f32 0.0, %v2493
      %2495 = vmatmul.bf16.gmra.mxu0 %v2391
      %v2496 = vpop.f32.mrf.mxu0
      %v2497 = vadd.f32 0.0, %v2496
      %v2498 = vpop.f32.mrf.mxu0
      %v2499 = vadd.f32 0.0, %v2498
      %2500 = vmatmul.bf16.gmra.mxu0 %v2392
      %v2501 = vpop.f32.mrf.mxu0
      %v2502 = vadd.f32 0.0, %v2501
      %v2503 = vpop.f32.mrf.mxu0
      %v2504 = vadd.f32 0.0, %v2503
      %2505 = vmatmul.bf16.gmra.mxu0 %v2393
      %v2506 = vpop.f32.mrf.mxu0
      %v2507 = vadd.f32 0.0, %v2506
      %v2508 = vpop.f32.mrf.mxu0
      %v2509 = vadd.f32 0.0, %v2508
      %2510 = vmatmul.bf16.gmra.mxu0 %v2394
      %v2511 = vpop.f32.mrf.mxu0
      %v2512 = vadd.f32 0.0, %v2511
      %v2513 = vpop.f32.mrf.mxu0
      %v2514 = vadd.f32 0.0, %v2513
      %2515 = vmatmul.bf16.gmra.mxu0 %v2395
      %v2516 = vpop.f32.mrf.mxu0
      %v2517 = vadd.f32 0.0, %v2516
      %v2518 = vpop.f32.mrf.mxu0
      %v2519 = vadd.f32 0.0, %v2518
      %2520 = vmatmul.bf16.gmra.mxu0 %v2396
      %v2521 = vpop.f32.mrf.mxu0
      %v2522 = vadd.f32 0.0, %v2521
      %v2523 = vpop.f32.mrf.mxu0
      %v2524 = vadd.f32 0.0, %v2523
      %2525 = vmatmul.bf16.gmra.mxu0 %v2397
      %v2526 = vpop.f32.mrf.mxu0
      %v2527 = vadd.f32 0.0, %v2526
      %v2528 = vpop.f32.mrf.mxu0
      %v2529 = vadd.f32 0.0, %v2528
      %2530 = vmatmul.bf16.gmra.mxu0 %v2398
      %v2531 = vpop.f32.mrf.mxu0
      %v2532 = vadd.f32 0.0, %v2531
      %v2533 = vpop.f32.mrf.mxu0
      %v2534 = vadd.f32 0.0, %v2533
      %2535 = vmatmul.bf16.gmra.mxu0 %v2399
      %v2536 = vpop.f32.mrf.mxu0
      %v2537 = vadd.f32 0.0, %v2536
      %v2538 = vpop.f32.mrf.mxu0
      %v2539 = vadd.f32 0.0, %v2538
      %2540 = vmatmul.bf16.gmra.mxu0 %v2400
      %v2541 = vpop.f32.mrf.mxu0
      %v2542 = vadd.f32 0.0, %v2541
      %v2543 = vpop.f32.mrf.mxu0
      %v2544 = vadd.f32 0.0, %v2543
      %2545 = vmatmul.bf16.gmra.mxu0 %v2401
      %v2546 = vpop.f32.mrf.mxu0
      %v2547 = vadd.f32 0.0, %v2546
      %v2548 = vpop.f32.mrf.mxu0
      %v2549 = vadd.f32 0.0, %v2548
      %2550 = vmatmul.bf16.gmra.mxu0 %v2402
      %v2551 = vpop.f32.mrf.mxu0
      %v2552 = vadd.f32 0.0, %v2551
      %v2553 = vpop.f32.mrf.mxu0
      %v2554 = vadd.f32 0.0, %v2553
      %2555 = vdwg.mxu0
      %v2556 = vadd.f32 %v2096, %v2477
      %v2557 = vadd.f32 %v2098, %v2479
      %v2558 = vadd.f32 %v2101, %v2482
      %v2559 = vadd.f32 %v2103, %v2484
      %v2560 = vadd.f32 %v2106, %v2487
      %v2561 = vadd.f32 %v2108, %v2489
      %v2562 = vadd.f32 %v2111, %v2492
      %v2563 = vadd.f32 %v2113, %v2494
      %v2564 = vadd.f32 %v2116, %v2497
      %v2565 = vadd.f32 %v2118, %v2499
      %v2566 = vadd.f32 %v2121, %v2502
      %v2567 = vadd.f32 %v2123, %v2504
      %v2568 = vadd.f32 %v2126, %v2507
      %v2569 = vadd.f32 %v2128, %v2509
      %v2570 = vadd.f32 %v2131, %v2512
      %v2571 = vadd.f32 %v2133, %v2514
      %v2572 = vadd.f32 %v2136, %v2517
      %v2573 = vadd.f32 %v2138, %v2519
      %v2574 = vadd.f32 %v2141, %v2522
      %v2575 = vadd.f32 %v2143, %v2524
      %v2576 = vadd.f32 %v2146, %v2527
      %v2577 = vadd.f32 %v2148, %v2529
      %v2578 = vadd.f32 %v2151, %v2532
      %v2579 = vadd.f32 %v2153, %v2534
      %v2580 = vadd.f32 %v2156, %v2537
      %v2581 = vadd.f32 %v2158, %v2539
      %v2582 = vadd.f32 %v2161, %v2542
      %v2583 = vadd.f32 %v2163, %v2544
      %v2584 = vadd.f32 %v2166, %v2547
      %v2585 = vadd.f32 %v2168, %v2549
      %v2586 = vadd.f32 %v2171, %v2552
      %v2587 = vadd.f32 %v2173, %v2554
      %v2588 = vld [vmem:[%s1155] sm:$0xf]
      %v2589 = vld [vmem:[%s1155 + $0x4] sm:$0xf]
      %v2590 = vld [vmem:[%s1155 + $0xc] sm:$0xf]
      %v2591 = vld [vmem:[%s1155 + $0x10] sm:$0xf]
      %v2592 = vld [vmem:[%s1155 + $0x18] sm:$0xf]
      %v2593 = vld [vmem:[%s1155 + $0x1c] sm:$0xf]
      %v2594 = vld [vmem:[%s1155 + $0x24] sm:$0xf]
      %v2595 = vld [vmem:[%s1155 + $0x28] sm:$0xf]
      %v2596 = vld [vmem:[%s1155 + $0x30] sm:$0xf]
      %v2597 = vld [vmem:[%s1155 + $0x34] sm:$0xf]
      %v2598 = vld [vmem:[%s1155 + $0x3c] sm:$0xf]
      %v2599 = vld [vmem:[%s1155 + $0x40] sm:$0xf]
      %v2600 = vld [vmem:[%s1155 + $0x48] sm:$0xf]
      %v2601 = vld [vmem:[%s1155 + $0x4c] sm:$0xf]
      %v2602 = vld [vmem:[%s1155 + $0x54] sm:$0xf]
      %v2603 = vld [vmem:[%s1155 + $0x58] sm:$0xf]
      %v2604 = vld [vmem:[%s1155 + $0x60] sm:$0xf]
      %v2605 = vld [vmem:[%s1155 + $0x64] sm:$0xf]
      %v2606 = vld [vmem:[%s1155 + $0x6c] sm:$0xf]
      %v2607 = vld [vmem:[%s1155 + $0x70] sm:$0xf]
      %v2608 = vld [vmem:[%s1155 + $0x78] sm:$0xf]
      %v2609 = vld [vmem:[%s1155 + $0x7c] sm:$0xf]
      %v2610 = vld [vmem:[%s1155 + $0x84] sm:$0xf]
      %v2611 = vld [vmem:[%s1155 + $0x88] sm:$0xf]
      %v2612 = vld [vmem:[%s1155 + $0x90] sm:$0xf]
      %v2613 = vld [vmem:[%s1155 + $0x94] sm:$0xf]
      %v2614 = vld [vmem:[%s1155 + $0x9c] sm:$0xf]
      %v2615 = vld [vmem:[%s1155 + $0xa0] sm:$0xf]
      %v2616 = vld [vmem:[%s1155 + $0xa8] sm:$0xf]
      %v2617 = vld [vmem:[%s1155 + $0xac] sm:$0xf]
      %v2618 = vld [vmem:[%s1155 + $0xb4] sm:$0xf]
      %v2619 = vld [vmem:[%s1155 + $0xb8] sm:$0xf]
      %s2620 = scalar_lea.vmem %s2, 192
      %v2621 = vld [vmem:[%s2620] sm:$0xf]
      %v2622 = vld [vmem:[%s2620 + $0x4] sm:$0xf]
      %v2623 = vld [vmem:[%s2620 + $0x8] sm:$0xf]
      %v2624 = vld [vmem:[%s2620 + $0xc] sm:$0xf]
      %v2625 = vld [vmem:[%s2620 + $0x10] sm:$0xf]
      %v2626 = vld [vmem:[%s2620 + $0x14] sm:$0xf]
      %v2627 = vld [vmem:[%s2620 + $0x18] sm:$0xf]
      %v2628 = vld [vmem:[%s2620 + $0x1c] sm:$0xf]
      %v2629 = vld [vmem:[%s2620 + $0x20] sm:$0xf]
      %v2630 = vld [vmem:[%s2620 + $0x24] sm:$0xf]
      %v2631 = vld [vmem:[%s2620 + $0x28] sm:$0xf]
      %v2632 = vld [vmem:[%s2620 + $0x2c] sm:$0xf]
      %v2633 = vld [vmem:[%s2620 + $0x30] sm:$0xf]
      %v2634 = vld [vmem:[%s2620 + $0x34] sm:$0xf]
      %v2635 = vld [vmem:[%s2620 + $0x38] sm:$0xf]
      %v2636 = vld [vmem:[%s2620 + $0x3c] sm:$0xf]
      %v2669 = vunpack.c.l.b16 %v2588
      %v2670 = vunpack.c.l.b16 %v2589
      %v2671 = vunpack.c.l.b16 %v2590
      %v2672 = vunpack.c.l.b16 %v2591
      %v2673 = vunpack.c.l.b16 %v2592
      %v2674 = vunpack.c.l.b16 %v2593
      %v2675 = vunpack.c.l.b16 %v2594
      %v2676 = vunpack.c.l.b16 %v2595
      %v2677 = vunpack.c.l.b16 %v2596
      %v2678 = vunpack.c.l.b16 %v2597
      %v2679 = vunpack.c.l.b16 %v2598
      %v2680 = vunpack.c.l.b16 %v2599
      %v2681 = vunpack.c.l.b16 %v2600
      %v2682 = vunpack.c.l.b16 %v2601
      %v2683 = vunpack.c.l.b16 %v2602
      %v2684 = vunpack.c.l.b16 %v2603
      %v2685 = vunpack.c.l.b16 %v2604
      %v2686 = vunpack.c.l.b16 %v2605
      %v2687 = vunpack.c.l.b16 %v2606
      %v2688 = vunpack.c.l.b16 %v2607
      %v2689 = vunpack.c.l.b16 %v2608
      %v2690 = vunpack.c.l.b16 %v2609
      %v2691 = vunpack.c.l.b16 %v2610
      %v2692 = vunpack.c.l.b16 %v2611
      %v2693 = vunpack.c.l.b16 %v2612
      %v2694 = vunpack.c.l.b16 %v2613
      %v2695 = vunpack.c.l.b16 %v2614
      %v2696 = vunpack.c.l.b16 %v2615
      %v2697 = vunpack.c.l.b16 %v2616
      %v2698 = vunpack.c.l.b16 %v2617
      %v2699 = vunpack.c.l.b16 %v2618
      %v2700 = vunpack.c.l.b16 %v2619
      %v2701 = vpack.c.b16 %v2670, %v2669
      %v2702 = vpack.c.b16 %v2672, %v2671
      %v2703 = vpack.c.b16 %v2674, %v2673
      %v2704 = vpack.c.b16 %v2676, %v2675
      %v2705 = vpack.c.b16 %v2678, %v2677
      %v2706 = vpack.c.b16 %v2680, %v2679
      %v2707 = vpack.c.b16 %v2682, %v2681
      %v2708 = vpack.c.b16 %v2684, %v2683
      %v2709 = vpack.c.b16 %v2686, %v2685
      %v2710 = vpack.c.b16 %v2688, %v2687
      %v2711 = vpack.c.b16 %v2690, %v2689
      %v2712 = vpack.c.b16 %v2692, %v2691
      %v2713 = vpack.c.b16 %v2694, %v2693
      %v2714 = vpack.c.b16 %v2696, %v2695
      %v2715 = vpack.c.b16 %v2698, %v2697
      %v2716 = vpack.c.b16 %v2700, %v2699
      %v2749 = vunpack.c.l.b16 %v2621
      %v2750 = vunpack.c.l.b16 %v2622
      %v2751 = vunpack.c.l.b16 %v2623
      %v2752 = vunpack.c.l.b16 %v2624
      %v2753 = vunpack.c.l.b16 %v2625
      %v2754 = vunpack.c.l.b16 %v2626
      %v2755 = vunpack.c.l.b16 %v2627
      %v2756 = vunpack.c.l.b16 %v2628
      %v2757 = vunpack.c.l.b16 %v2629
      %v2758 = vunpack.c.l.b16 %v2630
      %v2759 = vunpack.c.l.b16 %v2631
      %v2760 = vunpack.c.l.b16 %v2632
      %v2761 = vunpack.c.l.b16 %v2633
      %v2762 = vunpack.c.l.b16 %v2634
      %v2763 = vunpack.c.l.b16 %v2635
      %v2764 = vunpack.c.l.b16 %v2636
      %v2765 = vpack.c.b16 %v2750, %v2749
      %v2766 = vpack.c.b16 %v2752, %v2751
      %v2767 = vpack.c.b16 %v2754, %v2753
      %v2768 = vpack.c.b16 %v2756, %v2755
      %v2769 = vpack.c.b16 %v2758, %v2757
      %v2770 = vpack.c.b16 %v2760, %v2759
      %v2771 = vpack.c.b16 %v2762, %v2761
      %v2772 = vpack.c.b16 %v2764, %v2763
      %2781 = vmatpush.bf16.msra.mxu0 %v2772
      %2782 = vmatpush.bf16.msra.mxu0 %v2771
      %2783 = vmatpush.bf16.msra.mxu0 %v2770
      %2784 = vmatpush.bf16.msra.mxu0 %v2769
      %2785 = vmatpush.bf16.msra.mxu0 %v2768
      %2786 = vmatpush.bf16.msra.mxu0 %v2767
      %2787 = vmatpush.bf16.msra.mxu0 %v2766
      %2788 = vmatpush.bf16.msra.mxu0 %v2765
      %2789 = vmatmul.bf16.gmra.mxu0 %v2701
      %v2790 = vpop.f32.mrf.mxu0
      %v2791 = vadd.f32 0.0, %v2790
      %v2792 = vpop.f32.mrf.mxu0
      %v2793 = vadd.f32 0.0, %v2792
      %2794 = vmatmul.bf16.gmra.mxu0 %v2702
      %v2795 = vpop.f32.mrf.mxu0
      %v2796 = vadd.f32 0.0, %v2795
      %v2797 = vpop.f32.mrf.mxu0
      %v2798 = vadd.f32 0.0, %v2797
      %2799 = vmatmul.bf16.gmra.mxu0 %v2703
      %v2800 = vpop.f32.mrf.mxu0
      %v2801 = vadd.f32 0.0, %v2800
      %v2802 = vpop.f32.mrf.mxu0
      %v2803 = vadd.f32 0.0, %v2802
      %2804 = vmatmul.bf16.gmra.mxu0 %v2704
      %v2805 = vpop.f32.mrf.mxu0
      %v2806 = vadd.f32 0.0, %v2805
      %v2807 = vpop.f32.mrf.mxu0
      %v2808 = vadd.f32 0.0, %v2807
      %2809 = vmatmul.bf16.gmra.mxu0 %v2705
      %v2810 = vpop.f32.mrf.mxu0
      %v2811 = vadd.f32 0.0, %v2810
      %v2812 = vpop.f32.mrf.mxu0
      %v2813 = vadd.f32 0.0, %v2812
      %2814 = vmatmul.bf16.gmra.mxu0 %v2706
      %v2815 = vpop.f32.mrf.mxu0
      %v2816 = vadd.f32 0.0, %v2815
      %v2817 = vpop.f32.mrf.mxu0
      %v2818 = vadd.f32 0.0, %v2817
      %2819 = vmatmul.bf16.gmra.mxu0 %v2707
      %v2820 = vpop.f32.mrf.mxu0
      %v2821 = vadd.f32 0.0, %v2820
      %v2822 = vpop.f32.mrf.mxu0
      %v2823 = vadd.f32 0.0, %v2822
      %2824 = vmatmul.bf16.gmra.mxu0 %v2708
      %v2825 = vpop.f32.mrf.mxu0
      %v2826 = vadd.f32 0.0, %v2825
      %v2827 = vpop.f32.mrf.mxu0
      %v2828 = vadd.f32 0.0, %v2827
      %2829 = vmatmul.bf16.gmra.mxu0 %v2709
      %v2830 = vpop.f32.mrf.mxu0
      %v2831 = vadd.f32 0.0, %v2830
      %v2832 = vpop.f32.mrf.mxu0
      %v2833 = vadd.f32 0.0, %v2832
      %2834 = vmatmul.bf16.gmra.mxu0 %v2710
      %v2835 = vpop.f32.mrf.mxu0
      %v2836 = vadd.f32 0.0, %v2835
      %v2837 = vpop.f32.mrf.mxu0
      %v2838 = vadd.f32 0.0, %v2837
      %2839 = vmatmul.bf16.gmra.mxu0 %v2711
      %v2840 = vpop.f32.mrf.mxu0
      %v2841 = vadd.f32 0.0, %v2840
      %v2842 = vpop.f32.mrf.mxu0
      %v2843 = vadd.f32 0.0, %v2842
      %2844 = vmatmul.bf16.gmra.mxu0 %v2712
      %v2845 = vpop.f32.mrf.mxu0
      %v2846 = vadd.f32 0.0, %v2845
      %v2847 = vpop.f32.mrf.mxu0
      %v2848 = vadd.f32 0.0, %v2847
      %2849 = vmatmul.bf16.gmra.mxu0 %v2713
      %v2850 = vpop.f32.mrf.mxu0
      %v2851 = vadd.f32 0.0, %v2850
      %v2852 = vpop.f32.mrf.mxu0
      %v2853 = vadd.f32 0.0, %v2852
      %2854 = vmatmul.bf16.gmra.mxu0 %v2714
      %v2855 = vpop.f32.mrf.mxu0
      %v2856 = vadd.f32 0.0, %v2855
      %v2857 = vpop.f32.mrf.mxu0
      %v2858 = vadd.f32 0.0, %v2857
      %2859 = vmatmul.bf16.gmra.mxu0 %v2715
      %v2860 = vpop.f32.mrf.mxu0
      %v2861 = vadd.f32 0.0, %v2860
      %v2862 = vpop.f32.mrf.mxu0
      %v2863 = vadd.f32 0.0, %v2862
      %2864 = vmatmul.bf16.gmra.mxu0 %v2716
      %v2865 = vpop.f32.mrf.mxu0
      %v2866 = vadd.f32 0.0, %v2865
      %v2867 = vpop.f32.mrf.mxu0
      %v2868 = vadd.f32 0.0, %v2867
      %2869 = vdwg.mxu0
      %v2870 = vadd.f32 %v2556, %v2791
      %v2871 = vadd.f32 %v2557, %v2793
      %v2872 = vadd.f32 %v2558, %v2796
      %v2873 = vadd.f32 %v2559, %v2798
      %v2874 = vadd.f32 %v2560, %v2801
      %v2875 = vadd.f32 %v2561, %v2803
      %v2876 = vadd.f32 %v2562, %v2806
      %v2877 = vadd.f32 %v2563, %v2808
      %v2878 = vadd.f32 %v2564, %v2811
      %v2879 = vadd.f32 %v2565, %v2813
      %v2880 = vadd.f32 %v2566, %v2816
      %v2881 = vadd.f32 %v2567, %v2818
      %v2882 = vadd.f32 %v2568, %v2821
      %v2883 = vadd.f32 %v2569, %v2823
      %v2884 = vadd.f32 %v2570, %v2826
      %v2885 = vadd.f32 %v2571, %v2828
      %v2886 = vadd.f32 %v2572, %v2831
      %v2887 = vadd.f32 %v2573, %v2833
      %v2888 = vadd.f32 %v2574, %v2836
      %v2889 = vadd.f32 %v2575, %v2838
      %v2890 = vadd.f32 %v2576, %v2841
      %v2891 = vadd.f32 %v2577, %v2843
      %v2892 = vadd.f32 %v2578, %v2846
      %v2893 = vadd.f32 %v2579, %v2848
      %v2894 = vadd.f32 %v2580, %v2851
      %v2895 = vadd.f32 %v2581, %v2853
      %v2896 = vadd.f32 %v2582, %v2856
      %v2897 = vadd.f32 %v2583, %v2858
      %v2898 = vadd.f32 %v2584, %v2861
      %v2899 = vadd.f32 %v2585, %v2863
      %v2900 = vadd.f32 %v2586, %v2866
      %v2901 = vadd.f32 %v2587, %v2868
      %v2902 = vld [vmem:[%s1155] sm:$0xf]
      %v2903 = vld [vmem:[%s1155 + $0x4] sm:$0xf]
      %v2904 = vld [vmem:[%s1155 + $0x8] sm:$0x1]
      %v2905 = vld [vmem:[%s1155 + $0xc] sm:$0xf]
      %v2906 = vld [vmem:[%s1155 + $0x10] sm:$0xf]
      %v2907 = vld [vmem:[%s1155 + $0x14] sm:$0x1]
      %v2908 = vld [vmem:[%s1155 + $0x18] sm:$0xf]
      %v2909 = vld [vmem:[%s1155 + $0x1c] sm:$0xf]
      %v2910 = vld [vmem:[%s1155 + $0x20] sm:$0x1]
      %v2911 = vld [vmem:[%s1155 + $0x24] sm:$0xf]
      %v2912 = vld [vmem:[%s1155 + $0x28] sm:$0xf]
      %v2913 = vld [vmem:[%s1155 + $0x2c] sm:$0x1]
      %v2914 = vld [vmem:[%s1155 + $0x30] sm:$0xf]
      %v2915 = vld [vmem:[%s1155 + $0x34] sm:$0xf]
      %v2916 = vld [vmem:[%s1155 + $0x38] sm:$0x1]
      %v2917 = vld [vmem:[%s1155 + $0x3c] sm:$0xf]
      %v2918 = vld [vmem:[%s1155 + $0x40] sm:$0xf]
      %v2919 = vld [vmem:[%s1155 + $0x44] sm:$0x1]
      %v2920 = vld [vmem:[%s1155 + $0x48] sm:$0xf]
      %v2921 = vld [vmem:[%s1155 + $0x4c] sm:$0xf]
      %v2922 = vld [vmem:[%s1155 + $0x50] sm:$0x1]
      %v2923 = vld [vmem:[%s1155 + $0x54] sm:$0xf]
      %v2924 = vld [vmem:[%s1155 + $0x58] sm:$0xf]
      %v2925 = vld [vmem:[%s1155 + $0x5c] sm:$0x1]
      %v2926 = vld [vmem:[%s1155 + $0x60] sm:$0xf]
      %v2927 = vld [vmem:[%s1155 + $0x64] sm:$0xf]
      %v2928 = vld [vmem:[%s1155 + $0x68] sm:$0x1]
      %v2929 = vld [vmem:[%s1155 + $0x6c] sm:$0xf]
      %v2930 = vld [vmem:[%s1155 + $0x70] sm:$0xf]
      %v2931 = vld [vmem:[%s1155 + $0x74] sm:$0x1]
      %v2932 = vld [vmem:[%s1155 + $0x78] sm:$0xf]
      %v2933 = vld [vmem:[%s1155 + $0x7c] sm:$0xf]
      %v2934 = vld [vmem:[%s1155 + $0x80] sm:$0x1]
      %v2935 = vld [vmem:[%s1155 + $0x84] sm:$0xf]
      %v2936 = vld [vmem:[%s1155 + $0x88] sm:$0xf]
      %v2937 = vld [vmem:[%s1155 + $0x8c] sm:$0x1]
      %v2938 = vld [vmem:[%s1155 + $0x90] sm:$0xf]
      %v2939 = vld [vmem:[%s1155 + $0x94] sm:$0xf]
      %v2940 = vld [vmem:[%s1155 + $0x98] sm:$0x1]
      %v2941 = vld [vmem:[%s1155 + $0x9c] sm:$0xf]
      %v2942 = vld [vmem:[%s1155 + $0xa0] sm:$0xf]
      %v2943 = vld [vmem:[%s1155 + $0xa4] sm:$0x1]
      %v2944 = vld [vmem:[%s1155 + $0xa8] sm:$0xf]
      %v2945 = vld [vmem:[%s1155 + $0xac] sm:$0xf]
      %v2946 = vld [vmem:[%s1155 + $0xb0] sm:$0x1]
      %v2947 = vld [vmem:[%s1155 + $0xb4] sm:$0xf]
      %v2948 = vld [vmem:[%s1155 + $0xb8] sm:$0xf]
      %v2949 = vld [vmem:[%s1155 + $0xbc] sm:$0x1]
      %v2951 = vshrl.u32 %v2902, 16
      %v2953 = vrot.slane %v2951, 4
      %v2954 = vshll.u32 %v2902, 16
      %v2956 = vrot.slane %v2954, 5
      %v2957 = vor.u32 %v2953, %v2956
      %v2958 = vrot.slane %v2957, 4
      %v2960 = vshll.u32 %v2903, 16
      %v2962 = vrot.slane %v2960, 5
      %v2963 = vsel %vm1339, %v2958, %v2962
      %v2964 = vshrl.u32 %v2903, 16
      %v2966 = vrot.slane %v2964, 4
      %v2967 = vor.u32 %v2966, %v2962
      %v2968 = vrot.slane %v2967, 4
      %v2970 = vshll.u32 %v2904, 16
      %v2972 = vrot.slane %v2970, 5
      %v2973 = vsel %vm1339, %v2968, %v2972
      %v2975 = vshrl.u32 %v2905, 16
      %v2977 = vrot.slane %v2975, 4
      %v2978 = vshll.u32 %v2905, 16
      %v2980 = vrot.slane %v2978, 5
      %v2981 = vor.u32 %v2977, %v2980
      %v2982 = vrot.slane %v2981, 4
      %v2984 = vshll.u32 %v2906, 16
      %v2986 = vrot.slane %v2984, 5
      %v2987 = vsel %vm1339, %v2982, %v2986
      %v2988 = vshrl.u32 %v2906, 16
      %v2990 = vrot.slane %v2988, 4
      %v2991 = vor.u32 %v2990, %v2986
      %v2992 = vrot.slane %v2991, 4
      %v2994 = vshll.u32 %v2907, 16
      %v2996 = vrot.slane %v2994, 5
      %v2997 = vsel %vm1339, %v2992, %v2996
      %v2999 = vshrl.u32 %v2908, 16
      %v3001 = vrot.slane %v2999, 4
      %v3002 = vshll.u32 %v2908, 16
      %v3004 = vrot.slane %v3002, 5
      %v3005 = vor.u32 %v3001, %v3004
      %v3006 = vrot.slane %v3005, 4
      %v3008 = vshll.u32 %v2909, 16
      %v3010 = vrot.slane %v3008, 5
      %v3011 = vsel %vm1339, %v3006, %v3010
      %v3012 = vshrl.u32 %v2909, 16
      %v3014 = vrot.slane %v3012, 4
      %v3015 = vor.u32 %v3014, %v3010
      %v3016 = vrot.slane %v3015, 4
      %v3018 = vshll.u32 %v2910, 16
      %v3020 = vrot.slane %v3018, 5
      %v3021 = vsel %vm1339, %v3016, %v3020
      %v3023 = vshrl.u32 %v2911, 16
      %v3025 = vrot.slane %v3023, 4
      %v3026 = vshll.u32 %v2911, 16
      %v3028 = vrot.slane %v3026, 5
      %v3029 = vor.u32 %v3025, %v3028
      %v3030 = vrot.slane %v3029, 4
      %v3032 = vshll.u32 %v2912, 16
      %v3034 = vrot.slane %v3032, 5
      %v3035 = vsel %vm1339, %v3030, %v3034
      %v3036 = vshrl.u32 %v2912, 16
      %v3038 = vrot.slane %v3036, 4
      %v3039 = vor.u32 %v3038, %v3034
      %v3040 = vrot.slane %v3039, 4
      %v3042 = vshll.u32 %v2913, 16
      %v3044 = vrot.slane %v3042, 5
      %v3045 = vsel %vm1339, %v3040, %v3044
      %v3047 = vshrl.u32 %v2914, 16
      %v3049 = vrot.slane %v3047, 4
      %v3050 = vshll.u32 %v2914, 16
      %v3052 = vrot.slane %v3050, 5
      %v3053 = vor.u32 %v3049, %v3052
      %v3054 = vrot.slane %v3053, 4
      %v3056 = vshll.u32 %v2915, 16
      %v3058 = vrot.slane %v3056, 5
      %v3059 = vsel %vm1339, %v3054, %v3058
      %v3060 = vshrl.u32 %v2915, 16
      %v3062 = vrot.slane %v3060, 4
      %v3063 = vor.u32 %v3062, %v3058
      %v3064 = vrot.slane %v3063, 4
      %v3066 = vshll.u32 %v2916, 16
      %v3068 = vrot.slane %v3066, 5
      %v3069 = vsel %vm1339, %v3064, %v3068
      %v3071 = vshrl.u32 %v2917, 16
      %v3073 = vrot.slane %v3071, 4
      %v3074 = vshll.u32 %v2917, 16
      %v3076 = vrot.slane %v3074, 5
      %v3077 = vor.u32 %v3073, %v3076
      %v3078 = vrot.slane %v3077, 4
      %v3080 = vshll.u32 %v2918, 16
      %v3082 = vrot.slane %v3080, 5
      %v3083 = vsel %vm1339, %v3078, %v3082
      %v3084 = vshrl.u32 %v2918, 16
      %v3086 = vrot.slane %v3084, 4
      %v3087 = vor.u32 %v3086, %v3082
      %v3088 = vrot.slane %v3087, 4
      %v3090 = vshll.u32 %v2919, 16
      %v3092 = vrot.slane %v3090, 5
      %v3093 = vsel %vm1339, %v3088, %v3092
      %v3095 = vshrl.u32 %v2920, 16
      %v3097 = vrot.slane %v3095, 4
      %v3098 = vshll.u32 %v2920, 16
      %v3100 = vrot.slane %v3098, 5
      %v3101 = vor.u32 %v3097, %v3100
      %v3102 = vrot.slane %v3101, 4
      %v3104 = vshll.u32 %v2921, 16
      %v3106 = vrot.slane %v3104, 5
      %v3107 = vsel %vm1339, %v3102, %v3106
      %v3108 = vshrl.u32 %v2921, 16
      %v3110 = vrot.slane %v3108, 4
      %v3111 = vor.u32 %v3110, %v3106
      %v3112 = vrot.slane %v3111, 4
      %v3114 = vshll.u32 %v2922, 16
      %v3116 = vrot.slane %v3114, 5
      %v3117 = vsel %vm1339, %v3112, %v3116
      %v3119 = vshrl.u32 %v2923, 16
      %v3121 = vrot.slane %v3119, 4
      %v3122 = vshll.u32 %v2923, 16
      %v3124 = vrot.slane %v3122, 5
      %v3125 = vor.u32 %v3121, %v3124
      %v3126 = vrot.slane %v3125, 4
      %v3128 = vshll.u32 %v2924, 16
      %v3130 = vrot.slane %v3128, 5
      %v3131 = vsel %vm1339, %v3126, %v3130
      %v3132 = vshrl.u32 %v2924, 16
      %v3134 = vrot.slane %v3132, 4
      %v3135 = vor.u32 %v3134, %v3130
      %v3136 = vrot.slane %v3135, 4
      %v3138 = vshll.u32 %v2925, 16
      %v3140 = vrot.slane %v3138, 5
      %v3141 = vsel %vm1339, %v3136, %v3140
      %v3143 = vshrl.u32 %v2926, 16
      %v3145 = vrot.slane %v3143, 4
      %v3146 = vshll.u32 %v2926, 16
      %v3148 = vrot.slane %v3146, 5
      %v3149 = vor.u32 %v3145, %v3148
      %v3150 = vrot.slane %v3149, 4
      %v3152 = vshll.u32 %v2927, 16
      %v3154 = vrot.slane %v3152, 5
      %v3155 = vsel %vm1339, %v3150, %v3154
      %v3156 = vshrl.u32 %v2927, 16
      %v3158 = vrot.slane %v3156, 4
      %v3159 = vor.u32 %v3158, %v3154
      %v3160 = vrot.slane %v3159, 4
      %v3162 = vshll.u32 %v2928, 16
      %v3164 = vrot.slane %v3162, 5
      %v3165 = vsel %vm1339, %v3160, %v3164
      %v3167 = vshrl.u32 %v2929, 16
      %v3169 = vrot.slane %v3167, 4
      %v3170 = vshll.u32 %v2929, 16
      %v3172 = vrot.slane %v3170, 5
      %v3173 = vor.u32 %v3169, %v3172
      %v3174 = vrot.slane %v3173, 4
      %v3176 = vshll.u32 %v2930, 16
      %v3178 = vrot.slane %v3176, 5
      %v3179 = vsel %vm1339, %v3174, %v3178
      %v3180 = vshrl.u32 %v2930, 16
      %v3182 = vrot.slane %v3180, 4
      %v3183 = vor.u32 %v3182, %v3178
      %v3184 = vrot.slane %v3183, 4
      %v3186 = vshll.u32 %v2931, 16
      %v3188 = vrot.slane %v3186, 5
      %v3189 = vsel %vm1339, %v3184, %v3188
      %v3191 = vshrl.u32 %v2932, 16
      %v3193 = vrot.slane %v3191, 4
      %v3194 = vshll.u32 %v2932, 16
      %v3196 = vrot.slane %v3194, 5
      %v3197 = vor.u32 %v3193, %v3196
      %v3198 = vrot.slane %v3197, 4
      %v3200 = vshll.u32 %v2933, 16
      %v3202 = vrot.slane %v3200, 5
      %v3203 = vsel %vm1339, %v3198, %v3202
      %v3204 = vshrl.u32 %v2933, 16
      %v3206 = vrot.slane %v3204, 4
      %v3207 = vor.u32 %v3206, %v3202
      %v3208 = vrot.slane %v3207, 4
      %v3210 = vshll.u32 %v2934, 16
      %v3212 = vrot.slane %v3210, 5
      %v3213 = vsel %vm1339, %v3208, %v3212
      %v3215 = vshrl.u32 %v2935, 16
      %v3217 = vrot.slane %v3215, 4
      %v3218 = vshll.u32 %v2935, 16
      %v3220 = vrot.slane %v3218, 5
      %v3221 = vor.u32 %v3217, %v3220
      %v3222 = vrot.slane %v3221, 4
      %v3224 = vshll.u32 %v2936, 16
      %v3226 = vrot.slane %v3224, 5
      %v3227 = vsel %vm1339, %v3222, %v3226
      %v3228 = vshrl.u32 %v2936, 16
      %v3230 = vrot.slane %v3228, 4
      %v3231 = vor.u32 %v3230, %v3226
      %v3232 = vrot.slane %v3231, 4
      %v3234 = vshll.u32 %v2937, 16
      %v3236 = vrot.slane %v3234, 5
      %v3237 = vsel %vm1339, %v3232, %v3236
      %v3239 = vshrl.u32 %v2938, 16
      %v3241 = vrot.slane %v3239, 4
      %v3242 = vshll.u32 %v2938, 16
      %v3244 = vrot.slane %v3242, 5
      %v3245 = vor.u32 %v3241, %v3244
      %v3246 = vrot.slane %v3245, 4
      %v3248 = vshll.u32 %v2939, 16
      %v3250 = vrot.slane %v3248, 5
      %v3251 = vsel %vm1339, %v3246, %v3250
      %v3252 = vshrl.u32 %v2939, 16
      %v3254 = vrot.slane %v3252, 4
      %v3255 = vor.u32 %v3254, %v3250
      %v3256 = vrot.slane %v3255, 4
      %v3258 = vshll.u32 %v2940, 16
      %v3260 = vrot.slane %v3258, 5
      %v3261 = vsel %vm1339, %v3256, %v3260
      %v3263 = vshrl.u32 %v2941, 16
      %v3265 = vrot.slane %v3263, 4
      %v3266 = vshll.u32 %v2941, 16
      %v3268 = vrot.slane %v3266, 5
      %v3269 = vor.u32 %v3265, %v3268
      %v3270 = vrot.slane %v3269, 4
      %v3272 = vshll.u32 %v2942, 16
      %v3274 = vrot.slane %v3272, 5
      %v3275 = vsel %vm1339, %v3270, %v3274
      %v3276 = vshrl.u32 %v2942, 16
      %v3278 = vrot.slane %v3276, 4
      %v3279 = vor.u32 %v3278, %v3274
      %v3280 = vrot.slane %v3279, 4
      %v3282 = vshll.u32 %v2943, 16
      %v3284 = vrot.slane %v3282, 5
      %v3285 = vsel %vm1339, %v3280, %v3284
      %v3287 = vshrl.u32 %v2944, 16
      %v3289 = vrot.slane %v3287, 4
      %v3290 = vshll.u32 %v2944, 16
      %v3292 = vrot.slane %v3290, 5
      %v3293 = vor.u32 %v3289, %v3292
      %v3294 = vrot.slane %v3293, 4
      %v3296 = vshll.u32 %v2945, 16
      %v3298 = vrot.slane %v3296, 5
      %v3299 = vsel %vm1339, %v3294, %v3298
      %v3300 = vshrl.u32 %v2945, 16
      %v3302 = vrot.slane %v3300, 4
      %v3303 = vor.u32 %v3302, %v3298
      %v3304 = vrot.slane %v3303, 4
      %v3306 = vshll.u32 %v2946, 16
      %v3308 = vrot.slane %v3306, 5
      %v3309 = vsel %vm1339, %v3304, %v3308
      %v3311 = vshrl.u32 %v2947, 16
      %v3313 = vrot.slane %v3311, 4
      %v3314 = vshll.u32 %v2947, 16
      %v3316 = vrot.slane %v3314, 5
      %v3317 = vor.u32 %v3313, %v3316
      %v3318 = vrot.slane %v3317, 4
      %v3320 = vshll.u32 %v2948, 16
      %v3322 = vrot.slane %v3320, 5
      %v3323 = vsel %vm1339, %v3318, %v3322
      %v3324 = vshrl.u32 %v2948, 16
      %v3326 = vrot.slane %v3324, 4
      %v3327 = vor.u32 %v3326, %v3322
      %v3328 = vrot.slane %v3327, 4
      %v3330 = vshll.u32 %v2949, 16
      %v3332 = vrot.slane %v3330, 5
      %v3333 = vsel %vm1339, %v3328, %v3332
      %s3334 = scalar_lea.vmem %s2, 256
      %v3335 = vld [vmem:[%s3334] sm:$0xf]
      %v3336 = vld [vmem:[%s3334 + $0x4] sm:$0xf]
      %v3337 = vld [vmem:[%s3334 + $0x8] sm:$0xf]
      %v3338 = vld [vmem:[%s3334 + $0xc] sm:$0xf]
      %v3339 = vld [vmem:[%s3334 + $0x10] sm:$0xf]
      %v3340 = vld [vmem:[%s3334 + $0x14] sm:$0xf]
      %v3341 = vld [vmem:[%s3334 + $0x18] sm:$0xf]
      %v3342 = vld [vmem:[%s3334 + $0x1c] sm:$0xf]
      %v3343 = vld [vmem:[%s3334 + $0x20] sm:$0xf]
      %v3344 = vld [vmem:[%s3334 + $0x24] sm:$0xf]
      %v3345 = vld [vmem:[%s3334 + $0x28] sm:$0xf]
      %v3346 = vld [vmem:[%s3334 + $0x2c] sm:$0xf]
      %v3347 = vld [vmem:[%s3334 + $0x30] sm:$0xf]
      %v3348 = vld [vmem:[%s3334 + $0x34] sm:$0xf]
      %v3349 = vld [vmem:[%s3334 + $0x38] sm:$0xf]
      %v3350 = vld [vmem:[%s3334 + $0x3c] sm:$0xf]
      %v3351 = vunpack.c.l.b16 %v2963
      %v3352 = vunpack.c.l.b16 %v2973
      %v3353 = vunpack.c.l.b16 %v2987
      %v3354 = vunpack.c.l.b16 %v2997
      %v3355 = vunpack.c.l.b16 %v3011
      %v3356 = vunpack.c.l.b16 %v3021
      %v3357 = vunpack.c.l.b16 %v3035
      %v3358 = vunpack.c.l.b16 %v3045
      %v3359 = vunpack.c.l.b16 %v3059
      %v3360 = vunpack.c.l.b16 %v3069
      %v3361 = vunpack.c.l.b16 %v3083
      %v3362 = vunpack.c.l.b16 %v3093
      %v3363 = vunpack.c.l.b16 %v3107
      %v3364 = vunpack.c.l.b16 %v3117
      %v3365 = vunpack.c.l.b16 %v3131
      %v3366 = vunpack.c.l.b16 %v3141
      %v3367 = vunpack.c.l.b16 %v3155
      %v3368 = vunpack.c.l.b16 %v3165
      %v3369 = vunpack.c.l.b16 %v3179
      %v3370 = vunpack.c.l.b16 %v3189
      %v3371 = vunpack.c.l.b16 %v3203
      %v3372 = vunpack.c.l.b16 %v3213
      %v3373 = vunpack.c.l.b16 %v3227
      %v3374 = vunpack.c.l.b16 %v3237
      %v3375 = vunpack.c.l.b16 %v3251
      %v3376 = vunpack.c.l.b16 %v3261
      %v3377 = vunpack.c.l.b16 %v3275
      %v3378 = vunpack.c.l.b16 %v3285
      %v3379 = vunpack.c.l.b16 %v3299
      %v3380 = vunpack.c.l.b16 %v3309
      %v3381 = vunpack.c.l.b16 %v3323
      %v3382 = vunpack.c.l.b16 %v3333
      %v3383 = vpack.c.b16 %v3352, %v3351
      %v3384 = vpack.c.b16 %v3354, %v3353
      %v3385 = vpack.c.b16 %v3356, %v3355
      %v3386 = vpack.c.b16 %v3358, %v3357
      %v3387 = vpack.c.b16 %v3360, %v3359
      %v3388 = vpack.c.b16 %v3362, %v3361
      %v3389 = vpack.c.b16 %v3364, %v3363
      %v3390 = vpack.c.b16 %v3366, %v3365
      %v3391 = vpack.c.b16 %v3368, %v3367
      %v3392 = vpack.c.b16 %v3370, %v3369
      %v3393 = vpack.c.b16 %v3372, %v3371
      %v3394 = vpack.c.b16 %v3374, %v3373
      %v3395 = vpack.c.b16 %v3376, %v3375
      %v3396 = vpack.c.b16 %v3378, %v3377
      %v3397 = vpack.c.b16 %v3380, %v3379
      %v3398 = vpack.c.b16 %v3382, %v3381
      %v3431 = vunpack.c.l.b16 %v3335
      %v3432 = vunpack.c.l.b16 %v3336
      %v3433 = vunpack.c.l.b16 %v3337
      %v3434 = vunpack.c.l.b16 %v3338
      %v3435 = vunpack.c.l.b16 %v3339
      %v3436 = vunpack.c.l.b16 %v3340
      %v3437 = vunpack.c.l.b16 %v3341
      %v3438 = vunpack.c.l.b16 %v3342
      %v3439 = vunpack.c.l.b16 %v3343
      %v3440 = vunpack.c.l.b16 %v3344
      %v3441 = vunpack.c.l.b16 %v3345
      %v3442 = vunpack.c.l.b16 %v3346
      %v3443 = vunpack.c.l.b16 %v3347
      %v3444 = vunpack.c.l.b16 %v3348
      %v3445 = vunpack.c.l.b16 %v3349
      %v3446 = vunpack.c.l.b16 %v3350
      %v3447 = vpack.c.b16 %v3432, %v3431
      %v3448 = vpack.c.b16 %v3434, %v3433
      %v3449 = vpack.c.b16 %v3436, %v3435
      %v3450 = vpack.c.b16 %v3438, %v3437
      %v3451 = vpack.c.b16 %v3440, %v3439
      %v3452 = vpack.c.b16 %v3442, %v3441
      %v3453 = vpack.c.b16 %v3444, %v3443
      %v3454 = vpack.c.b16 %v3446, %v3445
      %3463 = vmatpush.bf16.msra.mxu0 %v3454
      %3464 = vmatpush.bf16.msra.mxu0 %v3453
      %3465 = vmatpush.bf16.msra.mxu0 %v3452
      %3466 = vmatpush.bf16.msra.mxu0 %v3451
      %3467 = vmatpush.bf16.msra.mxu0 %v3450
      %3468 = vmatpush.bf16.msra.mxu0 %v3449
      %3469 = vmatpush.bf16.msra.mxu0 %v3448
      %3470 = vmatpush.bf16.msra.mxu0 %v3447
      %3471 = vmatmul.bf16.gmra.mxu0 %v3383
      %v3472 = vpop.f32.mrf.mxu0
      %v3473 = vadd.f32 0.0, %v3472
      %v3474 = vpop.f32.mrf.mxu0
      %v3475 = vadd.f32 0.0, %v3474
      %3476 = vmatmul.bf16.gmra.mxu0 %v3384
      %v3477 = vpop.f32.mrf.mxu0
      %v3478 = vadd.f32 0.0, %v3477
      %v3479 = vpop.f32.mrf.mxu0
      %v3480 = vadd.f32 0.0, %v3479
      %3481 = vmatmul.bf16.gmra.mxu0 %v3385
      %v3482 = vpop.f32.mrf.mxu0
      %v3483 = vadd.f32 0.0, %v3482
      %v3484 = vpop.f32.mrf.mxu0
      %v3485 = vadd.f32 0.0, %v3484
      %3486 = vmatmul.bf16.gmra.mxu0 %v3386
      %v3487 = vpop.f32.mrf.mxu0
      %v3488 = vadd.f32 0.0, %v3487
      %v3489 = vpop.f32.mrf.mxu0
      %v3490 = vadd.f32 0.0, %v3489
      %3491 = vmatmul.bf16.gmra.mxu0 %v3387
      %v3492 = vpop.f32.mrf.mxu0
      %v3493 = vadd.f32 0.0, %v3492
      %v3494 = vpop.f32.mrf.mxu0
      %v3495 = vadd.f32 0.0, %v3494
      %3496 = vmatmul.bf16.gmra.mxu0 %v3388
      %v3497 = vpop.f32.mrf.mxu0
      %v3498 = vadd.f32 0.0, %v3497
      %v3499 = vpop.f32.mrf.mxu0
      %v3500 = vadd.f32 0.0, %v3499
      %3501 = vmatmul.bf16.gmra.mxu0 %v3389
      %v3502 = vpop.f32.mrf.mxu0
      %v3503 = vadd.f32 0.0, %v3502
      %v3504 = vpop.f32.mrf.mxu0
      %v3505 = vadd.f32 0.0, %v3504
      %3506 = vmatmul.bf16.gmra.mxu0 %v3390
      %v3507 = vpop.f32.mrf.mxu0
      %v3508 = vadd.f32 0.0, %v3507
      %v3509 = vpop.f32.mrf.mxu0
      %v3510 = vadd.f32 0.0, %v3509
      %3511 = vmatmul.bf16.gmra.mxu0 %v3391
      %v3512 = vpop.f32.mrf.mxu0
      %v3513 = vadd.f32 0.0, %v3512
      %v3514 = vpop.f32.mrf.mxu0
      %v3515 = vadd.f32 0.0, %v3514
      %3516 = vmatmul.bf16.gmra.mxu0 %v3392
      %v3517 = vpop.f32.mrf.mxu0
      %v3518 = vadd.f32 0.0, %v3517
      %v3519 = vpop.f32.mrf.mxu0
      %v3520 = vadd.f32 0.0, %v3519
      %3521 = vmatmul.bf16.gmra.mxu0 %v3393
      %v3522 = vpop.f32.mrf.mxu0
      %v3523 = vadd.f32 0.0, %v3522
      %v3524 = vpop.f32.mrf.mxu0
      %v3525 = vadd.f32 0.0, %v3524
      %3526 = vmatmul.bf16.gmra.mxu0 %v3394
      %v3527 = vpop.f32.mrf.mxu0
      %v3528 = vadd.f32 0.0, %v3527
      %v3529 = vpop.f32.mrf.mxu0
      %v3530 = vadd.f32 0.0, %v3529
      %3531 = vmatmul.bf16.gmra.mxu0 %v3395
      %v3532 = vpop.f32.mrf.mxu0
      %v3533 = vadd.f32 0.0, %v3532
      %v3534 = vpop.f32.mrf.mxu0
      %v3535 = vadd.f32 0.0, %v3534
      %3536 = vmatmul.bf16.gmra.mxu0 %v3396
      %v3537 = vpop.f32.mrf.mxu0
      %v3538 = vadd.f32 0.0, %v3537
      %v3539 = vpop.f32.mrf.mxu0
      %v3540 = vadd.f32 0.0, %v3539
      %3541 = vmatmul.bf16.gmra.mxu0 %v3397
      %v3542 = vpop.f32.mrf.mxu0
      %v3543 = vadd.f32 0.0, %v3542
      %v3544 = vpop.f32.mrf.mxu0
      %v3545 = vadd.f32 0.0, %v3544
      %3546 = vmatmul.bf16.gmra.mxu0 %v3398
      %v3547 = vpop.f32.mrf.mxu0
      %v3548 = vadd.f32 0.0, %v3547
      %v3549 = vpop.f32.mrf.mxu0
      %v3550 = vadd.f32 0.0, %v3549
      %3551 = vdwg.mxu0
      %v3552 = vadd.f32 %v2870, %v3473
      %v3553 = vadd.f32 %v2871, %v3475
      %v3554 = vadd.f32 %v2872, %v3478
      %v3555 = vadd.f32 %v2873, %v3480
      %v3556 = vadd.f32 %v2874, %v3483
      %v3557 = vadd.f32 %v2875, %v3485
      %v3558 = vadd.f32 %v2876, %v3488
      %v3559 = vadd.f32 %v2877, %v3490
      %v3560 = vadd.f32 %v2878, %v3493
      %v3561 = vadd.f32 %v2879, %v3495
      %v3562 = vadd.f32 %v2880, %v3498
      %v3563 = vadd.f32 %v2881, %v3500
      %v3564 = vadd.f32 %v2882, %v3503
      %v3565 = vadd.f32 %v2883, %v3505
      %v3566 = vadd.f32 %v2884, %v3508
      %v3567 = vadd.f32 %v2885, %v3510
      %v3568 = vadd.f32 %v2886, %v3513
      %v3569 = vadd.f32 %v2887, %v3515
      %v3570 = vadd.f32 %v2888, %v3518
      %v3571 = vadd.f32 %v2889, %v3520
      %v3572 = vadd.f32 %v2890, %v3523
      %v3573 = vadd.f32 %v2891, %v3525
      %v3574 = vadd.f32 %v2892, %v3528
      %v3575 = vadd.f32 %v2893, %v3530
      %v3576 = vadd.f32 %v2894, %v3533
      %v3577 = vadd.f32 %v2895, %v3535
      %v3578 = vadd.f32 %v2896, %v3538
      %v3579 = vadd.f32 %v2897, %v3540
      %v3580 = vadd.f32 %v2898, %v3543
      %v3581 = vadd.f32 %v2899, %v3545
      %v3582 = vadd.f32 %v2900, %v3548
      %v3583 = vadd.f32 %v2901, %v3550
      %v3584 = vld [vmem:[%s1155] sm:$0xe]
      %v3585 = vld [vmem:[%s1155 + $0xc] sm:$0xe]
      %v3586 = vld [vmem:[%s1155 + $0x18] sm:$0xe]
      %v3587 = vld [vmem:[%s1155 + $0x24] sm:$0xe]
      %v3588 = vld [vmem:[%s1155 + $0x30] sm:$0xe]
      %v3589 = vld [vmem:[%s1155 + $0x3c] sm:$0xe]
      %v3590 = vld [vmem:[%s1155 + $0x48] sm:$0xe]
      %v3591 = vld [vmem:[%s1155 + $0x54] sm:$0xe]
      %v3592 = vld [vmem:[%s1155 + $0x60] sm:$0xe]
      %v3593 = vld [vmem:[%s1155 + $0x6c] sm:$0xe]
      %v3594 = vld [vmem:[%s1155 + $0x78] sm:$0xe]
      %v3595 = vld [vmem:[%s1155 + $0x84] sm:$0xe]
      %v3596 = vld [vmem:[%s1155 + $0x90] sm:$0xe]
      %v3597 = vld [vmem:[%s1155 + $0x9c] sm:$0xe]
      %v3598 = vld [vmem:[%s1155 + $0xa8] sm:$0xe]
      %v3599 = vld [vmem:[%s1155 + $0xb4] sm:$0xe]
      %v3648 = vrot.slane %v3584, 5
      %v3649 = vrot.slane %v3648, 4
      %v3650 = vrot.slane %v2903, 5
      %v3651 = vsel %vm2225, %v3649, %v3650
      %v3652 = vrot.slane %v3650, 4
      %v3653 = vrot.slane %v2904, 5
      %v3654 = vsel %vm2225, %v3652, %v3653
      %v3655 = vrot.slane %v3585, 5
      %v3656 = vrot.slane %v3655, 4
      %v3657 = vrot.slane %v2906, 5
      %v3658 = vsel %vm2225, %v3656, %v3657
      %v3659 = vrot.slane %v3657, 4
      %v3660 = vrot.slane %v2907, 5
      %v3661 = vsel %vm2225, %v3659, %v3660
      %v3662 = vrot.slane %v3586, 5
      %v3663 = vrot.slane %v3662, 4
      %v3664 = vrot.slane %v2909, 5
      %v3665 = vsel %vm2225, %v3663, %v3664
      %v3666 = vrot.slane %v3664, 4
      %v3667 = vrot.slane %v2910, 5
      %v3668 = vsel %vm2225, %v3666, %v3667
      %v3669 = vrot.slane %v3587, 5
      %v3670 = vrot.slane %v3669, 4
      %v3671 = vrot.slane %v2912, 5
      %v3672 = vsel %vm2225, %v3670, %v3671
      %v3673 = vrot.slane %v3671, 4
      %v3674 = vrot.slane %v2913, 5
      %v3675 = vsel %vm2225, %v3673, %v3674
      %v3676 = vrot.slane %v3588, 5
      %v3677 = vrot.slane %v3676, 4
      %v3678 = vrot.slane %v2915, 5
      %v3679 = vsel %vm2225, %v3677, %v3678
      %v3680 = vrot.slane %v3678, 4
      %v3681 = vrot.slane %v2916, 5
      %v3682 = vsel %vm2225, %v3680, %v3681
      %v3683 = vrot.slane %v3589, 5
      %v3684 = vrot.slane %v3683, 4
      %v3685 = vrot.slane %v2918, 5
      %v3686 = vsel %vm2225, %v3684, %v3685
      %v3687 = vrot.slane %v3685, 4
      %v3688 = vrot.slane %v2919, 5
      %v3689 = vsel %vm2225, %v3687, %v3688
      %v3690 = vrot.slane %v3590, 5
      %v3691 = vrot.slane %v3690, 4
      %v3692 = vrot.slane %v2921, 5
      %v3693 = vsel %vm2225, %v3691, %v3692
      %v3694 = vrot.slane %v3692, 4
      %v3695 = vrot.slane %v2922, 5
      %v3696 = vsel %vm2225, %v3694, %v3695
      %v3697 = vrot.slane %v3591, 5
      %v3698 = vrot.slane %v3697, 4
      %v3699 = vrot.slane %v2924, 5
      %v3700 = vsel %vm2225, %v3698, %v3699
      %v3701 = vrot.slane %v3699, 4
      %v3702 = vrot.slane %v2925, 5
      %v3703 = vsel %vm2225, %v3701, %v3702
      %v3704 = vrot.slane %v3592, 5
      %v3705 = vrot.slane %v3704, 4
      %v3706 = vrot.slane %v2927, 5
      %v3707 = vsel %vm2225, %v3705, %v3706
      %v3708 = vrot.slane %v3706, 4
      %v3709 = vrot.slane %v2928, 5
      %v3710 = vsel %vm2225, %v3708, %v3709
      %v3711 = vrot.slane %v3593, 5
      %v3712 = vrot.slane %v3711, 4
      %v3713 = vrot.slane %v2930, 5
      %v3714 = vsel %vm2225, %v3712, %v3713
      %v3715 = vrot.slane %v3713, 4
      %v3716 = vrot.slane %v2931, 5
      %v3717 = vsel %vm2225, %v3715, %v3716
      %v3718 = vrot.slane %v3594, 5
      %v3719 = vrot.slane %v3718, 4
      %v3720 = vrot.slane %v2933, 5
      %v3721 = vsel %vm2225, %v3719, %v3720
      %v3722 = vrot.slane %v3720, 4
      %v3723 = vrot.slane %v2934, 5
      %v3724 = vsel %vm2225, %v3722, %v3723
      %v3725 = vrot.slane %v3595, 5
      %v3726 = vrot.slane %v3725, 4
      %v3727 = vrot.slane %v2936, 5
      %v3728 = vsel %vm2225, %v3726, %v3727
      %v3729 = vrot.slane %v3727, 4
      %v3730 = vrot.slane %v2937, 5
      %v3731 = vsel %vm2225, %v3729, %v3730
      %v3732 = vrot.slane %v3596, 5
      %v3733 = vrot.slane %v3732, 4
      %v3734 = vrot.slane %v2939, 5
      %v3735 = vsel %vm2225, %v3733, %v3734
      %v3736 = vrot.slane %v3734, 4
      %v3737 = vrot.slane %v2940, 5
      %v3738 = vsel %vm2225, %v3736, %v3737
      %v3739 = vrot.slane %v3597, 5
      %v3740 = vrot.slane %v3739, 4
      %v3741 = vrot.slane %v2942, 5
      %v3742 = vsel %vm2225, %v3740, %v3741
      %v3743 = vrot.slane %v3741, 4
      %v3744 = vrot.slane %v2943, 5
      %v3745 = vsel %vm2225, %v3743, %v3744
      %v3746 = vrot.slane %v3598, 5
      %v3747 = vrot.slane %v3746, 4
      %v3748 = vrot.slane %v2945, 5
      %v3749 = vsel %vm2225, %v3747, %v3748
      %v3750 = vrot.slane %v3748, 4
      %v3751 = vrot.slane %v2946, 5
      %v3752 = vsel %vm2225, %v3750, %v3751
      %v3753 = vrot.slane %v3599, 5
      %v3754 = vrot.slane %v3753, 4
      %v3755 = vrot.slane %v2948, 5
      %v3756 = vsel %vm2225, %v3754, %v3755
      %v3757 = vrot.slane %v3755, 4
      %v3758 = vrot.slane %v2949, 5
      %v3759 = vsel %vm2225, %v3757, %v3758
      %s3760 = scalar_lea.vmem %s2, 320
      %v3761 = vld [vmem:[%s3760] sm:$0xf]
      %v3762 = vld [vmem:[%s3760 + $0x4] sm:$0xf]
      %v3763 = vld [vmem:[%s3760 + $0x8] sm:$0xf]
      %v3764 = vld [vmem:[%s3760 + $0xc] sm:$0xf]
      %v3765 = vld [vmem:[%s3760 + $0x10] sm:$0xf]
      %v3766 = vld [vmem:[%s3760 + $0x14] sm:$0xf]
      %v3767 = vld [vmem:[%s3760 + $0x18] sm:$0xf]
      %v3768 = vld [vmem:[%s3760 + $0x1c] sm:$0xf]
      %v3769 = vld [vmem:[%s3760 + $0x20] sm:$0xf]
      %v3770 = vld [vmem:[%s3760 + $0x24] sm:$0xf]
      %v3771 = vld [vmem:[%s3760 + $0x28] sm:$0xf]
      %v3772 = vld [vmem:[%s3760 + $0x2c] sm:$0xf]
      %v3773 = vld [vmem:[%s3760 + $0x30] sm:$0xf]
      %v3774 = vld [vmem:[%s3760 + $0x34] sm:$0xf]
      %v3775 = vld [vmem:[%s3760 + $0x38] sm:$0xf]
      %v3776 = vld [vmem:[%s3760 + $0x3c] sm:$0xf]
      %v3777 = vunpack.c.l.b16 %v3651
      %v3778 = vunpack.c.l.b16 %v3654
      %v3779 = vunpack.c.l.b16 %v3658
      %v3780 = vunpack.c.l.b16 %v3661
      %v3781 = vunpack.c.l.b16 %v3665
      %v3782 = vunpack.c.l.b16 %v3668
      %v3783 = vunpack.c.l.b16 %v3672
      %v3784 = vunpack.c.l.b16 %v3675
      %v3785 = vunpack.c.l.b16 %v3679
      %v3786 = vunpack.c.l.b16 %v3682
      %v3787 = vunpack.c.l.b16 %v3686
      %v3788 = vunpack.c.l.b16 %v3689
      %v3789 = vunpack.c.l.b16 %v3693
      %v3790 = vunpack.c.l.b16 %v3696
      %v3791 = vunpack.c.l.b16 %v3700
      %v3792 = vunpack.c.l.b16 %v3703
      %v3793 = vunpack.c.l.b16 %v3707
      %v3794 = vunpack.c.l.b16 %v3710
      %v3795 = vunpack.c.l.b16 %v3714
      %v3796 = vunpack.c.l.b16 %v3717
      %v3797 = vunpack.c.l.b16 %v3721
      %v3798 = vunpack.c.l.b16 %v3724
      %v3799 = vunpack.c.l.b16 %v3728
      %v3800 = vunpack.c.l.b16 %v3731
      %v3801 = vunpack.c.l.b16 %v3735
      %v3802 = vunpack.c.l.b16 %v3738
      %v3803 = vunpack.c.l.b16 %v3742
      %v3804 = vunpack.c.l.b16 %v3745
      %v3805 = vunpack.c.l.b16 %v3749
      %v3806 = vunpack.c.l.b16 %v3752
      %v3807 = vunpack.c.l.b16 %v3756
      %v3808 = vunpack.c.l.b16 %v3759
      %v3809 = vpack.c.b16 %v3778, %v3777
      %v3810 = vpack.c.b16 %v3780, %v3779
      %v3811 = vpack.c.b16 %v3782, %v3781
      %v3812 = vpack.c.b16 %v3784, %v3783
      %v3813 = vpack.c.b16 %v3786, %v3785
      %v3814 = vpack.c.b16 %v3788, %v3787
      %v3815 = vpack.c.b16 %v3790, %v3789
      %v3816 = vpack.c.b16 %v3792, %v3791
      %v3817 = vpack.c.b16 %v3794, %v3793
      %v3818 = vpack.c.b16 %v3796, %v3795
      %v3819 = vpack.c.b16 %v3798, %v3797
      %v3820 = vpack.c.b16 %v3800, %v3799
      %v3821 = vpack.c.b16 %v3802, %v3801
      %v3822 = vpack.c.b16 %v3804, %v3803
      %v3823 = vpack.c.b16 %v3806, %v3805
      %v3824 = vpack.c.b16 %v3808, %v3807
      %v3857 = vunpack.c.l.b16 %v3761
      %v3858 = vunpack.c.l.b16 %v3762
      %v3859 = vunpack.c.l.b16 %v3763
      %v3860 = vunpack.c.l.b16 %v3764
      %v3861 = vunpack.c.l.b16 %v3765
      %v3862 = vunpack.c.l.b16 %v3766
      %v3863 = vunpack.c.l.b16 %v3767
      %v3864 = vunpack.c.l.b16 %v3768
      %v3865 = vunpack.c.l.b16 %v3769
      %v3866 = vunpack.c.l.b16 %v3770
      %v3867 = vunpack.c.l.b16 %v3771
      %v3868 = vunpack.c.l.b16 %v3772
      %v3869 = vunpack.c.l.b16 %v3773
      %v3870 = vunpack.c.l.b16 %v3774
      %v3871 = vunpack.c.l.b16 %v3775
      %v3872 = vunpack.c.l.b16 %v3776
      %v3873 = vpack.c.b16 %v3858, %v3857
      %v3874 = vpack.c.b16 %v3860, %v3859
      %v3875 = vpack.c.b16 %v3862, %v3861
      %v3876 = vpack.c.b16 %v3864, %v3863
      %v3877 = vpack.c.b16 %v3866, %v3865
      %v3878 = vpack.c.b16 %v3868, %v3867
      %v3879 = vpack.c.b16 %v3870, %v3869
      %v3880 = vpack.c.b16 %v3872, %v3871
      %3889 = vmatpush.bf16.msra.mxu0 %v3880
      %3890 = vmatpush.bf16.msra.mxu0 %v3879
      %3891 = vmatpush.bf16.msra.mxu0 %v3878
      %3892 = vmatpush.bf16.msra.mxu0 %v3877
      %3893 = vmatpush.bf16.msra.mxu0 %v3876
      %3894 = vmatpush.bf16.msra.mxu0 %v3875
      %3895 = vmatpush.bf16.msra.mxu0 %v3874
      %3896 = vmatpush.bf16.msra.mxu0 %v3873
      %3897 = vmatmul.bf16.gmra.mxu0 %v3809
      %v3898 = vpop.f32.mrf.mxu0
      %v3899 = vadd.f32 0.0, %v3898
      %v3900 = vpop.f32.mrf.mxu0
      %v3901 = vadd.f32 0.0, %v3900
      %3902 = vmatmul.bf16.gmra.mxu0 %v3810
      %v3903 = vpop.f32.mrf.mxu0
      %v3904 = vadd.f32 0.0, %v3903
      %v3905 = vpop.f32.mrf.mxu0
      %v3906 = vadd.f32 0.0, %v3905
      %3907 = vmatmul.bf16.gmra.mxu0 %v3811
      %v3908 = vpop.f32.mrf.mxu0
      %v3909 = vadd.f32 0.0, %v3908
      %v3910 = vpop.f32.mrf.mxu0
      %v3911 = vadd.f32 0.0, %v3910
      %3912 = vmatmul.bf16.gmra.mxu0 %v3812
      %v3913 = vpop.f32.mrf.mxu0
      %v3914 = vadd.f32 0.0, %v3913
      %v3915 = vpop.f32.mrf.mxu0
      %v3916 = vadd.f32 0.0, %v3915
      %3917 = vmatmul.bf16.gmra.mxu0 %v3813
      %v3918 = vpop.f32.mrf.mxu0
      %v3919 = vadd.f32 0.0, %v3918
      %v3920 = vpop.f32.mrf.mxu0
      %v3921 = vadd.f32 0.0, %v3920
      %3922 = vmatmul.bf16.gmra.mxu0 %v3814
      %v3923 = vpop.f32.mrf.mxu0
      %v3924 = vadd.f32 0.0, %v3923
      %v3925 = vpop.f32.mrf.mxu0
      %v3926 = vadd.f32 0.0, %v3925
      %3927 = vmatmul.bf16.gmra.mxu0 %v3815
      %v3928 = vpop.f32.mrf.mxu0
      %v3929 = vadd.f32 0.0, %v3928
      %v3930 = vpop.f32.mrf.mxu0
      %v3931 = vadd.f32 0.0, %v3930
      %3932 = vmatmul.bf16.gmra.mxu0 %v3816
      %v3933 = vpop.f32.mrf.mxu0
      %v3934 = vadd.f32 0.0, %v3933
      %v3935 = vpop.f32.mrf.mxu0
      %v3936 = vadd.f32 0.0, %v3935
      %3937 = vmatmul.bf16.gmra.mxu0 %v3817
      %v3938 = vpop.f32.mrf.mxu0
      %v3939 = vadd.f32 0.0, %v3938
      %v3940 = vpop.f32.mrf.mxu0
      %v3941 = vadd.f32 0.0, %v3940
      %3942 = vmatmul.bf16.gmra.mxu0 %v3818
      %v3943 = vpop.f32.mrf.mxu0
      %v3944 = vadd.f32 0.0, %v3943
      %v3945 = vpop.f32.mrf.mxu0
      %v3946 = vadd.f32 0.0, %v3945
      %3947 = vmatmul.bf16.gmra.mxu0 %v3819
      %v3948 = vpop.f32.mrf.mxu0
      %v3949 = vadd.f32 0.0, %v3948
      %v3950 = vpop.f32.mrf.mxu0
      %v3951 = vadd.f32 0.0, %v3950
      %3952 = vmatmul.bf16.gmra.mxu0 %v3820
      %v3953 = vpop.f32.mrf.mxu0
      %v3954 = vadd.f32 0.0, %v3953
      %v3955 = vpop.f32.mrf.mxu0
      %v3956 = vadd.f32 0.0, %v3955
      %3957 = vmatmul.bf16.gmra.mxu0 %v3821
      %v3958 = vpop.f32.mrf.mxu0
      %v3959 = vadd.f32 0.0, %v3958
      %v3960 = vpop.f32.mrf.mxu0
      %v3961 = vadd.f32 0.0, %v3960
      %3962 = vmatmul.bf16.gmra.mxu0 %v3822
      %v3963 = vpop.f32.mrf.mxu0
      %v3964 = vadd.f32 0.0, %v3963
      %v3965 = vpop.f32.mrf.mxu0
      %v3966 = vadd.f32 0.0, %v3965
      %3967 = vmatmul.bf16.gmra.mxu0 %v3823
      %v3968 = vpop.f32.mrf.mxu0
      %v3969 = vadd.f32 0.0, %v3968
      %v3970 = vpop.f32.mrf.mxu0
      %v3971 = vadd.f32 0.0, %v3970
      %3972 = vmatmul.bf16.gmra.mxu0 %v3824
      %v3973 = vpop.f32.mrf.mxu0
      %v3974 = vadd.f32 0.0, %v3973
      %v3975 = vpop.f32.mrf.mxu0
      %v3976 = vadd.f32 0.0, %v3975
      %3977 = vdwg.mxu0
      %v3978 = vadd.f32 %v3552, %v3899
      %v3979 = vadd.f32 %v3553, %v3901
      %v3980 = vadd.f32 %v3554, %v3904
      %v3981 = vadd.f32 %v3555, %v3906
      %v3982 = vadd.f32 %v3556, %v3909
      %v3983 = vadd.f32 %v3557, %v3911
      %v3984 = vadd.f32 %v3558, %v3914
      %v3985 = vadd.f32 %v3559, %v3916
      %v3986 = vadd.f32 %v3560, %v3919
      %v3987 = vadd.f32 %v3561, %v3921
      %v3988 = vadd.f32 %v3562, %v3924
      %v3989 = vadd.f32 %v3563, %v3926
      %v3990 = vadd.f32 %v3564, %v3929
      %v3991 = vadd.f32 %v3565, %v3931
      %v3992 = vadd.f32 %v3566, %v3934
      %v3993 = vadd.f32 %v3567, %v3936
      %v3994 = vadd.f32 %v3568, %v3939
      %v3995 = vadd.f32 %v3569, %v3941
      %v3996 = vadd.f32 %v3570, %v3944
      %v3997 = vadd.f32 %v3571, %v3946
      %v3998 = vadd.f32 %v3572, %v3949
      %v3999 = vadd.f32 %v3573, %v3951
      %v4000 = vadd.f32 %v3574, %v3954
      %v4001 = vadd.f32 %v3575, %v3956
      %v4002 = vadd.f32 %v3576, %v3959
      %v4003 = vadd.f32 %v3577, %v3961
      %v4004 = vadd.f32 %v3578, %v3964
      %v4005 = vadd.f32 %v3579, %v3966
      %v4006 = vadd.f32 %v3580, %v3969
      %v4007 = vadd.f32 %v3581, %v3971
      %v4008 = vadd.f32 %v3582, %v3974
      %v4009 = vadd.f32 %v3583, %v3976
      %s4010 = scalar_lea.vmem [#allocation2], 24
      %v4011 = vld [vmem:[%s4010] sm:$0xf]
      %v4012 = vld [vmem:[%s4010 + $0x4] sm:$0xf]
      %v4013 = vld [vmem:[%s4010 + $0xc] sm:$0xf]
      %v4014 = vld [vmem:[%s4010 + $0x10] sm:$0xf]
      %v4015 = vld [vmem:[%s4010 + $0x18] sm:$0xf]
      %v4016 = vld [vmem:[%s4010 + $0x1c] sm:$0xf]
      %v4017 = vld [vmem:[%s4010 + $0x24] sm:$0xf]
      %v4018 = vld [vmem:[%s4010 + $0x28] sm:$0xf]
      %v4019 = vld [vmem:[%s4010 + $0x30] sm:$0xf]
      %v4020 = vld [vmem:[%s4010 + $0x34] sm:$0xf]
      %v4021 = vld [vmem:[%s4010 + $0x3c] sm:$0xf]
      %v4022 = vld [vmem:[%s4010 + $0x40] sm:$0xf]
      %v4023 = vld [vmem:[%s4010 + $0x48] sm:$0xf]
      %v4024 = vld [vmem:[%s4010 + $0x4c] sm:$0xf]
      %v4025 = vld [vmem:[%s4010 + $0x54] sm:$0xf]
      %v4026 = vld [vmem:[%s4010 + $0x58] sm:$0xf]
      %v4027 = vld [vmem:[%s4010 + $0x60] sm:$0xf]
      %v4028 = vld [vmem:[%s4010 + $0x64] sm:$0xf]
      %v4029 = vld [vmem:[%s4010 + $0x6c] sm:$0xf]
      %v4030 = vld [vmem:[%s4010 + $0x70] sm:$0xf]
      %v4031 = vld [vmem:[%s4010 + $0x78] sm:$0xf]
      %v4032 = vld [vmem:[%s4010 + $0x7c] sm:$0xf]
      %v4033 = vld [vmem:[%s4010 + $0x84] sm:$0xf]
      %v4034 = vld [vmem:[%s4010 + $0x88] sm:$0xf]
      %v4035 = vld [vmem:[%s4010 + $0x90] sm:$0xf]
      %v4036 = vld [vmem:[%s4010 + $0x94] sm:$0xf]
      %v4037 = vld [vmem:[%s4010 + $0x9c] sm:$0xf]
      %v4038 = vld [vmem:[%s4010 + $0xa0] sm:$0xf]
      %v4039 = vld [vmem:[%s4010 + $0xa8] sm:$0xf]
      %v4040 = vld [vmem:[%s4010 + $0xac] sm:$0xf]
      %v4041 = vld [vmem:[%s4010 + $0xb4] sm:$0xf]
      %v4042 = vld [vmem:[%s4010 + $0xb8] sm:$0xf]
      %s4043 = scalar_lea.vmem %s2, 384
      %v4044 = vld [vmem:[%s4043] sm:$0xf]
      %v4045 = vld [vmem:[%s4043 + $0x4] sm:$0xf]
      %v4046 = vld [vmem:[%s4043 + $0x8] sm:$0xf]
      %v4047 = vld [vmem:[%s4043 + $0xc] sm:$0xf]
      %v4048 = vld [vmem:[%s4043 + $0x10] sm:$0xf]
      %v4049 = vld [vmem:[%s4043 + $0x14] sm:$0xf]
      %v4050 = vld [vmem:[%s4043 + $0x18] sm:$0xf]
      %v4051 = vld [vmem:[%s4043 + $0x1c] sm:$0xf]
      %v4052 = vld [vmem:[%s4043 + $0x20] sm:$0xf]
      %v4053 = vld [vmem:[%s4043 + $0x24] sm:$0xf]
      %v4054 = vld [vmem:[%s4043 + $0x28] sm:$0xf]
      %v4055 = vld [vmem:[%s4043 + $0x2c] sm:$0xf]
      %v4056 = vld [vmem:[%s4043 + $0x30] sm:$0xf]
      %v4057 = vld [vmem:[%s4043 + $0x34] sm:$0xf]
      %v4058 = vld [vmem:[%s4043 + $0x38] sm:$0xf]
      %v4059 = vld [vmem:[%s4043 + $0x3c] sm:$0xf]
      %v4092 = vunpack.c.l.b16 %v4011
      %v4093 = vunpack.c.l.b16 %v4012
      %v4094 = vunpack.c.l.b16 %v4013
      %v4095 = vunpack.c.l.b16 %v4014
      %v4096 = vunpack.c.l.b16 %v4015
      %v4097 = vunpack.c.l.b16 %v4016
      %v4098 = vunpack.c.l.b16 %v4017
      %v4099 = vunpack.c.l.b16 %v4018
      %v4100 = vunpack.c.l.b16 %v4019
      %v4101 = vunpack.c.l.b16 %v4020
      %v4102 = vunpack.c.l.b16 %v4021
      %v4103 = vunpack.c.l.b16 %v4022
      %v4104 = vunpack.c.l.b16 %v4023
      %v4105 = vunpack.c.l.b16 %v4024
      %v4106 = vunpack.c.l.b16 %v4025
      %v4107 = vunpack.c.l.b16 %v4026
      %v4108 = vunpack.c.l.b16 %v4027
      %v4109 = vunpack.c.l.b16 %v4028
      %v4110 = vunpack.c.l.b16 %v4029
      %v4111 = vunpack.c.l.b16 %v4030
      %v4112 = vunpack.c.l.b16 %v4031
      %v4113 = vunpack.c.l.b16 %v4032
      %v4114 = vunpack.c.l.b16 %v4033
      %v4115 = vunpack.c.l.b16 %v4034
      %v4116 = vunpack.c.l.b16 %v4035
      %v4117 = vunpack.c.l.b16 %v4036
      %v4118 = vunpack.c.l.b16 %v4037
      %v4119 = vunpack.c.l.b16 %v4038
      %v4120 = vunpack.c.l.b16 %v4039
      %v4121 = vunpack.c.l.b16 %v4040
      %v4122 = vunpack.c.l.b16 %v4041
      %v4123 = vunpack.c.l.b16 %v4042
      %v4124 = vpack.c.b16 %v4093, %v4092
      %v4125 = vpack.c.b16 %v4095, %v4094
      %v4126 = vpack.c.b16 %v4097, %v4096
      %v4127 = vpack.c.b16 %v4099, %v4098
      %v4128 = vpack.c.b16 %v4101, %v4100
      %v4129 = vpack.c.b16 %v4103, %v4102
      %v4130 = vpack.c.b16 %v4105, %v4104
      %v4131 = vpack.c.b16 %v4107, %v4106
      %v4132 = vpack.c.b16 %v4109, %v4108
      %v4133 = vpack.c.b16 %v4111, %v4110
      %v4134 = vpack.c.b16 %v4113, %v4112
      %v4135 = vpack.c.b16 %v4115, %v4114
      %v4136 = vpack.c.b16 %v4117, %v4116
      %v4137 = vpack.c.b16 %v4119, %v4118
      %v4138 = vpack.c.b16 %v4121, %v4120
      %v4139 = vpack.c.b16 %v4123, %v4122
      %v4172 = vunpack.c.l.b16 %v4044
      %v4173 = vunpack.c.l.b16 %v4045
      %v4174 = vunpack.c.l.b16 %v4046
      %v4175 = vunpack.c.l.b16 %v4047
      %v4176 = vunpack.c.l.b16 %v4048
      %v4177 = vunpack.c.l.b16 %v4049
      %v4178 = vunpack.c.l.b16 %v4050
      %v4179 = vunpack.c.l.b16 %v4051
      %v4180 = vunpack.c.l.b16 %v4052
      %v4181 = vunpack.c.l.b16 %v4053
      %v4182 = vunpack.c.l.b16 %v4054
      %v4183 = vunpack.c.l.b16 %v4055
      %v4184 = vunpack.c.l.b16 %v4056
      %v4185 = vunpack.c.l.b16 %v4057
      %v4186 = vunpack.c.l.b16 %v4058
      %v4187 = vunpack.c.l.b16 %v4059
      %v4188 = vpack.c.b16 %v4173, %v4172
      %v4189 = vpack.c.b16 %v4175, %v4174
      %v4190 = vpack.c.b16 %v4177, %v4176
      %v4191 = vpack.c.b16 %v4179, %v4178
      %v4192 = vpack.c.b16 %v4181, %v4180
      %v4193 = vpack.c.b16 %v4183, %v4182
      %v4194 = vpack.c.b16 %v4185, %v4184
      %v4195 = vpack.c.b16 %v4187, %v4186
      %4204 = vmatpush.bf16.msra.mxu0 %v4195
      %4205 = vmatpush.bf16.msra.mxu0 %v4194
      %4206 = vmatpush.bf16.msra.mxu0 %v4193
      %4207 = vmatpush.bf16.msra.mxu0 %v4192
      %4208 = vmatpush.bf16.msra.mxu0 %v4191
      %4209 = vmatpush.bf16.msra.mxu0 %v4190
      %4210 = vmatpush.bf16.msra.mxu0 %v4189
      %4211 = vmatpush.bf16.msra.mxu0 %v4188
      %4212 = vmatmul.bf16.gmra.mxu0 %v4124
      %v4213 = vpop.f32.mrf.mxu0
      %v4214 = vadd.f32 0.0, %v4213
      %v4215 = vpop.f32.mrf.mxu0
      %v4216 = vadd.f32 0.0, %v4215
      %4217 = vmatmul.bf16.gmra.mxu0 %v4125
      %v4218 = vpop.f32.mrf.mxu0
      %v4219 = vadd.f32 0.0, %v4218
      %v4220 = vpop.f32.mrf.mxu0
      %v4221 = vadd.f32 0.0, %v4220
      %4222 = vmatmul.bf16.gmra.mxu0 %v4126
      %v4223 = vpop.f32.mrf.mxu0
      %v4224 = vadd.f32 0.0, %v4223
      %v4225 = vpop.f32.mrf.mxu0
      %v4226 = vadd.f32 0.0, %v4225
      %4227 = vmatmul.bf16.gmra.mxu0 %v4127
      %v4228 = vpop.f32.mrf.mxu0
      %v4229 = vadd.f32 0.0, %v4228
      %v4230 = vpop.f32.mrf.mxu0
      %v4231 = vadd.f32 0.0, %v4230
      %4232 = vmatmul.bf16.gmra.mxu0 %v4128
      %v4233 = vpop.f32.mrf.mxu0
      %v4234 = vadd.f32 0.0, %v4233
      %v4235 = vpop.f32.mrf.mxu0
      %v4236 = vadd.f32 0.0, %v4235
      %4237 = vmatmul.bf16.gmra.mxu0 %v4129
      %v4238 = vpop.f32.mrf.mxu0
      %v4239 = vadd.f32 0.0, %v4238
      %v4240 = vpop.f32.mrf.mxu0
      %v4241 = vadd.f32 0.0, %v4240
      %4242 = vmatmul.bf16.gmra.mxu0 %v4130
      %v4243 = vpop.f32.mrf.mxu0
      %v4244 = vadd.f32 0.0, %v4243
      %v4245 = vpop.f32.mrf.mxu0
      %v4246 = vadd.f32 0.0, %v4245
      %4247 = vmatmul.bf16.gmra.mxu0 %v4131
      %v4248 = vpop.f32.mrf.mxu0
      %v4249 = vadd.f32 0.0, %v4248
      %v4250 = vpop.f32.mrf.mxu0
      %v4251 = vadd.f32 0.0, %v4250
      %4252 = vmatmul.bf16.gmra.mxu0 %v4132
      %v4253 = vpop.f32.mrf.mxu0
      %v4254 = vadd.f32 0.0, %v4253
      %v4255 = vpop.f32.mrf.mxu0
      %v4256 = vadd.f32 0.0, %v4255
      %4257 = vmatmul.bf16.gmra.mxu0 %v4133
      %v4258 = vpop.f32.mrf.mxu0
      %v4259 = vadd.f32 0.0, %v4258
      %v4260 = vpop.f32.mrf.mxu0
      %v4261 = vadd.f32 0.0, %v4260
      %4262 = vmatmul.bf16.gmra.mxu0 %v4134
      %v4263 = vpop.f32.mrf.mxu0
      %v4264 = vadd.f32 0.0, %v4263
      %v4265 = vpop.f32.mrf.mxu0
      %v4266 = vadd.f32 0.0, %v4265
      %4267 = vmatmul.bf16.gmra.mxu0 %v4135
      %v4268 = vpop.f32.mrf.mxu0
      %v4269 = vadd.f32 0.0, %v4268
      %v4270 = vpop.f32.mrf.mxu0
      %v4271 = vadd.f32 0.0, %v4270
      %4272 = vmatmul.bf16.gmra.mxu0 %v4136
      %v4273 = vpop.f32.mrf.mxu0
      %v4274 = vadd.f32 0.0, %v4273
      %v4275 = vpop.f32.mrf.mxu0
      %v4276 = vadd.f32 0.0, %v4275
      %4277 = vmatmul.bf16.gmra.mxu0 %v4137
      %v4278 = vpop.f32.mrf.mxu0
      %v4279 = vadd.f32 0.0, %v4278
      %v4280 = vpop.f32.mrf.mxu0
      %v4281 = vadd.f32 0.0, %v4280
      %4282 = vmatmul.bf16.gmra.mxu0 %v4138
      %v4283 = vpop.f32.mrf.mxu0
      %v4284 = vadd.f32 0.0, %v4283
      %v4285 = vpop.f32.mrf.mxu0
      %v4286 = vadd.f32 0.0, %v4285
      %4287 = vmatmul.bf16.gmra.mxu0 %v4139
      %v4288 = vpop.f32.mrf.mxu0
      %v4289 = vadd.f32 0.0, %v4288
      %v4290 = vpop.f32.mrf.mxu0
      %v4291 = vadd.f32 0.0, %v4290
      %4292 = vdwg.mxu0
      %v4293 = vadd.f32 %v3978, %v4214
      %v4294 = vadd.f32 %v3979, %v4216
      %v4295 = vadd.f32 %v3980, %v4219
      %v4296 = vadd.f32 %v3981, %v4221
      %v4297 = vadd.f32 %v3982, %v4224
      %v4298 = vadd.f32 %v3983, %v4226
      %v4299 = vadd.f32 %v3984, %v4229
      %v4300 = vadd.f32 %v3985, %v4231
      %v4301 = vadd.f32 %v3986, %v4234
      %v4302 = vadd.f32 %v3987, %v4236
      %v4303 = vadd.f32 %v3988, %v4239
      %v4304 = vadd.f32 %v3989, %v4241
      %v4305 = vadd.f32 %v3990, %v4244
      %v4306 = vadd.f32 %v3991, %v4246
      %v4307 = vadd.f32 %v3992, %v4249
      %v4308 = vadd.f32 %v3993, %v4251
      %v4309 = vadd.f32 %v3994, %v4254
      %v4310 = vadd.f32 %v3995, %v4256
      %v4311 = vadd.f32 %v3996, %v4259
      %v4312 = vadd.f32 %v3997, %v4261
      %v4313 = vadd.f32 %v3998, %v4264
      %v4314 = vadd.f32 %v3999, %v4266
      %v4315 = vadd.f32 %v4000, %v4269
      %v4316 = vadd.f32 %v4001, %v4271
      %v4317 = vadd.f32 %v4002, %v4274
      %v4318 = vadd.f32 %v4003, %v4276
      %v4319 = vadd.f32 %v4004, %v4279
      %v4320 = vadd.f32 %v4005, %v4281
      %v4321 = vadd.f32 %v4006, %v4284
      %v4322 = vadd.f32 %v4007, %v4286
      %v4323 = vadd.f32 %v4008, %v4289
      %v4324 = vadd.f32 %v4009, %v4291
      %v4325 = vld [vmem:[%s4010] sm:$0xf]
      %v4326 = vld [vmem:[%s4010 + $0x4] sm:$0xf]
      %v4327 = vld [vmem:[%s4010 + $0x8] sm:$0x1]
      %v4328 = vld [vmem:[%s4010 + $0xc] sm:$0xf]
      %v4329 = vld [vmem:[%s4010 + $0x10] sm:$0xf]
      %v4330 = vld [vmem:[%s4010 + $0x14] sm:$0x1]
      %v4331 = vld [vmem:[%s4010 + $0x18] sm:$0xf]
      %v4332 = vld [vmem:[%s4010 + $0x1c] sm:$0xf]
      %v4333 = vld [vmem:[%s4010 + $0x20] sm:$0x1]
      %v4334 = vld [vmem:[%s4010 + $0x24] sm:$0xf]
      %v4335 = vld [vmem:[%s4010 + $0x28] sm:$0xf]
      %v4336 = vld [vmem:[%s4010 + $0x2c] sm:$0x1]
      %v4337 = vld [vmem:[%s4010 + $0x30] sm:$0xf]
      %v4338 = vld [vmem:[%s4010 + $0x34] sm:$0xf]
      %v4339 = vld [vmem:[%s4010 + $0x38] sm:$0x1]
      %v4340 = vld [vmem:[%s4010 + $0x3c] sm:$0xf]
      %v4341 = vld [vmem:[%s4010 + $0x40] sm:$0xf]
      %v4342 = vld [vmem:[%s4010 + $0x44] sm:$0x1]
      %v4343 = vld [vmem:[%s4010 + $0x48] sm:$0xf]
      %v4344 = vld [vmem:[%s4010 + $0x4c] sm:$0xf]
      %v4345 = vld [vmem:[%s4010 + $0x50] sm:$0x1]
      %v4346 = vld [vmem:[%s4010 + $0x54] sm:$0xf]
      %v4347 = vld [vmem:[%s4010 + $0x58] sm:$0xf]
      %v4348 = vld [vmem:[%s4010 + $0x5c] sm:$0x1]
      %v4349 = vld [vmem:[%s4010 + $0x60] sm:$0xf]
      %v4350 = vld [vmem:[%s4010 + $0x64] sm:$0xf]
      %v4351 = vld [vmem:[%s4010 + $0x68] sm:$0x1]
      %v4352 = vld [vmem:[%s4010 + $0x6c] sm:$0xf]
      %v4353 = vld [vmem:[%s4010 + $0x70] sm:$0xf]
      %v4354 = vld [vmem:[%s4010 + $0x74] sm:$0x1]
      %v4355 = vld [vmem:[%s4010 + $0x78] sm:$0xf]
      %v4356 = vld [vmem:[%s4010 + $0x7c] sm:$0xf]
      %v4357 = vld [vmem:[%s4010 + $0x80] sm:$0x1]
      %v4358 = vld [vmem:[%s4010 + $0x84] sm:$0xf]
      %v4359 = vld [vmem:[%s4010 + $0x88] sm:$0xf]
      %v4360 = vld [vmem:[%s4010 + $0x8c] sm:$0x1]
      %v4361 = vld [vmem:[%s4010 + $0x90] sm:$0xf]
      %v4362 = vld [vmem:[%s4010 + $0x94] sm:$0xf]
      %v4363 = vld [vmem:[%s4010 + $0x98] sm:$0x1]
      %v4364 = vld [vmem:[%s4010 + $0x9c] sm:$0xf]
      %v4365 = vld [vmem:[%s4010 + $0xa0] sm:$0xf]
      %v4366 = vld [vmem:[%s4010 + $0xa4] sm:$0x1]
      %v4367 = vld [vmem:[%s4010 + $0xa8] sm:$0xf]
      %v4368 = vld [vmem:[%s4010 + $0xac] sm:$0xf]
      %v4369 = vld [vmem:[%s4010 + $0xb0] sm:$0x1]
      %v4370 = vld [vmem:[%s4010 + $0xb4] sm:$0xf]
      %v4371 = vld [vmem:[%s4010 + $0xb8] sm:$0xf]
      %v4372 = vld [vmem:[%s4010 + $0xbc] sm:$0x1]
      %v4374 = vshrl.u32 %v4325, 16
      %v4376 = vrot.slane %v4374, 4
      %v4377 = vshll.u32 %v4325, 16
      %v4379 = vrot.slane %v4377, 5
      %v4380 = vor.u32 %v4376, %v4379
      %v4381 = vrot.slane %v4380, 4
      %v4383 = vshll.u32 %v4326, 16
      %v4385 = vrot.slane %v4383, 5
      %v4386 = vsel %vm1339, %v4381, %v4385
      %v4387 = vshrl.u32 %v4326, 16
      %v4389 = vrot.slane %v4387, 4
      %v4390 = vor.u32 %v4389, %v4385
      %v4391 = vrot.slane %v4390, 4
      %v4393 = vshll.u32 %v4327, 16
      %v4395 = vrot.slane %v4393, 5
      %v4396 = vsel %vm1339, %v4391, %v4395
      %v4398 = vshrl.u32 %v4328, 16
      %v4400 = vrot.slane %v4398, 4
      %v4401 = vshll.u32 %v4328, 16
      %v4403 = vrot.slane %v4401, 5
      %v4404 = vor.u32 %v4400, %v4403
      %v4405 = vrot.slane %v4404, 4
      %v4407 = vshll.u32 %v4329, 16
      %v4409 = vrot.slane %v4407, 5
      %v4410 = vsel %vm1339, %v4405, %v4409
      %v4411 = vshrl.u32 %v4329, 16
      %v4413 = vrot.slane %v4411, 4
      %v4414 = vor.u32 %v4413, %v4409
      %v4415 = vrot.slane %v4414, 4
      %v4417 = vshll.u32 %v4330, 16
      %v4419 = vrot.slane %v4417, 5
      %v4420 = vsel %vm1339, %v4415, %v4419
      %v4422 = vshrl.u32 %v4331, 16
      %v4424 = vrot.slane %v4422, 4
      %v4425 = vshll.u32 %v4331, 16
      %v4427 = vrot.slane %v4425, 5
      %v4428 = vor.u32 %v4424, %v4427
      %v4429 = vrot.slane %v4428, 4
      %v4431 = vshll.u32 %v4332, 16
      %v4433 = vrot.slane %v4431, 5
      %v4434 = vsel %vm1339, %v4429, %v4433
      %v4435 = vshrl.u32 %v4332, 16
      %v4437 = vrot.slane %v4435, 4
      %v4438 = vor.u32 %v4437, %v4433
      %v4439 = vrot.slane %v4438, 4
      %v4441 = vshll.u32 %v4333, 16
      %v4443 = vrot.slane %v4441, 5
      %v4444 = vsel %vm1339, %v4439, %v4443
      %v4446 = vshrl.u32 %v4334, 16
      %v4448 = vrot.slane %v4446, 4
      %v4449 = vshll.u32 %v4334, 16
      %v4451 = vrot.slane %v4449, 5
      %v4452 = vor.u32 %v4448, %v4451
      %v4453 = vrot.slane %v4452, 4
      %v4455 = vshll.u32 %v4335, 16
      %v4457 = vrot.slane %v4455, 5
      %v4458 = vsel %vm1339, %v4453, %v4457
      %v4459 = vshrl.u32 %v4335, 16
      %v4461 = vrot.slane %v4459, 4
      %v4462 = vor.u32 %v4461, %v4457
      %v4463 = vrot.slane %v4462, 4
      %v4465 = vshll.u32 %v4336, 16
      %v4467 = vrot.slane %v4465, 5
      %v4468 = vsel %vm1339, %v4463, %v4467
      %v4470 = vshrl.u32 %v4337, 16
      %v4472 = vrot.slane %v4470, 4
      %v4473 = vshll.u32 %v4337, 16
      %v4475 = vrot.slane %v4473, 5
      %v4476 = vor.u32 %v4472, %v4475
      %v4477 = vrot.slane %v4476, 4
      %v4479 = vshll.u32 %v4338, 16
      %v4481 = vrot.slane %v4479, 5
      %v4482 = vsel %vm1339, %v4477, %v4481
      %v4483 = vshrl.u32 %v4338, 16
      %v4485 = vrot.slane %v4483, 4
      %v4486 = vor.u32 %v4485, %v4481
      %v4487 = vrot.slane %v4486, 4
      %v4489 = vshll.u32 %v4339, 16
      %v4491 = vrot.slane %v4489, 5
      %v4492 = vsel %vm1339, %v4487, %v4491
      %v4494 = vshrl.u32 %v4340, 16
      %v4496 = vrot.slane %v4494, 4
      %v4497 = vshll.u32 %v4340, 16
      %v4499 = vrot.slane %v4497, 5
      %v4500 = vor.u32 %v4496, %v4499
      %v4501 = vrot.slane %v4500, 4
      %v4503 = vshll.u32 %v4341, 16
      %v4505 = vrot.slane %v4503, 5
      %v4506 = vsel %vm1339, %v4501, %v4505
      %v4507 = vshrl.u32 %v4341, 16
      %v4509 = vrot.slane %v4507, 4
      %v4510 = vor.u32 %v4509, %v4505
      %v4511 = vrot.slane %v4510, 4
      %v4513 = vshll.u32 %v4342, 16
      %v4515 = vrot.slane %v4513, 5
      %v4516 = vsel %vm1339, %v4511, %v4515
      %v4518 = vshrl.u32 %v4343, 16
      %v4520 = vrot.slane %v4518, 4
      %v4521 = vshll.u32 %v4343, 16
      %v4523 = vrot.slane %v4521, 5
      %v4524 = vor.u32 %v4520, %v4523
      %v4525 = vrot.slane %v4524, 4
      %v4527 = vshll.u32 %v4344, 16
      %v4529 = vrot.slane %v4527, 5
      %v4530 = vsel %vm1339, %v4525, %v4529
      %v4531 = vshrl.u32 %v4344, 16
      %v4533 = vrot.slane %v4531, 4
      %v4534 = vor.u32 %v4533, %v4529
      %v4535 = vrot.slane %v4534, 4
      %v4537 = vshll.u32 %v4345, 16
      %v4539 = vrot.slane %v4537, 5
      %v4540 = vsel %vm1339, %v4535, %v4539
      %v4542 = vshrl.u32 %v4346, 16
      %v4544 = vrot.slane %v4542, 4
      %v4545 = vshll.u32 %v4346, 16
      %v4547 = vrot.slane %v4545, 5
      %v4548 = vor.u32 %v4544, %v4547
      %v4549 = vrot.slane %v4548, 4
      %v4551 = vshll.u32 %v4347, 16
      %v4553 = vrot.slane %v4551, 5
      %v4554 = vsel %vm1339, %v4549, %v4553
      %v4555 = vshrl.u32 %v4347, 16
      %v4557 = vrot.slane %v4555, 4
      %v4558 = vor.u32 %v4557, %v4553
      %v4559 = vrot.slane %v4558, 4
      %v4561 = vshll.u32 %v4348, 16
      %v4563 = vrot.slane %v4561, 5
      %v4564 = vsel %vm1339, %v4559, %v4563
      %v4566 = vshrl.u32 %v4349, 16
      %v4568 = vrot.slane %v4566, 4
      %v4569 = vshll.u32 %v4349, 16
      %v4571 = vrot.slane %v4569, 5
      %v4572 = vor.u32 %v4568, %v4571
      %v4573 = vrot.slane %v4572, 4
      %v4575 = vshll.u32 %v4350, 16
      %v4577 = vrot.slane %v4575, 5
      %v4578 = vsel %vm1339, %v4573, %v4577
      %v4579 = vshrl.u32 %v4350, 16
      %v4581 = vrot.slane %v4579, 4
      %v4582 = vor.u32 %v4581, %v4577
      %v4583 = vrot.slane %v4582, 4
      %v4585 = vshll.u32 %v4351, 16
      %v4587 = vrot.slane %v4585, 5
      %v4588 = vsel %vm1339, %v4583, %v4587
      %v4590 = vshrl.u32 %v4352, 16
      %v4592 = vrot.slane %v4590, 4
      %v4593 = vshll.u32 %v4352, 16
      %v4595 = vrot.slane %v4593, 5
      %v4596 = vor.u32 %v4592, %v4595
      %v4597 = vrot.slane %v4596, 4
      %v4599 = vshll.u32 %v4353, 16
      %v4601 = vrot.slane %v4599, 5
      %v4602 = vsel %vm1339, %v4597, %v4601
      %v4603 = vshrl.u32 %v4353, 16
      %v4605 = vrot.slane %v4603, 4
      %v4606 = vor.u32 %v4605, %v4601
      %v4607 = vrot.slane %v4606, 4
      %v4609 = vshll.u32 %v4354, 16
      %v4611 = vrot.slane %v4609, 5
      %v4612 = vsel %vm1339, %v4607, %v4611
      %v4614 = vshrl.u32 %v4355, 16
      %v4616 = vrot.slane %v4614, 4
      %v4617 = vshll.u32 %v4355, 16
      %v4619 = vrot.slane %v4617, 5
      %v4620 = vor.u32 %v4616, %v4619
      %v4621 = vrot.slane %v4620, 4
      %v4623 = vshll.u32 %v4356, 16
      %v4625 = vrot.slane %v4623, 5
      %v4626 = vsel %vm1339, %v4621, %v4625
      %v4627 = vshrl.u32 %v4356, 16
      %v4629 = vrot.slane %v4627, 4
      %v4630 = vor.u32 %v4629, %v4625
      %v4631 = vrot.slane %v4630, 4
      %v4633 = vshll.u32 %v4357, 16
      %v4635 = vrot.slane %v4633, 5
      %v4636 = vsel %vm1339, %v4631, %v4635
      %v4638 = vshrl.u32 %v4358, 16
      %v4640 = vrot.slane %v4638, 4
      %v4641 = vshll.u32 %v4358, 16
      %v4643 = vrot.slane %v4641, 5
      %v4644 = vor.u32 %v4640, %v4643
      %v4645 = vrot.slane %v4644, 4
      %v4647 = vshll.u32 %v4359, 16
      %v4649 = vrot.slane %v4647, 5
      %v4650 = vsel %vm1339, %v4645, %v4649
      %v4651 = vshrl.u32 %v4359, 16
      %v4653 = vrot.slane %v4651, 4
      %v4654 = vor.u32 %v4653, %v4649
      %v4655 = vrot.slane %v4654, 4
      %v4657 = vshll.u32 %v4360, 16
      %v4659 = vrot.slane %v4657, 5
      %v4660 = vsel %vm1339, %v4655, %v4659
      %v4662 = vshrl.u32 %v4361, 16
      %v4664 = vrot.slane %v4662, 4
      %v4665 = vshll.u32 %v4361, 16
      %v4667 = vrot.slane %v4665, 5
      %v4668 = vor.u32 %v4664, %v4667
      %v4669 = vrot.slane %v4668, 4
      %v4671 = vshll.u32 %v4362, 16
      %v4673 = vrot.slane %v4671, 5
      %v4674 = vsel %vm1339, %v4669, %v4673
      %v4675 = vshrl.u32 %v4362, 16
      %v4677 = vrot.slane %v4675, 4
      %v4678 = vor.u32 %v4677, %v4673
      %v4679 = vrot.slane %v4678, 4
      %v4681 = vshll.u32 %v4363, 16
      %v4683 = vrot.slane %v4681, 5
      %v4684 = vsel %vm1339, %v4679, %v4683
      %v4686 = vshrl.u32 %v4364, 16
      %v4688 = vrot.slane %v4686, 4
      %v4689 = vshll.u32 %v4364, 16
      %v4691 = vrot.slane %v4689, 5
      %v4692 = vor.u32 %v4688, %v4691
      %v4693 = vrot.slane %v4692, 4
      %v4695 = vshll.u32 %v4365, 16
      %v4697 = vrot.slane %v4695, 5
      %v4698 = vsel %vm1339, %v4693, %v4697
      %v4699 = vshrl.u32 %v4365, 16
      %v4701 = vrot.slane %v4699, 4
      %v4702 = vor.u32 %v4701, %v4697
      %v4703 = vrot.slane %v4702, 4
      %v4705 = vshll.u32 %v4366, 16
      %v4707 = vrot.slane %v4705, 5
      %v4708 = vsel %vm1339, %v4703, %v4707
      %v4710 = vshrl.u32 %v4367, 16
      %v4712 = vrot.slane %v4710, 4
      %v4713 = vshll.u32 %v4367, 16
      %v4715 = vrot.slane %v4713, 5
      %v4716 = vor.u32 %v4712, %v4715
      %v4717 = vrot.slane %v4716, 4
      %v4719 = vshll.u32 %v4368, 16
      %v4721 = vrot.slane %v4719, 5
      %v4722 = vsel %vm1339, %v4717, %v4721
      %v4723 = vshrl.u32 %v4368, 16
      %v4725 = vrot.slane %v4723, 4
      %v4726 = vor.u32 %v4725, %v4721
      %v4727 = vrot.slane %v4726, 4
      %v4729 = vshll.u32 %v4369, 16
      %v4731 = vrot.slane %v4729, 5
      %v4732 = vsel %vm1339, %v4727, %v4731
      %v4734 = vshrl.u32 %v4370, 16
      %v4736 = vrot.slane %v4734, 4
      %v4737 = vshll.u32 %v4370, 16
      %v4739 = vrot.slane %v4737, 5
      %v4740 = vor.u32 %v4736, %v4739
      %v4741 = vrot.slane %v4740, 4
      %v4743 = vshll.u32 %v4371, 16
      %v4745 = vrot.slane %v4743, 5
      %v4746 = vsel %vm1339, %v4741, %v4745
      %v4747 = vshrl.u32 %v4371, 16
      %v4749 = vrot.slane %v4747, 4
      %v4750 = vor.u32 %v4749, %v4745
      %v4751 = vrot.slane %v4750, 4
      %v4753 = vshll.u32 %v4372, 16
      %v4755 = vrot.slane %v4753, 5
      %v4756 = vsel %vm1339, %v4751, %v4755
      %s4757 = scalar_lea.vmem %s2, 448
      %v4758 = vld [vmem:[%s4757] sm:$0xf]
      %v4759 = vld [vmem:[%s4757 + $0x4] sm:$0xf]
      %v4760 = vld [vmem:[%s4757 + $0x8] sm:$0xf]
      %v4761 = vld [vmem:[%s4757 + $0xc] sm:$0xf]
      %v4762 = vld [vmem:[%s4757 + $0x10] sm:$0xf]
      %v4763 = vld [vmem:[%s4757 + $0x14] sm:$0xf]
      %v4764 = vld [vmem:[%s4757 + $0x18] sm:$0xf]
      %v4765 = vld [vmem:[%s4757 + $0x1c] sm:$0xf]
      %v4766 = vld [vmem:[%s4757 + $0x20] sm:$0xf]
      %v4767 = vld [vmem:[%s4757 + $0x24] sm:$0xf]
      %v4768 = vld [vmem:[%s4757 + $0x28] sm:$0xf]
      %v4769 = vld [vmem:[%s4757 + $0x2c] sm:$0xf]
      %v4770 = vld [vmem:[%s4757 + $0x30] sm:$0xf]
      %v4771 = vld [vmem:[%s4757 + $0x34] sm:$0xf]
      %v4772 = vld [vmem:[%s4757 + $0x38] sm:$0xf]
      %v4773 = vld [vmem:[%s4757 + $0x3c] sm:$0xf]
      %v4774 = vunpack.c.l.b16 %v4386
      %v4775 = vunpack.c.l.b16 %v4396
      %v4776 = vunpack.c.l.b16 %v4410
      %v4777 = vunpack.c.l.b16 %v4420
      %v4778 = vunpack.c.l.b16 %v4434
      %v4779 = vunpack.c.l.b16 %v4444
      %v4780 = vunpack.c.l.b16 %v4458
      %v4781 = vunpack.c.l.b16 %v4468
      %v4782 = vunpack.c.l.b16 %v4482
      %v4783 = vunpack.c.l.b16 %v4492
      %v4784 = vunpack.c.l.b16 %v4506
      %v4785 = vunpack.c.l.b16 %v4516
      %v4786 = vunpack.c.l.b16 %v4530
      %v4787 = vunpack.c.l.b16 %v4540
      %v4788 = vunpack.c.l.b16 %v4554
      %v4789 = vunpack.c.l.b16 %v4564
      %v4790 = vunpack.c.l.b16 %v4578
      %v4791 = vunpack.c.l.b16 %v4588
      %v4792 = vunpack.c.l.b16 %v4602
      %v4793 = vunpack.c.l.b16 %v4612
      %v4794 = vunpack.c.l.b16 %v4626
      %v4795 = vunpack.c.l.b16 %v4636
      %v4796 = vunpack.c.l.b16 %v4650
      %v4797 = vunpack.c.l.b16 %v4660
      %v4798 = vunpack.c.l.b16 %v4674
      %v4799 = vunpack.c.l.b16 %v4684
      %v4800 = vunpack.c.l.b16 %v4698
      %v4801 = vunpack.c.l.b16 %v4708
      %v4802 = vunpack.c.l.b16 %v4722
      %v4803 = vunpack.c.l.b16 %v4732
      %v4804 = vunpack.c.l.b16 %v4746
      %v4805 = vunpack.c.l.b16 %v4756
      %v4806 = vpack.c.b16 %v4775, %v4774
      %v4807 = vpack.c.b16 %v4777, %v4776
      %v4808 = vpack.c.b16 %v4779, %v4778
      %v4809 = vpack.c.b16 %v4781, %v4780
      %v4810 = vpack.c.b16 %v4783, %v4782
      %v4811 = vpack.c.b16 %v4785, %v4784
      %v4812 = vpack.c.b16 %v4787, %v4786
      %v4813 = vpack.c.b16 %v4789, %v4788
      %v4814 = vpack.c.b16 %v4791, %v4790
      %v4815 = vpack.c.b16 %v4793, %v4792
      %v4816 = vpack.c.b16 %v4795, %v4794
      %v4817 = vpack.c.b16 %v4797, %v4796
      %v4818 = vpack.c.b16 %v4799, %v4798
      %v4819 = vpack.c.b16 %v4801, %v4800
      %v4820 = vpack.c.b16 %v4803, %v4802
      %v4821 = vpack.c.b16 %v4805, %v4804
      %v4854 = vunpack.c.l.b16 %v4758
      %v4855 = vunpack.c.l.b16 %v4759
      %v4856 = vunpack.c.l.b16 %v4760
      %v4857 = vunpack.c.l.b16 %v4761
      %v4858 = vunpack.c.l.b16 %v4762
      %v4859 = vunpack.c.l.b16 %v4763
      %v4860 = vunpack.c.l.b16 %v4764
      %v4861 = vunpack.c.l.b16 %v4765
      %v4862 = vunpack.c.l.b16 %v4766
      %v4863 = vunpack.c.l.b16 %v4767
      %v4864 = vunpack.c.l.b16 %v4768
      %v4865 = vunpack.c.l.b16 %v4769
      %v4866 = vunpack.c.l.b16 %v4770
      %v4867 = vunpack.c.l.b16 %v4771
      %v4868 = vunpack.c.l.b16 %v4772
      %v4869 = vunpack.c.l.b16 %v4773
      %v4870 = vpack.c.b16 %v4855, %v4854
      %v4871 = vpack.c.b16 %v4857, %v4856
      %v4872 = vpack.c.b16 %v4859, %v4858
      %v4873 = vpack.c.b16 %v4861, %v4860
      %v4874 = vpack.c.b16 %v4863, %v4862
      %v4875 = vpack.c.b16 %v4865, %v4864
      %v4876 = vpack.c.b16 %v4867, %v4866
      %v4877 = vpack.c.b16 %v4869, %v4868
      %4886 = vmatpush.bf16.msra.mxu0 %v4877
      %4887 = vmatpush.bf16.msra.mxu0 %v4876
      %4888 = vmatpush.bf16.msra.mxu0 %v4875
      %4889 = vmatpush.bf16.msra.mxu0 %v4874
      %4890 = vmatpush.bf16.msra.mxu0 %v4873
      %4891 = vmatpush.bf16.msra.mxu0 %v4872
      %4892 = vmatpush.bf16.msra.mxu0 %v4871
      %4893 = vmatpush.bf16.msra.mxu0 %v4870
      %4894 = vmatmul.bf16.gmra.mxu0 %v4806
      %v4895 = vpop.f32.mrf.mxu0
      %v4896 = vadd.f32 0.0, %v4895
      %v4897 = vpop.f32.mrf.mxu0
      %v4898 = vadd.f32 0.0, %v4897
      %4899 = vmatmul.bf16.gmra.mxu0 %v4807
      %v4900 = vpop.f32.mrf.mxu0
      %v4901 = vadd.f32 0.0, %v4900
      %v4902 = vpop.f32.mrf.mxu0
      %v4903 = vadd.f32 0.0, %v4902
      %4904 = vmatmul.bf16.gmra.mxu0 %v4808
      %v4905 = vpop.f32.mrf.mxu0
      %v4906 = vadd.f32 0.0, %v4905
      %v4907 = vpop.f32.mrf.mxu0
      %v4908 = vadd.f32 0.0, %v4907
      %4909 = vmatmul.bf16.gmra.mxu0 %v4809
      %v4910 = vpop.f32.mrf.mxu0
      %v4911 = vadd.f32 0.0, %v4910
      %v4912 = vpop.f32.mrf.mxu0
      %v4913 = vadd.f32 0.0, %v4912
      %4914 = vmatmul.bf16.gmra.mxu0 %v4810
      %v4915 = vpop.f32.mrf.mxu0
      %v4916 = vadd.f32 0.0, %v4915
      %v4917 = vpop.f32.mrf.mxu0
      %v4918 = vadd.f32 0.0, %v4917
      %4919 = vmatmul.bf16.gmra.mxu0 %v4811
      %v4920 = vpop.f32.mrf.mxu0
      %v4921 = vadd.f32 0.0, %v4920
      %v4922 = vpop.f32.mrf.mxu0
      %v4923 = vadd.f32 0.0, %v4922
      %4924 = vmatmul.bf16.gmra.mxu0 %v4812
      %v4925 = vpop.f32.mrf.mxu0
      %v4926 = vadd.f32 0.0, %v4925
      %v4927 = vpop.f32.mrf.mxu0
      %v4928 = vadd.f32 0.0, %v4927
      %4929 = vmatmul.bf16.gmra.mxu0 %v4813
      %v4930 = vpop.f32.mrf.mxu0
      %v4931 = vadd.f32 0.0, %v4930
      %v4932 = vpop.f32.mrf.mxu0
      %v4933 = vadd.f32 0.0, %v4932
      %4934 = vmatmul.bf16.gmra.mxu0 %v4814
      %v4935 = vpop.f32.mrf.mxu0
      %v4936 = vadd.f32 0.0, %v4935
      %v4937 = vpop.f32.mrf.mxu0
      %v4938 = vadd.f32 0.0, %v4937
      %4939 = vmatmul.bf16.gmra.mxu0 %v4815
      %v4940 = vpop.f32.mrf.mxu0
      %v4941 = vadd.f32 0.0, %v4940
      %v4942 = vpop.f32.mrf.mxu0
      %v4943 = vadd.f32 0.0, %v4942
      %4944 = vmatmul.bf16.gmra.mxu0 %v4816
      %v4945 = vpop.f32.mrf.mxu0
      %v4946 = vadd.f32 0.0, %v4945
      %v4947 = vpop.f32.mrf.mxu0
      %v4948 = vadd.f32 0.0, %v4947
      %4949 = vmatmul.bf16.gmra.mxu0 %v4817
      %v4950 = vpop.f32.mrf.mxu0
      %v4951 = vadd.f32 0.0, %v4950
      %v4952 = vpop.f32.mrf.mxu0
      %v4953 = vadd.f32 0.0, %v4952
      %4954 = vmatmul.bf16.gmra.mxu0 %v4818
      %v4955 = vpop.f32.mrf.mxu0
      %v4956 = vadd.f32 0.0, %v4955
      %v4957 = vpop.f32.mrf.mxu0
      %v4958 = vadd.f32 0.0, %v4957
      %4959 = vmatmul.bf16.gmra.mxu0 %v4819
      %v4960 = vpop.f32.mrf.mxu0
      %v4961 = vadd.f32 0.0, %v4960
      %v4962 = vpop.f32.mrf.mxu0
      %v4963 = vadd.f32 0.0, %v4962
      %4964 = vmatmul.bf16.gmra.mxu0 %v4820
      %v4965 = vpop.f32.mrf.mxu0
      %v4966 = vadd.f32 0.0, %v4965
      %v4967 = vpop.f32.mrf.mxu0
      %v4968 = vadd.f32 0.0, %v4967
      %4969 = vmatmul.bf16.gmra.mxu0 %v4821
      %v4970 = vpop.f32.mrf.mxu0
      %v4971 = vadd.f32 0.0, %v4970
      %v4972 = vpop.f32.mrf.mxu0
      %v4973 = vadd.f32 0.0, %v4972
      %4974 = vdwg.mxu0
      %v4975 = vadd.f32 %v4293, %v4896
      %v4976 = vadd.f32 %v4294, %v4898
      %v4977 = vadd.f32 %v4295, %v4901
      %v4978 = vadd.f32 %v4296, %v4903
      %v4979 = vadd.f32 %v4297, %v4906
      %v4980 = vadd.f32 %v4298, %v4908
      %v4981 = vadd.f32 %v4299, %v4911
      %v4982 = vadd.f32 %v4300, %v4913
      %v4983 = vadd.f32 %v4301, %v4916
      %v4984 = vadd.f32 %v4302, %v4918
      %v4985 = vadd.f32 %v4303, %v4921
      %v4986 = vadd.f32 %v4304, %v4923
      %v4987 = vadd.f32 %v4305, %v4926
      %v4988 = vadd.f32 %v4306, %v4928
      %v4989 = vadd.f32 %v4307, %v4931
      %v4990 = vadd.f32 %v4308, %v4933
      %v4991 = vadd.f32 %v4309, %v4936
      %v4992 = vadd.f32 %v4310, %v4938
      %v4993 = vadd.f32 %v4311, %v4941
      %v4994 = vadd.f32 %v4312, %v4943
      %v4995 = vadd.f32 %v4313, %v4946
      %v4996 = vadd.f32 %v4314, %v4948
      %v4997 = vadd.f32 %v4315, %v4951
      %v4998 = vadd.f32 %v4316, %v4953
      %v4999 = vadd.f32 %v4317, %v4956
      %v5000 = vadd.f32 %v4318, %v4958
      %v5001 = vadd.f32 %v4319, %v4961
      %v5002 = vadd.f32 %v4320, %v4963
      %v5003 = vadd.f32 %v4321, %v4966
      %v5004 = vadd.f32 %v4322, %v4968
      %v5005 = vadd.f32 %v4323, %v4971
      %v5006 = vadd.f32 %v4324, %v4973
      %v5007 = vld [vmem:[%s4010] sm:$0xe]
      %v5008 = vld [vmem:[%s4010 + $0xc] sm:$0xe]
      %v5009 = vld [vmem:[%s4010 + $0x18] sm:$0xe]
      %v5010 = vld [vmem:[%s4010 + $0x24] sm:$0xe]
      %v5011 = vld [vmem:[%s4010 + $0x30] sm:$0xe]
      %v5012 = vld [vmem:[%s4010 + $0x3c] sm:$0xe]
      %v5013 = vld [vmem:[%s4010 + $0x48] sm:$0xe]
      %v5014 = vld [vmem:[%s4010 + $0x54] sm:$0xe]
      %v5015 = vld [vmem:[%s4010 + $0x60] sm:$0xe]
      %v5016 = vld [vmem:[%s4010 + $0x6c] sm:$0xe]
      %v5017 = vld [vmem:[%s4010 + $0x78] sm:$0xe]
      %v5018 = vld [vmem:[%s4010 + $0x84] sm:$0xe]
      %v5019 = vld [vmem:[%s4010 + $0x90] sm:$0xe]
      %v5020 = vld [vmem:[%s4010 + $0x9c] sm:$0xe]
      %v5021 = vld [vmem:[%s4010 + $0xa8] sm:$0xe]
      %v5022 = vld [vmem:[%s4010 + $0xb4] sm:$0xe]
      %v5071 = vrot.slane %v5007, 5
      %v5072 = vrot.slane %v5071, 4
      %v5073 = vrot.slane %v4326, 5
      %v5074 = vsel %vm2225, %v5072, %v5073
      %v5075 = vrot.slane %v5073, 4
      %v5076 = vrot.slane %v4327, 5
      %v5077 = vsel %vm2225, %v5075, %v5076
      %v5078 = vrot.slane %v5008, 5
      %v5079 = vrot.slane %v5078, 4
      %v5080 = vrot.slane %v4329, 5
      %v5081 = vsel %vm2225, %v5079, %v5080
      %v5082 = vrot.slane %v5080, 4
      %v5083 = vrot.slane %v4330, 5
      %v5084 = vsel %vm2225, %v5082, %v5083
      %v5085 = vrot.slane %v5009, 5
      %v5086 = vrot.slane %v5085, 4
      %v5087 = vrot.slane %v4332, 5
      %v5088 = vsel %vm2225, %v5086, %v5087
      %v5089 = vrot.slane %v5087, 4
      %v5090 = vrot.slane %v4333, 5
      %v5091 = vsel %vm2225, %v5089, %v5090
      %v5092 = vrot.slane %v5010, 5
      %v5093 = vrot.slane %v5092, 4
      %v5094 = vrot.slane %v4335, 5
      %v5095 = vsel %vm2225, %v5093, %v5094
      %v5096 = vrot.slane %v5094, 4
      %v5097 = vrot.slane %v4336, 5
      %v5098 = vsel %vm2225, %v5096, %v5097
      %v5099 = vrot.slane %v5011, 5
      %v5100 = vrot.slane %v5099, 4
      %v5101 = vrot.slane %v4338, 5
      %v5102 = vsel %vm2225, %v5100, %v5101
      %v5103 = vrot.slane %v5101, 4
      %v5104 = vrot.slane %v4339, 5
      %v5105 = vsel %vm2225, %v5103, %v5104
      %v5106 = vrot.slane %v5012, 5
      %v5107 = vrot.slane %v5106, 4
      %v5108 = vrot.slane %v4341, 5
      %v5109 = vsel %vm2225, %v5107, %v5108
      %v5110 = vrot.slane %v5108, 4
      %v5111 = vrot.slane %v4342, 5
      %v5112 = vsel %vm2225, %v5110, %v5111
      %v5113 = vrot.slane %v5013, 5
      %v5114 = vrot.slane %v5113, 4
      %v5115 = vrot.slane %v4344, 5
      %v5116 = vsel %vm2225, %v5114, %v5115
      %v5117 = vrot.slane %v5115, 4
      %v5118 = vrot.slane %v4345, 5
      %v5119 = vsel %vm2225, %v5117, %v5118
      %v5120 = vrot.slane %v5014, 5
      %v5121 = vrot.slane %v5120, 4
      %v5122 = vrot.slane %v4347, 5
      %v5123 = vsel %vm2225, %v5121, %v5122
      %v5124 = vrot.slane %v5122, 4
      %v5125 = vrot.slane %v4348, 5
      %v5126 = vsel %vm2225, %v5124, %v5125
      %v5127 = vrot.slane %v5015, 5
      %v5128 = vrot.slane %v5127, 4
      %v5129 = vrot.slane %v4350, 5
      %v5130 = vsel %vm2225, %v5128, %v5129
      %v5131 = vrot.slane %v5129, 4
      %v5132 = vrot.slane %v4351, 5
      %v5133 = vsel %vm2225, %v5131, %v5132
      %v5134 = vrot.slane %v5016, 5
      %v5135 = vrot.slane %v5134, 4
      %v5136 = vrot.slane %v4353, 5
      %v5137 = vsel %vm2225, %v5135, %v5136
      %v5138 = vrot.slane %v5136, 4
      %v5139 = vrot.slane %v4354, 5
      %v5140 = vsel %vm2225, %v5138, %v5139
      %v5141 = vrot.slane %v5017, 5
      %v5142 = vrot.slane %v5141, 4
      %v5143 = vrot.slane %v4356, 5
      %v5144 = vsel %vm2225, %v5142, %v5143
      %v5145 = vrot.slane %v5143, 4
      %v5146 = vrot.slane %v4357, 5
      %v5147 = vsel %vm2225, %v5145, %v5146
      %v5148 = vrot.slane %v5018, 5
      %v5149 = vrot.slane %v5148, 4
      %v5150 = vrot.slane %v4359, 5
      %v5151 = vsel %vm2225, %v5149, %v5150
      %v5152 = vrot.slane %v5150, 4
      %v5153 = vrot.slane %v4360, 5
      %v5154 = vsel %vm2225, %v5152, %v5153
      %v5155 = vrot.slane %v5019, 5
      %v5156 = vrot.slane %v5155, 4
      %v5157 = vrot.slane %v4362, 5
      %v5158 = vsel %vm2225, %v5156, %v5157
      %v5159 = vrot.slane %v5157, 4
      %v5160 = vrot.slane %v4363, 5
      %v5161 = vsel %vm2225, %v5159, %v5160
      %v5162 = vrot.slane %v5020, 5
      %v5163 = vrot.slane %v5162, 4
      %v5164 = vrot.slane %v4365, 5
      %v5165 = vsel %vm2225, %v5163, %v5164
      %v5166 = vrot.slane %v5164, 4
      %v5167 = vrot.slane %v4366, 5
      %v5168 = vsel %vm2225, %v5166, %v5167
      %v5169 = vrot.slane %v5021, 5
      %v5170 = vrot.slane %v5169, 4
      %v5171 = vrot.slane %v4368, 5
      %v5172 = vsel %vm2225, %v5170, %v5171
      %v5173 = vrot.slane %v5171, 4
      %v5174 = vrot.slane %v4369, 5
      %v5175 = vsel %vm2225, %v5173, %v5174
      %v5176 = vrot.slane %v5022, 5
      %v5177 = vrot.slane %v5176, 4
      %v5178 = vrot.slane %v4371, 5
      %v5179 = vsel %vm2225, %v5177, %v5178
      %v5180 = vrot.slane %v5178, 4
      %v5181 = vrot.slane %v4372, 5
      %v5182 = vsel %vm2225, %v5180, %v5181
      %s5183 = scalar_lea.vmem %s2, 512
      %v5184 = vld [vmem:[%s5183] sm:$0xf]
      %v5185 = vld [vmem:[%s5183 + $0x4] sm:$0xf]
      %v5186 = vld [vmem:[%s5183 + $0x8] sm:$0xf]
      %v5187 = vld [vmem:[%s5183 + $0xc] sm:$0xf]
      %v5188 = vld [vmem:[%s5183 + $0x10] sm:$0xf]
      %v5189 = vld [vmem:[%s5183 + $0x14] sm:$0xf]
      %v5190 = vld [vmem:[%s5183 + $0x18] sm:$0xf]
      %v5191 = vld [vmem:[%s5183 + $0x1c] sm:$0xf]
      %v5192 = vld [vmem:[%s5183 + $0x20] sm:$0xf]
      %v5193 = vld [vmem:[%s5183 + $0x24] sm:$0xf]
      %v5194 = vld [vmem:[%s5183 + $0x28] sm:$0xf]
      %v5195 = vld [vmem:[%s5183 + $0x2c] sm:$0xf]
      %v5196 = vld [vmem:[%s5183 + $0x30] sm:$0xf]
      %v5197 = vld [vmem:[%s5183 + $0x34] sm:$0xf]
      %v5198 = vld [vmem:[%s5183 + $0x38] sm:$0xf]
      %v5199 = vld [vmem:[%s5183 + $0x3c] sm:$0xf]
      %v5200 = vunpack.c.l.b16 %v5074
      %v5201 = vunpack.c.l.b16 %v5077
      %v5202 = vunpack.c.l.b16 %v5081
      %v5203 = vunpack.c.l.b16 %v5084
      %v5204 = vunpack.c.l.b16 %v5088
      %v5205 = vunpack.c.l.b16 %v5091
      %v5206 = vunpack.c.l.b16 %v5095
      %v5207 = vunpack.c.l.b16 %v5098
      %v5208 = vunpack.c.l.b16 %v5102
      %v5209 = vunpack.c.l.b16 %v5105
      %v5210 = vunpack.c.l.b16 %v5109
      %v5211 = vunpack.c.l.b16 %v5112
      %v5212 = vunpack.c.l.b16 %v5116
      %v5213 = vunpack.c.l.b16 %v5119
      %v5214 = vunpack.c.l.b16 %v5123
      %v5215 = vunpack.c.l.b16 %v5126
      %v5216 = vunpack.c.l.b16 %v5130
      %v5217 = vunpack.c.l.b16 %v5133
      %v5218 = vunpack.c.l.b16 %v5137
      %v5219 = vunpack.c.l.b16 %v5140
      %v5220 = vunpack.c.l.b16 %v5144
      %v5221 = vunpack.c.l.b16 %v5147
      %v5222 = vunpack.c.l.b16 %v5151
      %v5223 = vunpack.c.l.b16 %v5154
      %v5224 = vunpack.c.l.b16 %v5158
      %v5225 = vunpack.c.l.b16 %v5161
      %v5226 = vunpack.c.l.b16 %v5165
      %v5227 = vunpack.c.l.b16 %v5168
      %v5228 = vunpack.c.l.b16 %v5172
      %v5229 = vunpack.c.l.b16 %v5175
      %v5230 = vunpack.c.l.b16 %v5179
      %v5231 = vunpack.c.l.b16 %v5182
      %v5232 = vpack.c.b16 %v5201, %v5200
      %v5233 = vpack.c.b16 %v5203, %v5202
      %v5234 = vpack.c.b16 %v5205, %v5204
      %v5235 = vpack.c.b16 %v5207, %v5206
      %v5236 = vpack.c.b16 %v5209, %v5208
      %v5237 = vpack.c.b16 %v5211, %v5210
      %v5238 = vpack.c.b16 %v5213, %v5212
      %v5239 = vpack.c.b16 %v5215, %v5214
      %v5240 = vpack.c.b16 %v5217, %v5216
      %v5241 = vpack.c.b16 %v5219, %v5218
      %v5242 = vpack.c.b16 %v5221, %v5220
      %v5243 = vpack.c.b16 %v5223, %v5222
      %v5244 = vpack.c.b16 %v5225, %v5224
      %v5245 = vpack.c.b16 %v5227, %v5226
      %v5246 = vpack.c.b16 %v5229, %v5228
      %v5247 = vpack.c.b16 %v5231, %v5230
      %v5280 = vunpack.c.l.b16 %v5184
      %v5281 = vunpack.c.l.b16 %v5185
      %v5282 = vunpack.c.l.b16 %v5186
      %v5283 = vunpack.c.l.b16 %v5187
      %v5284 = vunpack.c.l.b16 %v5188
      %v5285 = vunpack.c.l.b16 %v5189
      %v5286 = vunpack.c.l.b16 %v5190
      %v5287 = vunpack.c.l.b16 %v5191
      %v5288 = vunpack.c.l.b16 %v5192
      %v5289 = vunpack.c.l.b16 %v5193
      %v5290 = vunpack.c.l.b16 %v5194
      %v5291 = vunpack.c.l.b16 %v5195
      %v5292 = vunpack.c.l.b16 %v5196
      %v5293 = vunpack.c.l.b16 %v5197
      %v5294 = vunpack.c.l.b16 %v5198
      %v5295 = vunpack.c.l.b16 %v5199
      %v5296 = vpack.c.b16 %v5281, %v5280
      %v5297 = vpack.c.b16 %v5283, %v5282
      %v5298 = vpack.c.b16 %v5285, %v5284
      %v5299 = vpack.c.b16 %v5287, %v5286
      %v5300 = vpack.c.b16 %v5289, %v5288
      %v5301 = vpack.c.b16 %v5291, %v5290
      %v5302 = vpack.c.b16 %v5293, %v5292
      %v5303 = vpack.c.b16 %v5295, %v5294
      %5312 = vmatpush.bf16.msra.mxu0 %v5303
      %5313 = vmatpush.bf16.msra.mxu0 %v5302
      %5314 = vmatpush.bf16.msra.mxu0 %v5301
      %5315 = vmatpush.bf16.msra.mxu0 %v5300
      %5316 = vmatpush.bf16.msra.mxu0 %v5299
      %5317 = vmatpush.bf16.msra.mxu0 %v5298
      %5318 = vmatpush.bf16.msra.mxu0 %v5297
      %5319 = vmatpush.bf16.msra.mxu0 %v5296
      %5320 = vmatmul.bf16.gmra.mxu0 %v5232
      %v5321 = vpop.f32.mrf.mxu0
      %v5322 = vadd.f32 0.0, %v5321
      %v5323 = vpop.f32.mrf.mxu0
      %v5324 = vadd.f32 0.0, %v5323
      %5325 = vmatmul.bf16.gmra.mxu0 %v5233
      %v5326 = vpop.f32.mrf.mxu0
      %v5327 = vadd.f32 0.0, %v5326
      %v5328 = vpop.f32.mrf.mxu0
      %v5329 = vadd.f32 0.0, %v5328
      %5330 = vmatmul.bf16.gmra.mxu0 %v5234
      %v5331 = vpop.f32.mrf.mxu0
      %v5332 = vadd.f32 0.0, %v5331
      %v5333 = vpop.f32.mrf.mxu0
      %v5334 = vadd.f32 0.0, %v5333
      %5335 = vmatmul.bf16.gmra.mxu0 %v5235
      %v5336 = vpop.f32.mrf.mxu0
      %v5337 = vadd.f32 0.0, %v5336
      %v5338 = vpop.f32.mrf.mxu0
      %v5339 = vadd.f32 0.0, %v5338
      %5340 = vmatmul.bf16.gmra.mxu0 %v5236
      %v5341 = vpop.f32.mrf.mxu0
      %v5342 = vadd.f32 0.0, %v5341
      %v5343 = vpop.f32.mrf.mxu0
      %v5344 = vadd.f32 0.0, %v5343
      %5345 = vmatmul.bf16.gmra.mxu0 %v5237
      %v5346 = vpop.f32.mrf.mxu0
      %v5347 = vadd.f32 0.0, %v5346
      %v5348 = vpop.f32.mrf.mxu0
      %v5349 = vadd.f32 0.0, %v5348
      %5350 = vmatmul.bf16.gmra.mxu0 %v5238
      %v5351 = vpop.f32.mrf.mxu0
      %v5352 = vadd.f32 0.0, %v5351
      %v5353 = vpop.f32.mrf.mxu0
      %v5354 = vadd.f32 0.0, %v5353
      %5355 = vmatmul.bf16.gmra.mxu0 %v5239
      %v5356 = vpop.f32.mrf.mxu0
      %v5357 = vadd.f32 0.0, %v5356
      %v5358 = vpop.f32.mrf.mxu0
      %v5359 = vadd.f32 0.0, %v5358
      %5360 = vmatmul.bf16.gmra.mxu0 %v5240
      %v5361 = vpop.f32.mrf.mxu0
      %v5362 = vadd.f32 0.0, %v5361
      %v5363 = vpop.f32.mrf.mxu0
      %v5364 = vadd.f32 0.0, %v5363
      %5365 = vmatmul.bf16.gmra.mxu0 %v5241
      %v5366 = vpop.f32.mrf.mxu0
      %v5367 = vadd.f32 0.0, %v5366
      %v5368 = vpop.f32.mrf.mxu0
      %v5369 = vadd.f32 0.0, %v5368
      %5370 = vmatmul.bf16.gmra.mxu0 %v5242
      %v5371 = vpop.f32.mrf.mxu0
      %v5372 = vadd.f32 0.0, %v5371
      %v5373 = vpop.f32.mrf.mxu0
      %v5374 = vadd.f32 0.0, %v5373
      %5375 = vmatmul.bf16.gmra.mxu0 %v5243
      %v5376 = vpop.f32.mrf.mxu0
      %v5377 = vadd.f32 0.0, %v5376
      %v5378 = vpop.f32.mrf.mxu0
      %v5379 = vadd.f32 0.0, %v5378
      %5380 = vmatmul.bf16.gmra.mxu0 %v5244
      %v5381 = vpop.f32.mrf.mxu0
      %v5382 = vadd.f32 0.0, %v5381
      %v5383 = vpop.f32.mrf.mxu0
      %v5384 = vadd.f32 0.0, %v5383
      %5385 = vmatmul.bf16.gmra.mxu0 %v5245
      %v5386 = vpop.f32.mrf.mxu0
      %v5387 = vadd.f32 0.0, %v5386
      %v5388 = vpop.f32.mrf.mxu0
      %v5389 = vadd.f32 0.0, %v5388
      %5390 = vmatmul.bf16.gmra.mxu0 %v5246
      %v5391 = vpop.f32.mrf.mxu0
      %v5392 = vadd.f32 0.0, %v5391
      %v5393 = vpop.f32.mrf.mxu0
      %v5394 = vadd.f32 0.0, %v5393
      %5395 = vmatmul.bf16.gmra.mxu0 %v5247
      %v5396 = vpop.f32.mrf.mxu0
      %v5397 = vadd.f32 0.0, %v5396
      %v5398 = vpop.f32.mrf.mxu0
      %v5399 = vadd.f32 0.0, %v5398
      %5400 = vdwg.mxu0
      %v5401 = vadd.f32 %v4975, %v5322
      %v5402 = vadd.f32 %v4976, %v5324
      %v5403 = vadd.f32 %v4977, %v5327
      %v5404 = vadd.f32 %v4978, %v5329
      %v5405 = vadd.f32 %v4979, %v5332
      %v5406 = vadd.f32 %v4980, %v5334
      %v5407 = vadd.f32 %v4981, %v5337
      %v5408 = vadd.f32 %v4982, %v5339
      %v5409 = vadd.f32 %v4983, %v5342
      %v5410 = vadd.f32 %v4984, %v5344
      %v5411 = vadd.f32 %v4985, %v5347
      %v5412 = vadd.f32 %v4986, %v5349
      %v5413 = vadd.f32 %v4987, %v5352
      %v5414 = vadd.f32 %v4988, %v5354
      %v5415 = vadd.f32 %v4989, %v5357
      %v5416 = vadd.f32 %v4990, %v5359
      %v5417 = vadd.f32 %v4991, %v5362
      %v5418 = vadd.f32 %v4992, %v5364
      %v5419 = vadd.f32 %v4993, %v5367
      %v5420 = vadd.f32 %v4994, %v5369
      %v5421 = vadd.f32 %v4995, %v5372
      %v5422 = vadd.f32 %v4996, %v5374
      %v5423 = vadd.f32 %v4997, %v5377
      %v5424 = vadd.f32 %v4998, %v5379
      %v5425 = vadd.f32 %v4999, %v5382
      %v5426 = vadd.f32 %v5000, %v5384
      %v5427 = vadd.f32 %v5001, %v5387
      %v5428 = vadd.f32 %v5002, %v5389
      %v5429 = vadd.f32 %v5003, %v5392
      %v5430 = vadd.f32 %v5004, %v5394
      %v5431 = vadd.f32 %v5005, %v5397
      %v5432 = vadd.f32 %v5006, %v5399
      %v5433 = vld [vmem:[%s6] sm:$0x1]
      %v5435 = vperm.slane %v5433, 0
      %v5437 = vmul.f32 %v5401, %v5435
      %v5438 = vmul.f32 %v5402, %v5435
      %v5439 = vmul.f32 %v5403, %v5435
      %v5440 = vmul.f32 %v5404, %v5435
      %v5441 = vmul.f32 %v5405, %v5435
      %v5442 = vmul.f32 %v5406, %v5435
      %v5443 = vmul.f32 %v5407, %v5435
      %v5444 = vmul.f32 %v5408, %v5435
      %v5445 = vmul.f32 %v5409, %v5435
      %v5446 = vmul.f32 %v5410, %v5435
      %v5447 = vmul.f32 %v5411, %v5435
      %v5448 = vmul.f32 %v5412, %v5435
      %v5449 = vmul.f32 %v5413, %v5435
      %v5450 = vmul.f32 %v5414, %v5435
      %v5451 = vmul.f32 %v5415, %v5435
      %v5452 = vmul.f32 %v5416, %v5435
      %v5453 = vmul.f32 %v5417, %v5435
      %v5454 = vmul.f32 %v5418, %v5435
      %v5455 = vmul.f32 %v5419, %v5435
      %v5456 = vmul.f32 %v5420, %v5435
      %v5457 = vmul.f32 %v5421, %v5435
      %v5458 = vmul.f32 %v5422, %v5435
      %v5459 = vmul.f32 %v5423, %v5435
      %v5460 = vmul.f32 %v5424, %v5435
      %v5461 = vmul.f32 %v5425, %v5435
      %v5462 = vmul.f32 %v5426, %v5435
      %v5463 = vmul.f32 %v5427, %v5435
      %v5464 = vmul.f32 %v5428, %v5435
      %v5465 = vmul.f32 %v5429, %v5435
      %v5466 = vmul.f32 %v5430, %v5435
      %v5467 = vmul.f32 %v5431, %v5435
      %v5468 = vmul.f32 %v5432, %v5435
      %v5469 = vld [vmem:[%s7] sm:$0x1]
      %v5471 = vperm.slane %v5469, 0
      %v5473 = vadd.f32 %v5437, %v5471
      %v5474 = vadd.f32 %v5438, %v5471
      %v5475 = vadd.f32 %v5439, %v5471
      %v5476 = vadd.f32 %v5440, %v5471
      %v5477 = vadd.f32 %v5441, %v5471
      %v5478 = vadd.f32 %v5442, %v5471
      %v5479 = vadd.f32 %v5443, %v5471
      %v5480 = vadd.f32 %v5444, %v5471
      %v5481 = vadd.f32 %v5445, %v5471
      %v5482 = vadd.f32 %v5446, %v5471
      %v5483 = vadd.f32 %v5447, %v5471
      %v5484 = vadd.f32 %v5448, %v5471
      %v5485 = vadd.f32 %v5449, %v5471
      %v5486 = vadd.f32 %v5450, %v5471
      %v5487 = vadd.f32 %v5451, %v5471
      %v5488 = vadd.f32 %v5452, %v5471
      %v5489 = vadd.f32 %v5453, %v5471
      %v5490 = vadd.f32 %v5454, %v5471
      %v5491 = vadd.f32 %v5455, %v5471
      %v5492 = vadd.f32 %v5456, %v5471
      %v5493 = vadd.f32 %v5457, %v5471
      %v5494 = vadd.f32 %v5458, %v5471
      %v5495 = vadd.f32 %v5459, %v5471
      %v5496 = vadd.f32 %v5460, %v5471
      %v5497 = vadd.f32 %v5461, %v5471
      %v5498 = vadd.f32 %v5462, %v5471
      %v5499 = vadd.f32 %v5463, %v5471
      %v5500 = vadd.f32 %v5464, %v5471
      %v5501 = vadd.f32 %v5465, %v5471
      %v5502 = vadd.f32 %v5466, %v5471
      %v5503 = vadd.f32 %v5467, %v5471
      %v5504 = vadd.f32 %v5468, %v5471
      %v5505 = vmax.f32 %v5473, 0.0
      %v5506 = vmax.f32 %v5474, 0.0
      %v5507 = vmax.f32 %v5475, 0.0
      %v5508 = vmax.f32 %v5476, 0.0
      %v5509 = vmax.f32 %v5477, 0.0
      %v5510 = vmax.f32 %v5478, 0.0
      %v5511 = vmax.f32 %v5479, 0.0
      %v5512 = vmax.f32 %v5480, 0.0
      %v5513 = vmax.f32 %v5481, 0.0
      %v5514 = vmax.f32 %v5482, 0.0
      %v5515 = vmax.f32 %v5483, 0.0
      %v5516 = vmax.f32 %v5484, 0.0
      %v5517 = vmax.f32 %v5485, 0.0
      %v5518 = vmax.f32 %v5486, 0.0
      %v5519 = vmax.f32 %v5487, 0.0
      %v5520 = vmax.f32 %v5488, 0.0
      %v5521 = vmax.f32 %v5489, 0.0
      %v5522 = vmax.f32 %v5490, 0.0
      %v5523 = vmax.f32 %v5491, 0.0
      %v5524 = vmax.f32 %v5492, 0.0
      %v5525 = vmax.f32 %v5493, 0.0
      %v5526 = vmax.f32 %v5494, 0.0
      %v5527 = vmax.f32 %v5495, 0.0
      %v5528 = vmax.f32 %v5496, 0.0
      %v5529 = vmax.f32 %v5497, 0.0
      %v5530 = vmax.f32 %v5498, 0.0
      %v5531 = vmax.f32 %v5499, 0.0
      %v5532 = vmax.f32 %v5500, 0.0
      %v5533 = vmax.f32 %v5501, 0.0
      %v5534 = vmax.f32 %v5502, 0.0
      %v5535 = vmax.f32 %v5503, 0.0
      %v5536 = vmax.f32 %v5504, 0.0
      %v5537 = vpack.c.bf16 %v5506, %v5505
      %v5538 = vpack.c.bf16 %v5508, %v5507
      %v5539 = vpack.c.bf16 %v5510, %v5509
      %v5540 = vpack.c.bf16 %v5512, %v5511
      %v5541 = vpack.c.bf16 %v5514, %v5513
      %v5542 = vpack.c.bf16 %v5516, %v5515
      %v5543 = vpack.c.bf16 %v5518, %v5517
      %v5544 = vpack.c.bf16 %v5520, %v5519
      %v5545 = vpack.c.bf16 %v5522, %v5521
      %v5546 = vpack.c.bf16 %v5524, %v5523
      %v5547 = vpack.c.bf16 %v5526, %v5525
      %v5548 = vpack.c.bf16 %v5528, %v5527
      %v5549 = vpack.c.bf16 %v5530, %v5529
      %v5550 = vpack.c.bf16 %v5532, %v5531
      %v5551 = vpack.c.bf16 %v5534, %v5533
      %v5552 = vpack.c.bf16 %v5536, %v5535
      %v5553 = vld [vmem:[%s3] sm:$0xf]
      %v5554 = vld [vmem:[%s3 + $0x4] sm:$0xf]
      %v5555 = vld [vmem:[%s3 + $0x8] sm:$0xf]
      %v5556 = vld [vmem:[%s3 + $0xc] sm:$0xf]
      %v5557 = vld [vmem:[%s3 + $0x10] sm:$0xf]
      %v5558 = vld [vmem:[%s3 + $0x14] sm:$0xf]
      %v5559 = vld [vmem:[%s3 + $0x18] sm:$0xf]
      %v5560 = vld [vmem:[%s3 + $0x1c] sm:$0xf]
      %v5561 = vld [vmem:[%s3 + $0x20] sm:$0xf]
      %v5562 = vld [vmem:[%s3 + $0x24] sm:$0xf]
      %v5563 = vld [vmem:[%s3 + $0x28] sm:$0xf]
      %v5564 = vld [vmem:[%s3 + $0x2c] sm:$0xf]
      %v5565 = vld [vmem:[%s3 + $0x30] sm:$0xf]
      %v5566 = vld [vmem:[%s3 + $0x34] sm:$0xf]
      %v5567 = vld [vmem:[%s3 + $0x38] sm:$0xf]
      %v5568 = vld [vmem:[%s3 + $0x3c] sm:$0xf]
      %v5585 = vunpack.c.l.b16 %v5553
      %v5586 = vunpack.c.l.b16 %v5554
      %v5587 = vunpack.c.l.b16 %v5555
      %v5588 = vunpack.c.l.b16 %v5556
      %v5589 = vunpack.c.l.b16 %v5557
      %v5590 = vunpack.c.l.b16 %v5558
      %v5591 = vunpack.c.l.b16 %v5559
      %v5592 = vunpack.c.l.b16 %v5560
      %v5593 = vunpack.c.l.b16 %v5561
      %v5594 = vunpack.c.l.b16 %v5562
      %v5595 = vunpack.c.l.b16 %v5563
      %v5596 = vunpack.c.l.b16 %v5564
      %v5597 = vunpack.c.l.b16 %v5565
      %v5598 = vunpack.c.l.b16 %v5566
      %v5599 = vunpack.c.l.b16 %v5567
      %v5600 = vunpack.c.l.b16 %v5568
      %v5601 = vpack.c.b16 %v5586, %v5585
      %v5602 = vpack.c.b16 %v5588, %v5587
      %v5603 = vpack.c.b16 %v5590, %v5589
      %v5604 = vpack.c.b16 %v5592, %v5591
      %v5605 = vpack.c.b16 %v5594, %v5593
      %v5606 = vpack.c.b16 %v5596, %v5595
      %v5607 = vpack.c.b16 %v5598, %v5597
      %v5608 = vpack.c.b16 %v5600, %v5599
      %5617 = vmatpush.bf16.msra.mxu0 %v5608
      %5618 = vmatpush.bf16.msra.mxu0 %v5607
      %5619 = vmatpush.bf16.msra.mxu0 %v5606
      %5620 = vmatpush.bf16.msra.mxu0 %v5605
      %5621 = vmatpush.bf16.msra.mxu0 %v5604
      %5622 = vmatpush.bf16.msra.mxu0 %v5603
      %5623 = vmatpush.bf16.msra.mxu0 %v5602
      %5624 = vmatpush.bf16.msra.mxu0 %v5601
      %5625 = vmatmul.bf16.gmra.mxu0 %v5537
      %v5626 = vpop.f32.mrf.mxu0
      %v5627 = vadd.f32 0.0, %v5626
      %v5628 = vpop.f32.mrf.mxu0
      %v5629 = vadd.f32 0.0, %v5628
      %5630 = vmatmul.bf16.gmra.mxu0 %v5538
      %v5631 = vpop.f32.mrf.mxu0
      %v5632 = vadd.f32 0.0, %v5631
      %v5633 = vpop.f32.mrf.mxu0
      %v5634 = vadd.f32 0.0, %v5633
      %5635 = vmatmul.bf16.gmra.mxu0 %v5539
      %v5636 = vpop.f32.mrf.mxu0
      %v5637 = vadd.f32 0.0, %v5636
      %v5638 = vpop.f32.mrf.mxu0
      %v5639 = vadd.f32 0.0, %v5638
      %5640 = vmatmul.bf16.gmra.mxu0 %v5540
      %v5641 = vpop.f32.mrf.mxu0
      %v5642 = vadd.f32 0.0, %v5641
      %v5643 = vpop.f32.mrf.mxu0
      %v5644 = vadd.f32 0.0, %v5643
      %5645 = vmatmul.bf16.gmra.mxu0 %v5541
      %v5646 = vpop.f32.mrf.mxu0
      %v5647 = vadd.f32 0.0, %v5646
      %v5648 = vpop.f32.mrf.mxu0
      %v5649 = vadd.f32 0.0, %v5648
      %5650 = vmatmul.bf16.gmra.mxu0 %v5542
      %v5651 = vpop.f32.mrf.mxu0
      %v5652 = vadd.f32 0.0, %v5651
      %v5653 = vpop.f32.mrf.mxu0
      %v5654 = vadd.f32 0.0, %v5653
      %5655 = vmatmul.bf16.gmra.mxu0 %v5543
      %v5656 = vpop.f32.mrf.mxu0
      %v5657 = vadd.f32 0.0, %v5656
      %v5658 = vpop.f32.mrf.mxu0
      %v5659 = vadd.f32 0.0, %v5658
      %5660 = vmatmul.bf16.gmra.mxu0 %v5544
      %v5661 = vpop.f32.mrf.mxu0
      %v5662 = vadd.f32 0.0, %v5661
      %v5663 = vpop.f32.mrf.mxu0
      %v5664 = vadd.f32 0.0, %v5663
      %5665 = vmatmul.bf16.gmra.mxu0 %v5545
      %v5666 = vpop.f32.mrf.mxu0
      %v5667 = vadd.f32 0.0, %v5666
      %v5668 = vpop.f32.mrf.mxu0
      %v5669 = vadd.f32 0.0, %v5668
      %5670 = vmatmul.bf16.gmra.mxu0 %v5546
      %v5671 = vpop.f32.mrf.mxu0
      %v5672 = vadd.f32 0.0, %v5671
      %v5673 = vpop.f32.mrf.mxu0
      %v5674 = vadd.f32 0.0, %v5673
      %5675 = vmatmul.bf16.gmra.mxu0 %v5547
      %v5676 = vpop.f32.mrf.mxu0
      %v5677 = vadd.f32 0.0, %v5676
      %v5678 = vpop.f32.mrf.mxu0
      %v5679 = vadd.f32 0.0, %v5678
      %5680 = vmatmul.bf16.gmra.mxu0 %v5548
      %v5681 = vpop.f32.mrf.mxu0
      %v5682 = vadd.f32 0.0, %v5681
      %v5683 = vpop.f32.mrf.mxu0
      %v5684 = vadd.f32 0.0, %v5683
      %5685 = vmatmul.bf16.gmra.mxu0 %v5549
      %v5686 = vpop.f32.mrf.mxu0
      %v5687 = vadd.f32 0.0, %v5686
      %v5688 = vpop.f32.mrf.mxu0
      %v5689 = vadd.f32 0.0, %v5688
      %5690 = vmatmul.bf16.gmra.mxu0 %v5550
      %v5691 = vpop.f32.mrf.mxu0
      %v5692 = vadd.f32 0.0, %v5691
      %v5693 = vpop.f32.mrf.mxu0
      %v5694 = vadd.f32 0.0, %v5693
      %5695 = vmatmul.bf16.gmra.mxu0 %v5551
      %v5696 = vpop.f32.mrf.mxu0
      %v5697 = vadd.f32 0.0, %v5696
      %v5698 = vpop.f32.mrf.mxu0
      %v5699 = vadd.f32 0.0, %v5698
      %5700 = vmatmul.bf16.gmra.mxu0 %v5552
      %v5701 = vpop.f32.mrf.mxu0
      %v5702 = vadd.f32 0.0, %v5701
      %v5703 = vpop.f32.mrf.mxu0
      %v5704 = vadd.f32 0.0, %v5703
      %5705 = vdwg.mxu0
      %v5706 = vld [vmem:[%s8] sm:$0x1]
      %v5708 = vperm.slane %v5706, 0
      %v5710 = vmul.f32 %v5627, %v5708
      %v5711 = vmul.f32 %v5629, %v5708
      %v5712 = vmul.f32 %v5632, %v5708
      %v5713 = vmul.f32 %v5634, %v5708
      %v5714 = vmul.f32 %v5637, %v5708
      %v5715 = vmul.f32 %v5639, %v5708
      %v5716 = vmul.f32 %v5642, %v5708
      %v5717 = vmul.f32 %v5644, %v5708
      %v5718 = vmul.f32 %v5647, %v5708
      %v5719 = vmul.f32 %v5649, %v5708
      %v5720 = vmul.f32 %v5652, %v5708
      %v5721 = vmul.f32 %v5654, %v5708
      %v5722 = vmul.f32 %v5657, %v5708
      %v5723 = vmul.f32 %v5659, %v5708
      %v5724 = vmul.f32 %v5662, %v5708
      %v5725 = vmul.f32 %v5664, %v5708
      %v5726 = vmul.f32 %v5667, %v5708
      %v5727 = vmul.f32 %v5669, %v5708
      %v5728 = vmul.f32 %v5672, %v5708
      %v5729 = vmul.f32 %v5674, %v5708
      %v5730 = vmul.f32 %v5677, %v5708
      %v5731 = vmul.f32 %v5679, %v5708
      %v5732 = vmul.f32 %v5682, %v5708
      %v5733 = vmul.f32 %v5684, %v5708
      %v5734 = vmul.f32 %v5687, %v5708
      %v5735 = vmul.f32 %v5689, %v5708
      %v5736 = vmul.f32 %v5692, %v5708
      %v5737 = vmul.f32 %v5694, %v5708
      %v5738 = vmul.f32 %v5697, %v5708
      %v5739 = vmul.f32 %v5699, %v5708
      %v5740 = vmul.f32 %v5702, %v5708
      %v5741 = vmul.f32 %v5704, %v5708
      %v5742 = vld [vmem:[%s9] sm:$0x1]
      %v5744 = vperm.slane %v5742, 0
      %v5746 = vadd.f32 %v5710, %v5744
      %v5747 = vadd.f32 %v5711, %v5744
      %v5748 = vadd.f32 %v5712, %v5744
      %v5749 = vadd.f32 %v5713, %v5744
      %v5750 = vadd.f32 %v5714, %v5744
      %v5751 = vadd.f32 %v5715, %v5744
      %v5752 = vadd.f32 %v5716, %v5744
      %v5753 = vadd.f32 %v5717, %v5744
      %v5754 = vadd.f32 %v5718, %v5744
      %v5755 = vadd.f32 %v5719, %v5744
      %v5756 = vadd.f32 %v5720, %v5744
      %v5757 = vadd.f32 %v5721, %v5744
      %v5758 = vadd.f32 %v5722, %v5744
      %v5759 = vadd.f32 %v5723, %v5744
      %v5760 = vadd.f32 %v5724, %v5744
      %v5761 = vadd.f32 %v5725, %v5744
      %v5762 = vadd.f32 %v5726, %v5744
      %v5763 = vadd.f32 %v5727, %v5744
      %v5764 = vadd.f32 %v5728, %v5744
      %v5765 = vadd.f32 %v5729, %v5744
      %v5766 = vadd.f32 %v5730, %v5744
      %v5767 = vadd.f32 %v5731, %v5744
      %v5768 = vadd.f32 %v5732, %v5744
      %v5769 = vadd.f32 %v5733, %v5744
      %v5770 = vadd.f32 %v5734, %v5744
      %v5771 = vadd.f32 %v5735, %v5744
      %v5772 = vadd.f32 %v5736, %v5744
      %v5773 = vadd.f32 %v5737, %v5744
      %v5774 = vadd.f32 %v5738, %v5744
      %v5775 = vadd.f32 %v5739, %v5744
      %v5776 = vadd.f32 %v5740, %v5744
      %v5777 = vadd.f32 %v5741, %v5744
      %v5778 = vunpack.c.l.bf16 %v361
      %v5779 = vunpack.c.l.bf16 %v362
      %v5780 = vunpack.c.l.bf16 %v363
      %v5781 = vunpack.c.l.bf16 %v364
      %v5782 = vunpack.c.l.bf16 %v365
      %v5783 = vunpack.c.l.bf16 %v366
      %v5784 = vunpack.c.l.bf16 %v367
      %v5785 = vunpack.c.l.bf16 %v368
      %v5786 = vunpack.c.l.bf16 %v369
      %v5787 = vunpack.c.l.bf16 %v370
      %v5788 = vunpack.c.l.bf16 %v371
      %v5789 = vunpack.c.l.bf16 %v372
      %v5790 = vunpack.c.l.bf16 %v373
      %v5791 = vunpack.c.l.bf16 %v374
      %v5792 = vunpack.c.l.bf16 %v375
      %v5793 = vunpack.c.l.bf16 %v376
      %v5794 = vunpack.c.l.bf16 %v377
      %v5795 = vunpack.c.l.bf16 %v378
      %v5796 = vunpack.c.l.bf16 %v379
      %v5797 = vunpack.c.l.bf16 %v380
      %v5798 = vunpack.c.l.bf16 %v381
      %v5799 = vunpack.c.l.bf16 %v382
      %v5800 = vunpack.c.l.bf16 %v383
      %v5801 = vunpack.c.l.bf16 %v384
      %v5802 = vunpack.c.l.bf16 %v385
      %v5803 = vunpack.c.l.bf16 %v386
      %v5804 = vunpack.c.l.bf16 %v387
      %v5805 = vunpack.c.l.bf16 %v388
      %v5806 = vunpack.c.l.bf16 %v389
      %v5807 = vunpack.c.l.bf16 %v390
      %v5808 = vunpack.c.l.bf16 %v391
      %v5809 = vunpack.c.l.bf16 %v392
      %v5810 = vadd.f32 %v5746, %v5778
      %v5811 = vadd.f32 %v5747, %v5779
      %v5812 = vadd.f32 %v5748, %v5780
      %v5813 = vadd.f32 %v5749, %v5781
      %v5814 = vadd.f32 %v5750, %v5782
      %v5815 = vadd.f32 %v5751, %v5783
      %v5816 = vadd.f32 %v5752, %v5784
      %v5817 = vadd.f32 %v5753, %v5785
      %v5818 = vadd.f32 %v5754, %v5786
      %v5819 = vadd.f32 %v5755, %v5787
      %v5820 = vadd.f32 %v5756, %v5788
      %v5821 = vadd.f32 %v5757, %v5789
      %v5822 = vadd.f32 %v5758, %v5790
      %v5823 = vadd.f32 %v5759, %v5791
      %v5824 = vadd.f32 %v5760, %v5792
      %v5825 = vadd.f32 %v5761, %v5793
      %v5826 = vadd.f32 %v5762, %v5794
      %v5827 = vadd.f32 %v5763, %v5795
      %v5828 = vadd.f32 %v5764, %v5796
      %v5829 = vadd.f32 %v5765, %v5797
      %v5830 = vadd.f32 %v5766, %v5798
      %v5831 = vadd.f32 %v5767, %v5799
      %v5832 = vadd.f32 %v5768, %v5800
      %v5833 = vadd.f32 %v5769, %v5801
      %v5834 = vadd.f32 %v5770, %v5802
      %v5835 = vadd.f32 %v5771, %v5803
      %v5836 = vadd.f32 %v5772, %v5804
      %v5837 = vadd.f32 %v5773, %v5805
      %v5838 = vadd.f32 %v5774, %v5806
      %v5839 = vadd.f32 %v5775, %v5807
      %v5840 = vadd.f32 %v5776, %v5808
      %v5841 = vadd.f32 %v5777, %v5809
      %v5842 = vmax.f32 %v5810, 0.0
      %v5843 = vmax.f32 %v5811, 0.0
      %v5844 = vmax.f32 %v5812, 0.0
      %v5845 = vmax.f32 %v5813, 0.0
      %v5846 = vmax.f32 %v5814, 0.0
      %v5847 = vmax.f32 %v5815, 0.0
      %v5848 = vmax.f32 %v5816, 0.0
      %v5849 = vmax.f32 %v5817, 0.0
      %v5850 = vmax.f32 %v5818, 0.0
      %v5851 = vmax.f32 %v5819, 0.0
      %v5852 = vmax.f32 %v5820, 0.0
      %v5853 = vmax.f32 %v5821, 0.0
      %v5854 = vmax.f32 %v5822, 0.0
      %v5855 = vmax.f32 %v5823, 0.0
      %v5856 = vmax.f32 %v5824, 0.0
      %v5857 = vmax.f32 %v5825, 0.0
      %v5858 = vmax.f32 %v5826, 0.0
      %v5859 = vmax.f32 %v5827, 0.0
      %v5860 = vmax.f32 %v5828, 0.0
      %v5861 = vmax.f32 %v5829, 0.0
      %v5862 = vmax.f32 %v5830, 0.0
      %v5863 = vmax.f32 %v5831, 0.0
      %v5864 = vmax.f32 %v5832, 0.0
      %v5865 = vmax.f32 %v5833, 0.0
      %v5866 = vmax.f32 %v5834, 0.0
      %v5867 = vmax.f32 %v5835, 0.0
      %v5868 = vmax.f32 %v5836, 0.0
      %v5869 = vmax.f32 %v5837, 0.0
      %v5870 = vmax.f32 %v5838, 0.0
      %v5871 = vmax.f32 %v5839, 0.0
      %v5872 = vmax.f32 %v5840, 0.0
      %v5873 = vmax.f32 %v5841, 0.0
      %5874 = vst [vmem:[%s359] sm:$0xff] %v5842
      %5875 = vst [vmem:[%s359 + $0x8] sm:$0xff] %v5843
      %5876 = vst [vmem:[%s359 + $0x10] sm:$0xff] %v5844
      %5877 = vst [vmem:[%s359 + $0x18] sm:$0xff] %v5845
      %5878 = vst [vmem:[%s359 + $0x20] sm:$0xff] %v5846
      %5879 = vst [vmem:[%s359 + $0x28] sm:$0xff] %v5847
      %5880 = vst [vmem:[%s359 + $0x30] sm:$0xff] %v5848
      %5881 = vst [vmem:[%s359 + $0x38] sm:$0xff] %v5849
      %5882 = vst [vmem:[%s359 + $0x40] sm:$0xff] %v5850
      %5883 = vst [vmem:[%s359 + $0x48] sm:$0xff] %v5851
      %5884 = vst [vmem:[%s359 + $0x50] sm:$0xff] %v5852
      %5885 = vst [vmem:[%s359 + $0x58] sm:$0xff] %v5853
      %5886 = vst [vmem:[%s359 + $0x60] sm:$0xff] %v5854
      %5887 = vst [vmem:[%s359 + $0x68] sm:$0xff] %v5855
      %5888 = vst [vmem:[%s359 + $0x70] sm:$0xff] %v5856
      %5889 = vst [vmem:[%s359 + $0x78] sm:$0xff] %v5857
      %5890 = vst [vmem:[%s359 + $0x80] sm:$0xff] %v5858
      %5891 = vst [vmem:[%s359 + $0x88] sm:$0xff] %v5859
      %5892 = vst [vmem:[%s359 + $0x90] sm:$0xff] %v5860
      %5893 = vst [vmem:[%s359 + $0x98] sm:$0xff] %v5861
      %5894 = vst [vmem:[%s359 + $0xa0] sm:$0xff] %v5862
      %5895 = vst [vmem:[%s359 + $0xa8] sm:$0xff] %v5863
      %5896 = vst [vmem:[%s359 + $0xb0] sm:$0xff] %v5864
      %5897 = vst [vmem:[%s359 + $0xb8] sm:$0xff] %v5865
      %5898 = vst [vmem:[%s359 + $0xc0] sm:$0xff] %v5866
      %5899 = vst [vmem:[%s359 + $0xc8] sm:$0xff] %v5867
      %5900 = vst [vmem:[%s359 + $0xd0] sm:$0xff] %v5868
      %5901 = vst [vmem:[%s359 + $0xd8] sm:$0xff] %v5869
      %5902 = vst [vmem:[%s359 + $0xe0] sm:$0xff] %v5870
      %5903 = vst [vmem:[%s359 + $0xe8] sm:$0xff] %v5871
      %5904 = vst [vmem:[%s359 + $0xf0] sm:$0xff] %v5872
      %5905 = vst [vmem:[%s359 + $0xf8] sm:$0xff] %v5873
      %p5906 = scmp.lt.s32.totalorder %s21, 1
      %s5907 = scalar_select %p5906, %s21, 1
      %s5908 = smul.addr %s5907, 32
      %s5909 = smul.addr %s5908, 8
      %s5910 = scalar_lea.vmem %s10, %s5909
      // Predicated region
      $region61: #{bottleneck_forward.1} parent=59 // pred_check
        %p5911 = pneg %p254
      $region62: #{bottleneck_forward.1} parent=59 // pred_check_branch
        %5913 = sbr.rel (%p5911) target = $region64
      $region63: #{bottleneck_forward.1} parent=59 // pred_region
        _
      $region64: #{bottleneck_forward.1} parent=59 // pred_fallthru
        _
    $region60: #{bottleneck_forward.1} parent=5 // pred_fallthru
      _
    %p5914 = scmp.le.s32.totalorder 2, %s16
    // Predicated region
    $region65: #{bottleneck_forward.1} parent=5 // pred_check
      %p5915 = pneg %p5914
    $region66: #{bottleneck_forward.1} parent=5 // pred_check_branch
      %5917 = sbr.rel (%p5915) target = $region68
    $region67: #{bottleneck_forward.1} parent=5 // pred_region
      %s5918 = ssub.s32 %s16, 2
      // Predicated region
      $region69: #{bottleneck_forward.1} parent=67 // pred_check
        %p5919 = pneg %p260
      $region70: #{bottleneck_forward.1} parent=67 // pred_check_branch
        %5921 = sbr.rel (%p5919) target = $region72
      $region71: #{bottleneck_forward.1} parent=67 // pred_region
        %p5922 = scmp.lt.s32.totalorder %s22, 1
        %s5923 = scalar_select %p5922, %s22, 1
        %s5924 = smul.addr %s5923, 32
        %s5925 = smul.addr %s5924, 8
        %s5926 = scalar_lea.vmem %s10, %s5925
      $region72: #{bottleneck_forward.1} parent=67 // pred_fallthru
        _
    $region68: #{bottleneck_forward.1} parent=5 // pred_fallthru
      _
  $region6: #{bottleneck_forward.1} parent=0 // loop_footer
    %s20 = sadd.s32 1, %s16
  $region7: #{bottleneck_forward.1} parent=0 // loop_footer_branch
    %15 = sbr.rel target = $region3
  $region8: #{bottleneck_forward.1} parent=0 // loop_exit
    _

</llo_original>
